<compile_context>
chip_gen: v6e
topology: v6e:2x2x1
jax: 0.10.0
libtpu: 0.0.40
codegen_flags: <defaults>
</compile_context>

<pallas_src>
import numpy as np

import jax
import jax.numpy as jnp
from jax.experimental import pallas as pl
from jax.experimental.pallas import tpu as pltpu


# ----------------------------------------------------------------------------
# Static architecture constants (implied by the builder / synthetic config)
# ----------------------------------------------------------------------------
C0, C1, C2 = 3, 8, 16          # input colors, conv1 channels, WRN-block channels
IMG = 16                       # input spatial size
H1 = IMG - 2                   # 14 : after conv1 3x3 s1 p0
H2 = (H1 + 2 - 3) // 2 + 1     # 7  : after WRN block 3x3 s2 p1
FC_HID = 32
NCLS = 10
SPP_POOLS = 5                  # SPP levels 1..2 -> 1 + 4 pools
BN_EPS = 1e-3
L1 = H1 * C1                   # 112 lanes for the (14, 14*8) feature slab
L2 = H2 * C2                   # 112 lanes for the (7, 7*16) feature slab


# ----------------------------------------------------------------------------
# Fully fused forward kernel (one grid step = one image)
# ----------------------------------------------------------------------------
def _fused_net_kernel(
    x_ref,     # (1, 16, 48)        input image, rows = H, lanes = W*C0
    r1_ref,    # (3, 14, 16)        conv1 row selection per dy
    m1_ref,    # (3, 48, 112)       conv1 lane-mix weights (BN scale folded)
    b1_ref,    # (1, 112)           conv1-BN shift (broadcast over W)
    s1b_ref,   # (1, 112)           wrn bn1 scale
    b1b_ref,   # (1, 112)           wrn bn1 shift
    r2_ref,    # (3, 7, 14)         wrn conv1 (s2,p1) row selection per dy
    m2_ref,    # (3, 112, 112)      wrn conv1 lane-mix weights (bn2 scale folded)
    msc_ref,   # (112, 112)         1x1 s2 shortcut lane-mix weights
    b2_ref,    # (1, 112)           bn2 shift
    r3_ref,    # (3, 7, 7)          wrn conv2 (s1,p1) row selection per dy
    m3_ref,    # (3, 112, 112)      wrn conv2 lane-mix weights
    sw_ref,    # (7, 112, 16)       SPP column-group selectors
    wf1_ref,   # (5, 16, 32)        fc1 weights split per SPP pool (BN1d scale folded)
    b3_ref,    # (1, 32)            bn_fc1 shift
    wf2_ref,   # (32, 10)           fc2 weights
    o_ref,     # (1, 1, 10)         sigmoid output
):
    def dot(a, b):
        return jnp.dot(a, b, preferred_element_type=jnp.float32)

    x = x_ref[0]                                             # (16, 48)

    # ---- features: conv1(3x3, s1, p0) + BN + ReLU ----
    y = dot(dot(r1_ref[0], x), m1_ref[0])
    y = y + dot(dot(r1_ref[1], x), m1_ref[1])
    y = y + dot(dot(r1_ref[2], x), m1_ref[2])                # (14, 112)
    f = jnp.maximum(y + b1_ref[...], 0.0)

    # ---- WRN basic block (8 -> 16, stride 2, not equalInOut) ----
    xb = jnp.maximum(f * s1b_ref[...] + b1b_ref[...], 0.0)   # relu(bn1(f))

    # conv1 (3x3, s2, p1) fused with bn2+relu; center-tap rows reused by shortcut
    t0 = dot(r2_ref[0], xb)                                  # (7, 112)
    t1 = dot(r2_ref[1], xb)                                  # center-tap rows (h'*2)
    t2 = dot(r2_ref[2], xb)
    pre = dot(t0, m2_ref[0]) + dot(t1, m2_ref[1]) + dot(t2, m2_ref[2])
    sc = dot(t1, msc_ref[...])                               # 1x1 s2 shortcut
    h = jnp.maximum(pre + b2_ref[...], 0.0)                  # (7, 112)

    # conv2 (3x3, s1, p1) + residual add
    u0 = dot(r3_ref[0], h)
    u2 = dot(r3_ref[2], h)                                   # dy=1 is the identity
    feat = dot(u0, m3_ref[0]) + dot(h, m3_ref[1]) + dot(u2, m3_ref[2]) + sc

    # ---- SPP levels 1..2 (adaptive max), done on the VMEM-resident slab ----
    # TODO(synk): FO.spatial_pyramid_pooling is not defined in the source; this
    # assumes the standard adaptive-max pyramid (levels 1..2), channel-minor flatten.
    c = [dot(feat, sw_ref[w]) for w in range(H2)]            # 7 x (7, 16): per-W column
    m_left = jnp.maximum(jnp.maximum(c[0], c[1]), jnp.maximum(c[2], c[3]))
    m_right = jnp.maximum(jnp.maximum(c[3], c[4]), jnp.maximum(c[5], c[6]))
    m_all = jnp.maximum(m_left, m_right)
    ridx = jax.lax.broadcasted_iota(jnp.int32, (H2, C2), 0)
    neg = jnp.float32(-jnp.inf)
    top, bot = ridx < 4, ridx >= 3
    g = jnp.max(m_all, axis=0, keepdims=True)                               # (1, 16)
    q00 = jnp.max(jnp.where(top, m_left, neg), axis=0, keepdims=True)
    q01 = jnp.max(jnp.where(top, m_right, neg), axis=0, keepdims=True)
    q10 = jnp.max(jnp.where(bot, m_left, neg), axis=0, keepdims=True)
    q11 = jnp.max(jnp.where(bot, m_right, neg), axis=0, keepdims=True)

    # ---- classifier: fc1 (per-pool slices, no concat) + BN1d + ReLU ----
    z = (dot(g, wf1_ref[0]) + dot(q00, wf1_ref[1]) + dot(q01, wf1_ref[2])
         + dot(q10, wf1_ref[3]) + dot(q11, wf1_ref[4]))
    z = jnp.maximum(z + b3_ref[...], 0.0)                    # (1, 32); dropout = eval identity

    # ---- fc2 + sigmoid (tanh form: numerically stable, EUP slot) ----
    logits = dot(z, wf2_ref[...])                            # (1, 10)
    o_ref[0] = 0.5 * (jnp.tanh(0.5 * logits) + 1.0)


def net_forward(x_nchw, params):
    """Accepts NCHW (PyTorch convention). One fused pallas_call, grid over batch."""
    B = x_nchw.shape[0]
    # layout: NCHW -> NHWC -> (B, H, W*C) lane-dense slab (the only host-side glue).
    x2d = jnp.transpose(x_nchw, (0, 2, 3, 1)).reshape(B, IMG, IMG * C0)
    x2d = x2d.astype(jnp.float32)

    names = ["r1", "m1", "b1", "s1b", "b1b", "r2", "m2", "msc", "b2",
             "r3", "m3", "sw", "wf1", "b3", "wf2"]
    weights = [params[n] for n in names]

    def const_spec(shape):
        nd = len(shape)
        return pl.BlockSpec(shape, lambda b, nd=nd: (0,) * nd)

    in_specs = [pl.BlockSpec((1, IMG, IMG * C0), lambda b: (b, 0, 0))]
    in_specs += [const_spec(w.shape) for w in weights]

    out = pl.pallas_call(
        _fused_net_kernel,
        grid=(B,),
        out_shape=jax.ShapeDtypeStruct((B, 1, NCLS), jnp.float32),
        in_specs=in_specs,
        out_specs=pl.BlockSpec((1, 1, NCLS), lambda b: (b, 0, 0)),
        compiler_params=pltpu.CompilerParams(dimension_semantics=("parallel",)),
    )(x2d, *weights)
    return out.reshape(B, NCLS)


# ----------------------------------------------------------------------------
# Host-side parameter preprocessing (structured conv matrices, folded BN)
# ----------------------------------------------------------------------------
def _fold_bn(key, c, eps=BN_EPS):
    """Deterministic BN params folded into inference (scale, shift)."""
    k1, k2, k3, k4 = jax.random.split(key, 4)
    gamma = 1.0 + 0.1 * jax.random.normal(k1, (c,), jnp.float32)
    beta = 0.1 * jax.random.normal(k2, (c,), jnp.float32)
    mean = 0.1 * jax.random.normal(k3, (c,), jnp.float32)
    var = jnp.abs(jax.random.normal(k4, (c,), jnp.float32)) + 0.5
    scale = gamma / jnp.sqrt(var + eps)
    shift = beta - mean * scale
    return np.asarray(scale), np.asarray(shift)


def _row_select(h_in, h_out, stride, pad):
    """R[dy] (h_out, h_in): picks input row h_out*stride + dy - pad (zero row if padded)."""
    R = np.zeros((3, h_out, h_in), np.float32)
    for dy in range(3):
        for ho in range(h_out):
            hi = ho * stride + dy - pad
            if 0 <= hi < h_in:
                R[dy, ho, hi] = 1.0
    return R


def _lane_mix(w, w_in, w_out, stride, pad, out_scale=None):
    """M[dy] (w_in*ci, w_out*co): banded lane-mixing matrix for a 3x3 conv tap row.

    Feature-map rows are laid out channel-minor on lanes: lane = w*ci + c.
    w: (3, 3, ci, co) HWIO conv weights; out_scale folds a per-co BN scale.
    """
    _, _, ci, co = w.shape
    if out_scale is not None:
        w = w * out_scale[None, None, None, :]
    M = np.zeros((3, w_in * ci, w_out * co), np.float32)
    for dy in range(3):
        for wo in range(w_out):
            for dx in range(3):
                wi = wo * stride + dx - pad
                if 0 <= wi < w_in:
                    M[dy, wi * ci:(wi + 1) * ci, wo * co:(wo + 1) * co] = w[dy, dx]
    return M


def _shortcut_mix(w_sc, w_in, w_out, stride):
    """1x1 strided conv as a lane-mixing matrix (w_in*ci, w_out*co)."""
    ci, co = w_sc.shape
    M = np.zeros((w_in * ci, w_out * co), np.float32)
    for wo in range(w_out):
        wi = wo * stride
        M[wi * ci:(wi + 1) * ci, wo * co:(wo + 1) * co] = w_sc
    return M


def _col_group_select(n_groups, c):
    """S[w] (n_groups*c, c): picks the per-channel column group w out of the lane slab."""
    S = np.zeros((n_groups, n_groups * c, c), np.float32)
    for w in range(n_groups):
        S[w, w * c:(w + 1) * c, :] = np.eye(c, dtype=np.float32)
    return S


def init_params(key):
    ks = jax.random.split(key, 10)
    w_conv1 = np.asarray(0.1 * jax.random.normal(ks[0], (3, 3, C0, C1), jnp.float32))
    w_wrn1 = np.asarray(0.1 * jax.random.normal(ks[1], (3, 3, C1, C2), jnp.float32))
    w_wrn2 = np.asarray(0.1 * jax.random.normal(ks[2], (3, 3, C2, C2), jnp.float32))
    w_sc = np.asarray(0.1 * jax.random.normal(ks[3], (C1, C2), jnp.float32))
    w_fc1 = np.asarray(0.1 * jax.random.normal(ks[4], (C2 * SPP_POOLS, FC_HID), jnp.float32))
    w_fc2 = np.asarray(0.1 * jax.random.normal(ks[5], (FC_HID, NCLS), jnp.float32))
    s_c1, b_c1 = _fold_bn(ks[6], C1)      # features conv1 BN
    s_w1, b_w1 = _fold_bn(ks[7], C1)      # WRN bn1 (on block input)
    s_w2, b_w2 = _fold_bn(ks[8], C2)      # WRN bn2
    s_f1, b_f1 = _fold_bn(ks[9], FC_HID)  # fc1 BN1d

    raw = dict(w_conv1=w_conv1, w_wrn1=w_wrn1, w_wrn2=w_wrn2, w_sc=w_sc,
               w_fc1=w_fc1, w_fc2=w_fc2, s_c1=s_c1, b_c1=b_c1, s_w1=s_w1,
               b_w1=b_w1, s_w2=s_w2, b_w2=b_w2, s_f1=s_f1, b_f1=b_f1)

    params = {
        "r1": jnp.asarray(_row_select(IMG, H1, 1, 0)),
        "m1": jnp.asarray(_lane_mix(w_conv1, IMG, H1, 1, 0, out_scale=s_c1)),
        "b1": jnp.asarray(np.tile(b_c1, H1)[None, :]),
        "s1b": jnp.asarray(np.tile(s_w1, H1)[None, :]),
        "b1b": jnp.asarray(np.tile(b_w1, H1)[None, :]),
        "r2": jnp.asarray(_row_select(H1, H2, 2, 1)),
        "m2": jnp.asarray(_lane_mix(w_wrn1, H1, H2, 2, 1, out_scale=s_w2)),
        "msc": jnp.asarray(_shortcut_mix(w_sc, H1, H2, 2)),
        "b2": jnp.asarray(np.tile(b_w2, H2)[None, :]),
        "r3": jnp.asarray(_row_select(H2, H2, 1, 1)),
        "m3": jnp.asarray(_lane_mix(w_wrn2, H2, H2, 1, 1)),
        "sw": jnp.asarray(_col_group_select(H2, C2)),
        "wf1": jnp.asarray((w_fc1 * s_f1[None, :]).reshape(SPP_POOLS, C2, FC_HID)),
        "b3": jnp.asarray(b_f1[None, :]),
        "wf2": jnp.asarray(w_fc2),
    }
    return params, raw


# ----------------------------------------------------------------------------
# Pure-JAX reference (same inference-mode semantics) for a correctness check
# ----------------------------------------------------------------------------
def ref_forward(x_nchw, raw):
    hp = jax.lax.Precision.HIGHEST
    relu = lambda v: jnp.maximum(v, 0.0)

    def conv(v, w, stride, pad):
        return jax.lax.conv_general_dilated(
            v, jnp.asarray(w), (stride, stride), [(pad, pad), (pad, pad)],
            dimension_numbers=("NHWC", "HWIO", "NHWC"), precision=hp)

    x = jnp.transpose(x_nchw, (0, 2, 3, 1)).astype(jnp.float32)
    f = relu(conv(x, raw["w_conv1"], 1, 0) * raw["s_c1"] + raw["b_c1"])
    xb = relu(f * raw["s_w1"] + raw["b_w1"])
    h = relu(conv(xb, raw["w_wrn1"], 2, 1) * raw["s_w2"] + raw["b_w2"])
    out = conv(h, raw["w_wrn2"], 1, 1)
    sc = conv(xb, raw["w_sc"].reshape(1, 1, C1, C2), 2, 0)
    feat = out + sc                                           # (B, 7, 7, 16)

    pools = [jnp.max(feat, axis=(1, 2))]
    for i in range(2):
        for j in range(2):
            h0, h1 = (i * H2) // 2, -((-(i + 1) * H2) // 2)
            w0, w1 = (j * H2) // 2, -((-(j + 1) * H2) // 2)
            pools.append(jnp.max(feat[:, h0:h1, w0:w1, :], axis=(1, 2)))
    spp = jnp.concatenate(pools, axis=-1)                     # (B, 80)

    z = relu(jnp.dot(spp, jnp.asarray(raw["w_fc1"]), precision=hp)
             * raw["s_f1"] + raw["b_f1"])
    logits = jnp.dot(z, jnp.asarray(raw["w_fc2"]), precision=hp)
    return jax.nn.sigmoid(logits)


if __name__ == "__main__":
    key = jax.random.PRNGKey(0)
    k_in, k_par = jax.random.split(key)
    x = jax.random.normal(k_in, (2, C0, IMG, IMG), jnp.float32)  # NCHW, like PyTorch
    params, raw = init_params(k_par)

    fwd = jax.jit(net_forward)
    out = jax.block_until_ready(fwd(x, params))

    assert out.shape == (2, NCLS)
    assert bool(jnp.all(jnp.isfinite(out)))
    assert bool(jnp.all((out >= 0.0) & (out <= 1.0)))          # sigmoid output

    ref = jax.block_until_ready(ref_forward(x, raw))
    assert np.allclose(np.asarray(out), np.asarray(ref), atol=2e-2, rtol=0.0), (
        "fused kernel disagrees with reference")

    print("KERNEL_OK")
</pallas_src>

<mosaic_0001>
module attributes {stable_mosaic.version = 11 : i64} {
  func.func @_fused_net_kernel(%arg0: i32, %arg1: memref<1x16x48xf32, #tpu.memory_space<vmem>>, %arg2: memref<3x14x16xf32, #tpu.memory_space<vmem>>, %arg3: memref<3x48x112xf32, #tpu.memory_space<vmem>>, %arg4: memref<1x112xf32, #tpu.memory_space<vmem>>, %arg5: memref<1x112xf32, #tpu.memory_space<vmem>>, %arg6: memref<1x112xf32, #tpu.memory_space<vmem>>, %arg7: memref<3x7x14xf32, #tpu.memory_space<vmem>>, %arg8: memref<3x112x112xf32, #tpu.memory_space<vmem>>, %arg9: memref<112x112xf32, #tpu.memory_space<vmem>>, %arg10: memref<1x112xf32, #tpu.memory_space<vmem>>, %arg11: memref<3x7x7xf32, #tpu.memory_space<vmem>>, %arg12: memref<3x112x112xf32, #tpu.memory_space<vmem>>, %arg13: memref<7x112x16xf32, #tpu.memory_space<vmem>>, %arg14: memref<5x16x32xf32, #tpu.memory_space<vmem>>, %arg15: memref<1x32xf32, #tpu.memory_space<vmem>>, %arg16: memref<32x10xf32, #tpu.memory_space<vmem>>, %arg17: memref<1x1x10xf32, #tpu.memory_space<vmem>>) attributes {dimension_semantics = [#tpu.dimension_semantics<parallel>], iteration_bounds = array<i64: 2>, scalar_prefetch = 0 : i64, scratch_operands = 0 : i64, tpu.core_type = #tpu.core_type<tc>, window_params = [{transform_indices = @transform_0, window_bounds = array<i64: 1, 16, 48>}, {pipeline_mode = #tpu.pipeline_mode<synchronous>, transform_indices = @transform_1, window_bounds = array<i64: 3, 14, 16>}, {pipeline_mode = #tpu.pipeline_mode<synchronous>, transform_indices = @transform_2, window_bounds = array<i64: 3, 48, 112>}, {pipeline_mode = #tpu.pipeline_mode<synchronous>, transform_indices = @transform_3, window_bounds = array<i64: 1, 112>}, {pipeline_mode = #tpu.pipeline_mode<synchronous>, transform_indices = @transform_4, window_bounds = array<i64: 1, 112>}, {pipeline_mode = #tpu.pipeline_mode<synchronous>, transform_indices = @transform_5, window_bounds = array<i64: 1, 112>}, {pipeline_mode = #tpu.pipeline_mode<synchronous>, transform_indices = @transform_6, window_bounds = array<i64: 3, 7, 14>}, {pipeline_mode = #tpu.pipeline_mode<synchronous>, transform_indices = @transform_7, window_bounds = array<i64: 3, 112, 112>}, {pipeline_mode = #tpu.pipeline_mode<synchronous>, transform_indices = @transform_8, window_bounds = array<i64: 112, 112>}, {pipeline_mode = #tpu.pipeline_mode<synchronous>, transform_indices = @transform_9, window_bounds = array<i64: 1, 112>}, {pipeline_mode = #tpu.pipeline_mode<synchronous>, transform_indices = @transform_10, window_bounds = array<i64: 3, 7, 7>}, {pipeline_mode = #tpu.pipeline_mode<synchronous>, transform_indices = @transform_11, window_bounds = array<i64: 3, 112, 112>}, {pipeline_mode = #tpu.pipeline_mode<synchronous>, transform_indices = @transform_12, window_bounds = array<i64: 7, 112, 16>}, {pipeline_mode = #tpu.pipeline_mode<synchronous>, transform_indices = @transform_13, window_bounds = array<i64: 5, 16, 32>}, {pipeline_mode = #tpu.pipeline_mode<synchronous>, transform_indices = @transform_14, window_bounds = array<i64: 1, 32>}, {pipeline_mode = #tpu.pipeline_mode<synchronous>, transform_indices = @transform_15, window_bounds = array<i64: 32, 10>}, {transform_indices = @transform_16, window_bounds = array<i64: 1, 1, 10>}]} {
    %c0 = arith.constant 0 : index
    %c0_0 = arith.constant 0 : index
    %c0_1 = arith.constant 0 : index
    %0 = vector.load %arg1[%c0, %c0_0, %c0_1] : memref<1x16x48xf32, #tpu.memory_space<vmem>>, vector<1x16x48xf32>
    %1 = vector.shape_cast %0 : vector<1x16x48xf32> to vector<16x48xf32>
    %c0_2 = arith.constant 0 : index
    %c0_3 = arith.constant 0 : index
    %c0_4 = arith.constant 0 : index
    %2 = vector.load %arg2[%c0_2, %c0_3, %c0_4] : memref<3x14x16xf32, #tpu.memory_space<vmem>>, vector<1x14x16xf32>
    %3 = vector.shape_cast %2 : vector<1x14x16xf32> to vector<14x16xf32>
    %cst = arith.constant dense<0.000000e+00> : vector<14x48xf32>
    %4 = tpu.matmul %3, %1, %cst {dimension_numbers = #tpu.dot_dimension_numbers<[1], [0], [0], [1], [0, 0, 1, 1], [], []>} : vector<14x16xf32>, vector<16x48xf32>, vector<14x48xf32> -> vector<14x48xf32>
    %c0_5 = arith.constant 0 : index
    %c0_6 = arith.constant 0 : index
    %c0_7 = arith.constant 0 : index
    %5 = vector.load %arg3[%c0_5, %c0_6, %c0_7] : memref<3x48x112xf32, #tpu.memory_space<vmem>>, vector<1x48x112xf32>
    %6 = vector.shape_cast %5 : vector<1x48x112xf32> to vector<48x112xf32>
    %cst_8 = arith.constant dense<0.000000e+00> : vector<14x112xf32>
    %7 = tpu.matmul %4, %6, %cst_8 {dimension_numbers = #tpu.dot_dimension_numbers<[1], [0], [0], [1], [0, 0, 1, 1], [], []>} : vector<14x48xf32>, vector<48x112xf32>, vector<14x112xf32> -> vector<14x112xf32>
    %c1 = arith.constant 1 : index
    %c0_9 = arith.constant 0 : index
    %c0_10 = arith.constant 0 : index
    %8 = vector.load %arg2[%c1, %c0_9, %c0_10] : memref<3x14x16xf32, #tpu.memory_space<vmem>>, vector<1x14x16xf32>
    %9 = vector.shape_cast %8 : vector<1x14x16xf32> to vector<14x16xf32>
    %cst_11 = arith.constant dense<0.000000e+00> : vector<14x48xf32>
    %10 = tpu.matmul %9, %1, %cst_11 {dimension_numbers = #tpu.dot_dimension_numbers<[1], [0], [0], [1], [0, 0, 1, 1], [], []>} : vector<14x16xf32>, vector<16x48xf32>, vector<14x48xf32> -> vector<14x48xf32>
    %c1_12 = arith.constant 1 : index
    %c0_13 = arith.constant 0 : index
    %c0_14 = arith.constant 0 : index
    %11 = vector.load %arg3[%c1_12, %c0_13, %c0_14] : memref<3x48x112xf32, #tpu.memory_space<vmem>>, vector<1x48x112xf32>
    %12 = vector.shape_cast %11 : vector<1x48x112xf32> to vector<48x112xf32>
    %cst_15 = arith.constant dense<0.000000e+00> : vector<14x112xf32>
    %13 = tpu.matmul %10, %12, %cst_15 {dimension_numbers = #tpu.dot_dimension_numbers<[1], [0], [0], [1], [0, 0, 1, 1], [], []>} : vector<14x48xf32>, vector<48x112xf32>, vector<14x112xf32> -> vector<14x112xf32>
    %14 = arith.addf %7, %13 : vector<14x112xf32>
    %c2 = arith.constant 2 : index
    %c0_16 = arith.constant 0 : index
    %c0_17 = arith.constant 0 : index
    %15 = vector.load %arg2[%c2, %c0_16, %c0_17] : memref<3x14x16xf32, #tpu.memory_space<vmem>>, vector<1x14x16xf32>
    %16 = vector.shape_cast %15 : vector<1x14x16xf32> to vector<14x16xf32>
    %cst_18 = arith.constant dense<0.000000e+00> : vector<14x48xf32>
    %17 = tpu.matmul %16, %1, %cst_18 {dimension_numbers = #tpu.dot_dimension_numbers<[1], [0], [0], [1], [0, 0, 1, 1], [], []>} : vector<14x16xf32>, vector<16x48xf32>, vector<14x48xf32> -> vector<14x48xf32>
    %c2_19 = arith.constant 2 : index
    %c0_20 = arith.constant 0 : index
    %c0_21 = arith.constant 0 : index
    %18 = vector.load %arg3[%c2_19, %c0_20, %c0_21] : memref<3x48x112xf32, #tpu.memory_space<vmem>>, vector<1x48x112xf32>
    %19 = vector.shape_cast %18 : vector<1x48x112xf32> to vector<48x112xf32>
    %cst_22 = arith.constant dense<0.000000e+00> : vector<14x112xf32>
    %20 = tpu.matmul %17, %19, %cst_22 {dimension_numbers = #tpu.dot_dimension_numbers<[1], [0], [0], [1], [0, 0, 1, 1], [], []>} : vector<14x48xf32>, vector<48x112xf32>, vector<14x112xf32> -> vector<14x112xf32>
    %21 = arith.addf %14, %20 : vector<14x112xf32>
    %c0_23 = arith.constant 0 : index
    %c0_24 = arith.constant 0 : index
    %22 = vector.load %arg4[%c0_23, %c0_24] : memref<1x112xf32, #tpu.memory_space<vmem>>, vector<1x112xf32>
    %23 = vector.broadcast %22 : vector<1x112xf32> to vector<14x112xf32>
    %24 = arith.addf %21, %23 : vector<14x112xf32>
    %cst_25 = arith.constant 0.000000e+00 : f32
    %25 = vector.broadcast %cst_25 : f32 to vector<14x112xf32>
    %26 = arith.maximumf %24, %25 : vector<14x112xf32>
    %c0_26 = arith.constant 0 : index
    %c0_27 = arith.constant 0 : index
    %27 = vector.load %arg5[%c0_26, %c0_27] : memref<1x112xf32, #tpu.memory_space<vmem>>, vector<1x112xf32>
    %28 = vector.broadcast %27 : vector<1x112xf32> to vector<14x112xf32>
    %29 = arith.mulf %26, %28 : vector<14x112xf32>
    %c0_28 = arith.constant 0 : index
    %c0_29 = arith.constant 0 : index
    %30 = vector.load %arg6[%c0_28, %c0_29] : memref<1x112xf32, #tpu.memory_space<vmem>>, vector<1x112xf32>
    %31 = vector.broadcast %30 : vector<1x112xf32> to vector<14x112xf32>
    %32 = arith.addf %29, %31 : vector<14x112xf32>
    %cst_30 = arith.constant 0.000000e+00 : f32
    %33 = vector.broadcast %cst_30 : f32 to vector<14x112xf32>
    %34 = arith.maximumf %32, %33 : vector<14x112xf32>
    %c0_31 = arith.constant 0 : index
    %c0_32 = arith.constant 0 : index
    %c0_33 = arith.constant 0 : index
    %35 = vector.load %arg7[%c0_31, %c0_32, %c0_33] : memref<3x7x14xf32, #tpu.memory_space<vmem>>, vector<1x7x14xf32>
    %36 = vector.shape_cast %35 : vector<1x7x14xf32> to vector<7x14xf32>
    %cst_34 = arith.constant dense<0.000000e+00> : vector<7x112xf32>
    %37 = tpu.matmul %36, %34, %cst_34 {dimension_numbers = #tpu.dot_dimension_numbers<[1], [0], [0], [1], [0, 0, 1, 1], [], []>} : vector<7x14xf32>, vector<14x112xf32>, vector<7x112xf32> -> vector<7x112xf32>
    %c1_35 = arith.constant 1 : index
    %c0_36 = arith.constant 0 : index
    %c0_37 = arith.constant 0 : index
    %38 = vector.load %arg7[%c1_35, %c0_36, %c0_37] : memref<3x7x14xf32, #tpu.memory_space<vmem>>, vector<1x7x14xf32>
    %39 = vector.shape_cast %38 : vector<1x7x14xf32> to vector<7x14xf32>
    %cst_38 = arith.constant dense<0.000000e+00> : vector<7x112xf32>
    %40 = tpu.matmul %39, %34, %cst_38 {dimension_numbers = #tpu.dot_dimension_numbers<[1], [0], [0], [1], [0, 0, 1, 1], [], []>} : vector<7x14xf32>, vector<14x112xf32>, vector<7x112xf32> -> vector<7x112xf32>
    %c2_39 = arith.constant 2 : index
    %c0_40 = arith.constant 0 : index
    %c0_41 = arith.constant 0 : index
    %41 = vector.load %arg7[%c2_39, %c0_40, %c0_41] : memref<3x7x14xf32, #tpu.memory_space<vmem>>, vector<1x7x14xf32>
    %42 = vector.shape_cast %41 : vector<1x7x14xf32> to vector<7x14xf32>
    %cst_42 = arith.constant dense<0.000000e+00> : vector<7x112xf32>
    %43 = tpu.matmul %42, %34, %cst_42 {dimension_numbers = #tpu.dot_dimension_numbers<[1], [0], [0], [1], [0, 0, 1, 1], [], []>} : vector<7x14xf32>, vector<14x112xf32>, vector<7x112xf32> -> vector<7x112xf32>
    %c0_43 = arith.constant 0 : index
    %c0_44 = arith.constant 0 : index
    %c0_45 = arith.constant 0 : index
    %44 = vector.load %arg8[%c0_43, %c0_44, %c0_45] : memref<3x112x112xf32, #tpu.memory_space<vmem>>, vector<1x112x112xf32>
    %45 = vector.shape_cast %44 : vector<1x112x112xf32> to vector<112x112xf32>
    %cst_46 = arith.constant dense<0.000000e+00> : vector<7x112xf32>
    %46 = tpu.matmul %37, %45, %cst_46 {dimension_numbers = #tpu.dot_dimension_numbers<[1], [0], [0], [1], [0, 0, 1, 1], [], []>} : vector<7x112xf32>, vector<112x112xf32>, vector<7x112xf32> -> vector<7x112xf32>
    %c1_47 = arith.constant 1 : index
    %c0_48 = arith.constant 0 : index
    %c0_49 = arith.constant 0 : index
    %47 = vector.load %arg8[%c1_47, %c0_48, %c0_49] : memref<3x112x112xf32, #tpu.memory_space<vmem>>, vector<1x112x112xf32>
    %48 = vector.shape_cast %47 : vector<1x112x112xf32> to vector<112x112xf32>
    %cst_50 = arith.constant dense<0.000000e+00> : vector<7x112xf32>
    %49 = tpu.matmul %40, %48, %cst_50 {dimension_numbers = #tpu.dot_dimension_numbers<[1], [0], [0], [1], [0, 0, 1, 1], [], []>} : vector<7x112xf32>, vector<112x112xf32>, vector<7x112xf32> -> vector<7x112xf32>
    %50 = arith.addf %46, %49 : vector<7x112xf32>
    %c2_51 = arith.constant 2 : index
    %c0_52 = arith.constant 0 : index
    %c0_53 = arith.constant 0 : index
    %51 = vector.load %arg8[%c2_51, %c0_52, %c0_53] : memref<3x112x112xf32, #tpu.memory_space<vmem>>, vector<1x112x112xf32>
    %52 = vector.shape_cast %51 : vector<1x112x112xf32> to vector<112x112xf32>
    %cst_54 = arith.constant dense<0.000000e+00> : vector<7x112xf32>
    %53 = tpu.matmul %43, %52, %cst_54 {dimension_numbers = #tpu.dot_dimension_numbers<[1], [0], [0], [1], [0, 0, 1, 1], [], []>} : vector<7x112xf32>, vector<112x112xf32>, vector<7x112xf32> -> vector<7x112xf32>
    %54 = arith.addf %50, %53 : vector<7x112xf32>
    %c0_55 = arith.constant 0 : index
    %c0_56 = arith.constant 0 : index
    %55 = vector.load %arg9[%c0_55, %c0_56] : memref<112x112xf32, #tpu.memory_space<vmem>>, vector<112x112xf32>
    %cst_57 = arith.constant dense<0.000000e+00> : vector<7x112xf32>
    %56 = tpu.matmul %40, %55, %cst_57 {dimension_numbers = #tpu.dot_dimension_numbers<[1], [0], [0], [1], [0, 0, 1, 1], [], []>} : vector<7x112xf32>, vector<112x112xf32>, vector<7x112xf32> -> vector<7x112xf32>
    %c0_58 = arith.constant 0 : index
    %c0_59 = arith.constant 0 : index
    %57 = vector.load %arg10[%c0_58, %c0_59] : memref<1x112xf32, #tpu.memory_space<vmem>>, vector<1x112xf32>
    %58 = vector.broadcast %57 : vector<1x112xf32> to vector<7x112xf32>
    %59 = arith.addf %54, %58 : vector<7x112xf32>
    %cst_60 = arith.constant 0.000000e+00 : f32
    %60 = vector.broadcast %cst_60 : f32 to vector<7x112xf32>
    %61 = arith.maximumf %59, %60 : vector<7x112xf32>
    %c0_61 = arith.constant 0 : index
    %c0_62 = arith.constant 0 : index
    %c0_63 = arith.constant 0 : index
    %62 = vector.load %arg11[%c0_61, %c0_62, %c0_63] : memref<3x7x7xf32, #tpu.memory_space<vmem>>, vector<1x7x7xf32>
    %63 = vector.shape_cast %62 : vector<1x7x7xf32> to vector<7x7xf32>
    %cst_64 = arith.constant dense<0.000000e+00> : vector<7x112xf32>
    %64 = tpu.matmul %63, %61, %cst_64 {dimension_numbers = #tpu.dot_dimension_numbers<[1], [0], [0], [1], [0, 0, 1, 1], [], []>} : vector<7x7xf32>, vector<7x112xf32>, vector<7x112xf32> -> vector<7x112xf32>
    %c2_65 = arith.constant 2 : index
    %c0_66 = arith.constant 0 : index
    %c0_67 = arith.constant 0 : index
    %65 = vector.load %arg11[%c2_65, %c0_66, %c0_67] : memref<3x7x7xf32, #tpu.memory_space<vmem>>, vector<1x7x7xf32>
    %66 = vector.shape_cast %65 : vector<1x7x7xf32> to vector<7x7xf32>
    %cst_68 = arith.constant dense<0.000000e+00> : vector<7x112xf32>
    %67 = tpu.matmul %66, %61, %cst_68 {dimension_numbers = #tpu.dot_dimension_numbers<[1], [0], [0], [1], [0, 0, 1, 1], [], []>} : vector<7x7xf32>, vector<7x112xf32>, vector<7x112xf32> -> vector<7x112xf32>
    %c0_69 = arith.constant 0 : index
    %c0_70 = arith.constant 0 : index
    %c0_71 = arith.constant 0 : index
    %68 = vector.load %arg12[%c0_69, %c0_70, %c0_71] : memref<3x112x112xf32, #tpu.memory_space<vmem>>, vector<1x112x112xf32>
    %69 = vector.shape_cast %68 : vector<1x112x112xf32> to vector<112x112xf32>
    %cst_72 = arith.constant dense<0.000000e+00> : vector<7x112xf32>
    %70 = tpu.matmul %64, %69, %cst_72 {dimension_numbers = #tpu.dot_dimension_numbers<[1], [0], [0], [1], [0, 0, 1, 1], [], []>} : vector<7x112xf32>, vector<112x112xf32>, vector<7x112xf32> -> vector<7x112xf32>
    %c1_73 = arith.constant 1 : index
    %c0_74 = arith.constant 0 : index
    %c0_75 = arith.constant 0 : index
    %71 = vector.load %arg12[%c1_73, %c0_74, %c0_75] : memref<3x112x112xf32, #tpu.memory_space<vmem>>, vector<1x112x112xf32>
    %72 = vector.shape_cast %71 : vector<1x112x112xf32> to vector<112x112xf32>
    %cst_76 = arith.constant dense<0.000000e+00> : vector<7x112xf32>
    %73 = tpu.matmul %61, %72, %cst_76 {dimension_numbers = #tpu.dot_dimension_numbers<[1], [0], [0], [1], [0, 0, 1, 1], [], []>} : vector<7x112xf32>, vector<112x112xf32>, vector<7x112xf32> -> vector<7x112xf32>
    %74 = arith.addf %70, %73 : vector<7x112xf32>
    %c2_77 = arith.constant 2 : index
    %c0_78 = arith.constant 0 : index
    %c0_79 = arith.constant 0 : index
    %75 = vector.load %arg12[%c2_77, %c0_78, %c0_79] : memref<3x112x112xf32, #tpu.memory_space<vmem>>, vector<1x112x112xf32>
    %76 = vector.shape_cast %75 : vector<1x112x112xf32> to vector<112x112xf32>
    %cst_80 = arith.constant dense<0.000000e+00> : vector<7x112xf32>
    %77 = tpu.matmul %67, %76, %cst_80 {dimension_numbers = #tpu.dot_dimension_numbers<[1], [0], [0], [1], [0, 0, 1, 1], [], []>} : vector<7x112xf32>, vector<112x112xf32>, vector<7x112xf32> -> vector<7x112xf32>
    %78 = arith.addf %74, %77 : vector<7x112xf32>
    %79 = arith.addf %78, %56 : vector<7x112xf32>
    %c0_81 = arith.constant 0 : index
    %c0_82 = arith.constant 0 : index
    %c0_83 = arith.constant 0 : index
    %80 = vector.load %arg13[%c0_81, %c0_82, %c0_83] : memref<7x112x16xf32, #tpu.memory_space<vmem>>, vector<1x112x16xf32>
    %81 = vector.shape_cast %80 : vector<1x112x16xf32> to vector<112x16xf32>
    %cst_84 = arith.constant dense<0.000000e+00> : vector<7x16xf32>
    %82 = tpu.matmul %79, %81, %cst_84 {dimension_numbers = #tpu.dot_dimension_numbers<[1], [0], [0], [1], [0, 0, 1, 1], [], []>} : vector<7x112xf32>, vector<112x16xf32>, vector<7x16xf32> -> vector<7x16xf32>
    %c1_85 = arith.constant 1 : index
    %c0_86 = arith.constant 0 : index
    %c0_87 = arith.constant 0 : index
    %83 = vector.load %arg13[%c1_85, %c0_86, %c0_87] : memref<7x112x16xf32, #tpu.memory_space<vmem>>, vector<1x112x16xf32>
    %84 = vector.shape_cast %83 : vector<1x112x16xf32> to vector<112x16xf32>
    %cst_88 = arith.constant dense<0.000000e+00> : vector<7x16xf32>
    %85 = tpu.matmul %79, %84, %cst_88 {dimension_numbers = #tpu.dot_dimension_numbers<[1], [0], [0], [1], [0, 0, 1, 1], [], []>} : vector<7x112xf32>, vector<112x16xf32>, vector<7x16xf32> -> vector<7x16xf32>
    %c2_89 = arith.constant 2 : index
    %c0_90 = arith.constant 0 : index
    %c0_91 = arith.constant 0 : index
    %86 = vector.load %arg13[%c2_89, %c0_90, %c0_91] : memref<7x112x16xf32, #tpu.memory_space<vmem>>, vector<1x112x16xf32>
    %87 = vector.shape_cast %86 : vector<1x112x16xf32> to vector<112x16xf32>
    %cst_92 = arith.constant dense<0.000000e+00> : vector<7x16xf32>
    %88 = tpu.matmul %79, %87, %cst_92 {dimension_numbers = #tpu.dot_dimension_numbers<[1], [0], [0], [1], [0, 0, 1, 1], [], []>} : vector<7x112xf32>, vector<112x16xf32>, vector<7x16xf32> -> vector<7x16xf32>
    %c3 = arith.constant 3 : index
    %c0_93 = arith.constant 0 : index
    %c0_94 = arith.constant 0 : index
    %89 = vector.load %arg13[%c3, %c0_93, %c0_94] : memref<7x112x16xf32, #tpu.memory_space<vmem>>, vector<1x112x16xf32>
    %90 = vector.shape_cast %89 : vector<1x112x16xf32> to vector<112x16xf32>
    %cst_95 = arith.constant dense<0.000000e+00> : vector<7x16xf32>
    %91 = tpu.matmul %79, %90, %cst_95 {dimension_numbers = #tpu.dot_dimension_numbers<[1], [0], [0], [1], [0, 0, 1, 1], [], []>} : vector<7x112xf32>, vector<112x16xf32>, vector<7x16xf32> -> vector<7x16xf32>
    %c4 = arith.constant 4 : index
    %c0_96 = arith.constant 0 : index
    %c0_97 = arith.constant 0 : index
    %92 = vector.load %arg13[%c4, %c0_96, %c0_97] : memref<7x112x16xf32, #tpu.memory_space<vmem>>, vector<1x112x16xf32>
    %93 = vector.shape_cast %92 : vector<1x112x16xf32> to vector<112x16xf32>
    %cst_98 = arith.constant dense<0.000000e+00> : vector<7x16xf32>
    %94 = tpu.matmul %79, %93, %cst_98 {dimension_numbers = #tpu.dot_dimension_numbers<[1], [0], [0], [1], [0, 0, 1, 1], [], []>} : vector<7x112xf32>, vector<112x16xf32>, vector<7x16xf32> -> vector<7x16xf32>
    %c5 = arith.constant 5 : index
    %c0_99 = arith.constant 0 : index
    %c0_100 = arith.constant 0 : index
    %95 = vector.load %arg13[%c5, %c0_99, %c0_100] : memref<7x112x16xf32, #tpu.memory_space<vmem>>, vector<1x112x16xf32>
    %96 = vector.shape_cast %95 : vector<1x112x16xf32> to vector<112x16xf32>
    %cst_101 = arith.constant dense<0.000000e+00> : vector<7x16xf32>
    %97 = tpu.matmul %79, %96, %cst_101 {dimension_numbers = #tpu.dot_dimension_numbers<[1], [0], [0], [1], [0, 0, 1, 1], [], []>} : vector<7x112xf32>, vector<112x16xf32>, vector<7x16xf32> -> vector<7x16xf32>
    %c6 = arith.constant 6 : index
    %c0_102 = arith.constant 0 : index
    %c0_103 = arith.constant 0 : index
    %98 = vector.load %arg13[%c6, %c0_102, %c0_103] : memref<7x112x16xf32, #tpu.memory_space<vmem>>, vector<1x112x16xf32>
    %99 = vector.shape_cast %98 : vector<1x112x16xf32> to vector<112x16xf32>
    %cst_104 = arith.constant dense<0.000000e+00> : vector<7x16xf32>
    %100 = tpu.matmul %79, %99, %cst_104 {dimension_numbers = #tpu.dot_dimension_numbers<[1], [0], [0], [1], [0, 0, 1, 1], [], []>} : vector<7x112xf32>, vector<112x16xf32>, vector<7x16xf32> -> vector<7x16xf32>
    %101 = arith.maximumf %82, %85 : vector<7x16xf32>
    %102 = arith.maximumf %88, %91 : vector<7x16xf32>
    %103 = arith.maximumf %101, %102 : vector<7x16xf32>
    %104 = arith.maximumf %91, %94 : vector<7x16xf32>
    %105 = arith.maximumf %97, %100 : vector<7x16xf32>
    %106 = arith.maximumf %104, %105 : vector<7x16xf32>
    %107 = arith.maximumf %103, %106 : vector<7x16xf32>
    %108 = tpu.iota {dimensions = array<i32: 0>} : vector<7x16xi32>
    %c4_i32 = arith.constant 4 : i32
    %109 = vector.broadcast %c4_i32 : i32 to vector<7x16xi32>
    %110 = arith.cmpi slt, %108, %109 : vector<7x16xi32>
    %c3_i32 = arith.constant 3 : i32
    %111 = vector.broadcast %c3_i32 : i32 to vector<7x16xi32>
    %112 = arith.cmpi sge, %108, %111 : vector<7x16xi32>
    %cst_105 = arith.constant dense<0xFF800000> : vector<16xf32>
    %113 = vector.multi_reduction <maximumf>, %107, %cst_105 [0] : vector<7x16xf32> to vector<16xf32>
    %114 = vector.shape_cast %113 : vector<16xf32> to vector<1x16xf32>
    %cst_106 = arith.constant 0xFF800000 : f32
    %115 = vector.broadcast %cst_106 : f32 to vector<7x16xf32>
    %116 = arith.select %110, %103, %115 : vector<7x16xi1>, vector<7x16xf32>
    %cst_107 = arith.constant dense<0xFF800000> : vector<16xf32>
    %117 = vector.multi_reduction <maximumf>, %116, %cst_107 [0] : vector<7x16xf32> to vector<16xf32>
    %118 = vector.shape_cast %117 : vector<16xf32> to vector<1x16xf32>
    %cst_108 = arith.constant 0xFF800000 : f32
    %119 = vector.broadcast %cst_108 : f32 to vector<7x16xf32>
    %120 = arith.select %110, %106, %119 : vector<7x16xi1>, vector<7x16xf32>
    %cst_109 = arith.constant dense<0xFF800000> : vector<16xf32>
    %121 = vector.multi_reduction <maximumf>, %120, %cst_109 [0] : vector<7x16xf32> to vector<16xf32>
    %122 = vector.shape_cast %121 : vector<16xf32> to vector<1x16xf32>
    %cst_110 = arith.constant 0xFF800000 : f32
    %123 = vector.broadcast %cst_110 : f32 to vector<7x16xf32>
    %124 = arith.select %112, %103, %123 : vector<7x16xi1>, vector<7x16xf32>
    %cst_111 = arith.constant dense<0xFF800000> : vector<16xf32>
    %125 = vector.multi_reduction <maximumf>, %124, %cst_111 [0] : vector<7x16xf32> to vector<16xf32>
    %126 = vector.shape_cast %125 : vector<16xf32> to vector<1x16xf32>
    %cst_112 = arith.constant 0xFF800000 : f32
    %127 = vector.broadcast %cst_112 : f32 to vector<7x16xf32>
    %128 = arith.select %112, %106, %127 : vector<7x16xi1>, vector<7x16xf32>
    %cst_113 = arith.constant dense<0xFF800000> : vector<16xf32>
    %129 = vector.multi_reduction <maximumf>, %128, %cst_113 [0] : vector<7x16xf32> to vector<16xf32>
    %130 = vector.shape_cast %129 : vector<16xf32> to vector<1x16xf32>
    %c0_114 = arith.constant 0 : index
    %c0_115 = arith.constant 0 : index
    %c0_116 = arith.constant 0 : index
    %131 = vector.load %arg14[%c0_114, %c0_115, %c0_116] : memref<5x16x32xf32, #tpu.memory_space<vmem>>, vector<1x16x32xf32>
    %132 = vector.shape_cast %131 : vector<1x16x32xf32> to vector<16x32xf32>
    %cst_117 = arith.constant dense<0.000000e+00> : vector<1x32xf32>
    %133 = tpu.matmul %114, %132, %cst_117 {dimension_numbers = #tpu.dot_dimension_numbers<[1], [0], [0], [1], [0, 0, 1, 1], [], []>} : vector<1x16xf32>, vector<16x32xf32>, vector<1x32xf32> -> vector<1x32xf32>
    %c1_118 = arith.constant 1 : index
    %c0_119 = arith.constant 0 : index
    %c0_120 = arith.constant 0 : index
    %134 = vector.load %arg14[%c1_118, %c0_119, %c0_120] : memref<5x16x32xf32, #tpu.memory_space<vmem>>, vector<1x16x32xf32>
    %135 = vector.shape_cast %134 : vector<1x16x32xf32> to vector<16x32xf32>
    %cst_121 = arith.constant dense<0.000000e+00> : vector<1x32xf32>
    %136 = tpu.matmul %118, %135, %cst_121 {dimension_numbers = #tpu.dot_dimension_numbers<[1], [0], [0], [1], [0, 0, 1, 1], [], []>} : vector<1x16xf32>, vector<16x32xf32>, vector<1x32xf32> -> vector<1x32xf32>
    %137 = arith.addf %133, %136 : vector<1x32xf32>
    %c2_122 = arith.constant 2 : index
    %c0_123 = arith.constant 0 : index
    %c0_124 = arith.constant 0 : index
    %138 = vector.load %arg14[%c2_122, %c0_123, %c0_124] : memref<5x16x32xf32, #tpu.memory_space<vmem>>, vector<1x16x32xf32>
    %139 = vector.shape_cast %138 : vector<1x16x32xf32> to vector<16x32xf32>
    %cst_125 = arith.constant dense<0.000000e+00> : vector<1x32xf32>
    %140 = tpu.matmul %122, %139, %cst_125 {dimension_numbers = #tpu.dot_dimension_numbers<[1], [0], [0], [1], [0, 0, 1, 1], [], []>} : vector<1x16xf32>, vector<16x32xf32>, vector<1x32xf32> -> vector<1x32xf32>
    %141 = arith.addf %137, %140 : vector<1x32xf32>
    %c3_126 = arith.constant 3 : index
    %c0_127 = arith.constant 0 : index
    %c0_128 = arith.constant 0 : index
    %142 = vector.load %arg14[%c3_126, %c0_127, %c0_128] : memref<5x16x32xf32, #tpu.memory_space<vmem>>, vector<1x16x32xf32>
    %143 = vector.shape_cast %142 : vector<1x16x32xf32> to vector<16x32xf32>
    %cst_129 = arith.constant dense<0.000000e+00> : vector<1x32xf32>
    %144 = tpu.matmul %126, %143, %cst_129 {dimension_numbers = #tpu.dot_dimension_numbers<[1], [0], [0], [1], [0, 0, 1, 1], [], []>} : vector<1x16xf32>, vector<16x32xf32>, vector<1x32xf32> -> vector<1x32xf32>
    %145 = arith.addf %141, %144 : vector<1x32xf32>
    %c4_130 = arith.constant 4 : index
    %c0_131 = arith.constant 0 : index
    %c0_132 = arith.constant 0 : index
    %146 = vector.load %arg14[%c4_130, %c0_131, %c0_132] : memref<5x16x32xf32, #tpu.memory_space<vmem>>, vector<1x16x32xf32>
    %147 = vector.shape_cast %146 : vector<1x16x32xf32> to vector<16x32xf32>
    %cst_133 = arith.constant dense<0.000000e+00> : vector<1x32xf32>
    %148 = tpu.matmul %130, %147, %cst_133 {dimension_numbers = #tpu.dot_dimension_numbers<[1], [0], [0], [1], [0, 0, 1, 1], [], []>} : vector<1x16xf32>, vector<16x32xf32>, vector<1x32xf32> -> vector<1x32xf32>
    %149 = arith.addf %145, %148 : vector<1x32xf32>
    %c0_134 = arith.constant 0 : index
    %c0_135 = arith.constant 0 : index
    %150 = vector.load %arg15[%c0_134, %c0_135] : memref<1x32xf32, #tpu.memory_space<vmem>>, vector<1x32xf32>
    %151 = arith.addf %149, %150 : vector<1x32xf32>
    %cst_136 = arith.constant 0.000000e+00 : f32
    %152 = vector.broadcast %cst_136 : f32 to vector<1x32xf32>
    %153 = arith.maximumf %151, %152 : vector<1x32xf32>
    %c0_137 = arith.constant 0 : index
    %c0_138 = arith.constant 0 : index
    %154 = vector.load %arg16[%c0_137, %c0_138] : memref<32x10xf32, #tpu.memory_space<vmem>>, vector<32x10xf32>
    %cst_139 = arith.constant dense<0.000000e+00> : vector<1x10xf32>
    %155 = tpu.matmul %153, %154, %cst_139 {dimension_numbers = #tpu.dot_dimension_numbers<[1], [0], [0], [1], [0, 0, 1, 1], [], []>} : vector<1x32xf32>, vector<32x10xf32>, vector<1x10xf32> -> vector<1x10xf32>
    %cst_140 = arith.constant 5.000000e-01 : f32
    %156 = vector.broadcast %cst_140 : f32 to vector<1x10xf32>
    %157 = arith.mulf %156, %155 : vector<1x10xf32>
    %158 = math.tanh %157 : vector<1x10xf32>
    %cst_141 = arith.constant 1.000000e+00 : f32
    %159 = vector.broadcast %cst_141 : f32 to vector<1x10xf32>
    %160 = arith.addf %158, %159 : vector<1x10xf32>
    %cst_142 = arith.constant 5.000000e-01 : f32
    %161 = vector.broadcast %cst_142 : f32 to vector<1x10xf32>
    %162 = arith.mulf %161, %160 : vector<1x10xf32>
    %c0_143 = arith.constant 0 : index
    %c0_144 = arith.constant 0 : index
    %c0_145 = arith.constant 0 : index
    %163 = vector.load %arg17[%c0_143, %c0_144, %c0_145] : memref<1x1x10xf32, #tpu.memory_space<vmem>>, vector<1x1x10xf32>
    %164 = vector.shape_cast %163 : vector<1x1x10xf32> to vector<1x10xf32>
    %165 = vector.shape_cast %162 : vector<1x10xf32> to vector<1x1x10xf32>
    tpu.vector_store %arg17[%c0_143, %c0_144, %c0_145], %165 {strides = array<i32>} : memref<1x1x10xf32, #tpu.memory_space<vmem>>, vector<1x1x10xf32>,
    return
  }
  func.func @transform_0(%arg0: i32) -> (i32, i32, i32) {
    %c0_i32 = arith.constant 0 : i32
    %c0_i32_0 = arith.constant 0 : i32
    %c0_i32_1 = arith.constant 0 : i32
    return %arg0, %c0_i32, %c0_i32_0 : i32, i32, i32
  }
  func.func @transform_1(%arg0: i32) -> (i32, i32, i32) {
    %c0_i32 = arith.constant 0 : i32
    %c0_i32_0 = arith.constant 0 : i32
    %c0_i32_1 = arith.constant 0 : i32
    %c0_i32_2 = arith.constant 0 : i32
    return %c0_i32, %c0_i32_0, %c0_i32_1 : i32, i32, i32
  }
  func.func @transform_2(%arg0: i32) -> (i32, i32, i32) {
    %c0_i32 = arith.constant 0 : i32
    %c0_i32_0 = arith.constant 0 : i32
    %c0_i32_1 = arith.constant 0 : i32
    %c0_i32_2 = arith.constant 0 : i32
    return %c0_i32, %c0_i32_0, %c0_i32_1 : i32, i32, i32
  }
  func.func @transform_3(%arg0: i32) -> (i32, i32) {
    %c0_i32 = arith.constant 0 : i32
    %c0_i32_0 = arith.constant 0 : i32
    %c0_i32_1 = arith.constant 0 : i32
    return %c0_i32, %c0_i32_0 : i32, i32
  }
  func.func @transform_4(%arg0: i32) -> (i32, i32) {
    %c0_i32 = arith.constant 0 : i32
    %c0_i32_0 = arith.constant 0 : i32
    %c0_i32_1 = arith.constant 0 : i32
    return %c0_i32, %c0_i32_0 : i32, i32
  }
  func.func @transform_5(%arg0: i32) -> (i32, i32) {
    %c0_i32 = arith.constant 0 : i32
    %c0_i32_0 = arith.constant 0 : i32
    %c0_i32_1 = arith.constant 0 : i32
    return %c0_i32, %c0_i32_0 : i32, i32
  }
  func.func @transform_6(%arg0: i32) -> (i32, i32, i32) {
    %c0_i32 = arith.constant 0 : i32
    %c0_i32_0 = arith.constant 0 : i32
    %c0_i32_1 = arith.constant 0 : i32
    %c0_i32_2 = arith.constant 0 : i32
    return %c0_i32, %c0_i32_0, %c0_i32_1 : i32, i32, i32
  }
  func.func @transform_7(%arg0: i32) -> (i32, i32, i32) {
    %c0_i32 = arith.constant 0 : i32
    %c0_i32_0 = arith.constant 0 : i32
    %c0_i32_1 = arith.constant 0 : i32
    %c0_i32_2 = arith.constant 0 : i32
    return %c0_i32, %c0_i32_0, %c0_i32_1 : i32, i32, i32
  }
  func.func @transform_8(%arg0: i32) -> (i32, i32) {
    %c0_i32 = arith.constant 0 : i32
    %c0_i32_0 = arith.constant 0 : i32
    %c0_i32_1 = arith.constant 0 : i32
    return %c0_i32, %c0_i32_0 : i32, i32
  }
  func.func @transform_9(%arg0: i32) -> (i32, i32) {
    %c0_i32 = arith.constant 0 : i32
    %c0_i32_0 = arith.constant 0 : i32
    %c0_i32_1 = arith.constant 0 : i32
    return %c0_i32, %c0_i32_0 : i32, i32
  }
  func.func @transform_10(%arg0: i32) -> (i32, i32, i32) {
    %c0_i32 = arith.constant 0 : i32
    %c0_i32_0 = arith.constant 0 : i32
    %c0_i32_1 = arith.constant 0 : i32
    %c0_i32_2 = arith.constant 0 : i32
    return %c0_i32, %c0_i32_0, %c0_i32_1 : i32, i32, i32
  }
  func.func @transform_11(%arg0: i32) -> (i32, i32, i32) {
    %c0_i32 = arith.constant 0 : i32
    %c0_i32_0 = arith.constant 0 : i32
    %c0_i32_1 = arith.constant 0 : i32
    %c0_i32_2 = arith.constant 0 : i32
    return %c0_i32, %c0_i32_0, %c0_i32_1 : i32, i32, i32
  }
  func.func @transform_12(%arg0: i32) -> (i32, i32, i32) {
    %c0_i32 = arith.constant 0 : i32
    %c0_i32_0 = arith.constant 0 : i32
    %c0_i32_1 = arith.constant 0 : i32
    %c0_i32_2 = arith.constant 0 : i32
    return %c0_i32, %c0_i32_0, %c0_i32_1 : i32, i32, i32
  }
  func.func @transform_13(%arg0: i32) -> (i32, i32, i32) {
    %c0_i32 = arith.constant 0 : i32
    %c0_i32_0 = arith.constant 0 : i32
    %c0_i32_1 = arith.constant 0 : i32
    %c0_i32_2 = arith.constant 0 : i32
    return %c0_i32, %c0_i32_0, %c0_i32_1 : i32, i32, i32
  }
  func.func @transform_14(%arg0: i32) -> (i32, i32) {
    %c0_i32 = arith.constant 0 : i32
    %c0_i32_0 = arith.constant 0 : i32
    %c0_i32_1 = arith.constant 0 : i32
    return %c0_i32, %c0_i32_0 : i32, i32
  }
  func.func @transform_15(%arg0: i32) -> (i32, i32) {
    %c0_i32 = arith.constant 0 : i32
    %c0_i32_0 = arith.constant 0 : i32
    %c0_i32_1 = arith.constant 0 : i32
    return %c0_i32, %c0_i32_0 : i32, i32
  }
  func.func @transform_16(%arg0: i32) -> (i32, i32, i32) {
    %c0_i32 = arith.constant 0 : i32
    %c0_i32_0 = arith.constant 0 : i32
    %c0_i32_1 = arith.constant 0 : i32
    return %arg0, %c0_i32, %c0_i32_0 : i32, i32, i32
  }
}

</mosaic_0001>

<llo_original>
// kernel: net_forward.1
$region0: #{net_forward.1}
  #allocation0 [shape = 'u32[]', space=smem, size = 0x4, offset = 0x4, fixed_abs, tag = 'smem constant byte address 0x4 - core index']
  #allocation1 [shape = 'u32[144,128]{1,0:T(1,128)}', space=vmem, size = 0x12000, scoped, tag = 'internal scratch']
  %s0 = inlined_call_operand.vmem [shape: f32[2,16,48], index: 0, kind: input, shape index: {}]
  %s1 = inlined_call_operand.vmem [shape: f32[3,14,16], index: 1, kind: input, shape index: {}]
  %s2 = inlined_call_operand.vmem [shape: f32[3,48,112], index: 2, kind: input, shape index: {}]
  %s3 = inlined_call_operand.vmem [shape: f32[1,112], index: 3, kind: input, shape index: {}]
  %s4 = inlined_call_operand.vmem [shape: f32[1,112], index: 4, kind: input, shape index: {}]
  %s5 = inlined_call_operand.vmem [shape: f32[1,112], index: 5, kind: input, shape index: {}]
  %s6 = inlined_call_operand.vmem [shape: f32[3,7,14], index: 6, kind: input, shape index: {}]
  %s7 = inlined_call_operand.vmem [shape: f32[3,112,112], index: 7, kind: input, shape index: {}]
  %s8 = inlined_call_operand.vmem [shape: f32[112,112], index: 8, kind: input, shape index: {}]
  %s9 = inlined_call_operand.vmem [shape: f32[1,112], index: 9, kind: input, shape index: {}]
  %s10 = inlined_call_operand.vmem [shape: f32[3,7,7], index: 10, kind: input, shape index: {}]
  %s11 = inlined_call_operand.vmem [shape: f32[3,112,112], index: 11, kind: input, shape index: {}]
  %s12 = inlined_call_operand.vmem [shape: f32[7,112,16], index: 12, kind: input, shape index: {}]
  %s13 = inlined_call_operand.vmem [shape: f32[5,16,32], index: 13, kind: input, shape index: {}]
  %s14 = inlined_call_operand.vmem [shape: f32[1,32], index: 14, kind: input, shape index: {}]
  %s15 = inlined_call_operand.vmem [shape: f32[32,10], index: 15, kind: input, shape index: {}]
  %s16 = inlined_call_operand.hbm [shape: f32[2,1,10], index: 16, kind: output, shape index: {}]
  %s17 = sld [smem:[#allocation0]]
  $region97: #{net_forward.1} parent=0
    _
  %s19 = ssub.s32 1, %s17
  %s20 = scalar_select 0, %s19, %s17
  $region1: #{net_forward.1} parent=0
    #allocation2 [shape = 'u8[1024]{0}', space=vmem, size = 0x400, scoped, tag = 'output window, operand 0']
    #allocation3 [shape = 's32[2]{0}', space=sflag, size = 0x8, scoped, tag = 'scoped memory for net_forward.1']
    %21 = vsyncpa [#allocation3], 0
    %s22 = scalar_lea.sflag [#allocation3], 1
    %23 = vsyncpa %s22, 0
    loop: start=0, step=1, limit=4
    $region2: #{net_forward.1} parent=1 // loop_pre_header
      _
    $region3: #{net_forward.1} parent=1 // loop_header
      %s25 = sphi 0, %s29
      %p26 = scmp.ge.s32.totalorder %s25, 4
      %s35 = sphi 0, %s37
      %s38 = sphi 0, %s35
      %s39 = sphi 0, %s38
      %s55 = sphi 0, %s39
      %s59 = sphi 0, %s59
      %s61 = sphi 0, %s59
      %s62 = sphi 0, %s61
      %s76 = sphi 0, %s62
      %s80 = sphi 0, %s80
      %s82 = sphi 0, %s80
      %s83 = sphi 0, %s82
      %s97 = sphi 0, %s83
      %s101 = sphi 0, %s101
      %s103 = sphi 0, %s101
      %s104 = sphi 0, %s103
      %s118 = sphi 0, %s104
      %s122 = sphi 0, %s122
      %s124 = sphi 0, %s122
      %s125 = sphi 0, %s124
      %s139 = sphi 0, %s125
      %s143 = sphi 0, %s143
      %s145 = sphi 0, %s143
      %s146 = sphi 0, %s145
      %s160 = sphi 0, %s146
      %s164 = sphi 0, %s164
      %s166 = sphi 0, %s164
      %s167 = sphi 0, %s166
      %s181 = sphi 0, %s167
      %s185 = sphi 0, %s185
      %s187 = sphi 0, %s185
      %s188 = sphi 0, %s187
      %s202 = sphi 0, %s188
      %s206 = sphi 0, %s206
      %s208 = sphi 0, %s206
      %s209 = sphi 0, %s208
      %s223 = sphi 0, %s209
      %s227 = sphi 0, %s227
      %s229 = sphi 0, %s227
      %s230 = sphi 0, %s229
      %s244 = sphi 0, %s230
      %s248 = sphi 0, %s248
      %s250 = sphi 0, %s248
      %s251 = sphi 0, %s250
      %s265 = sphi 0, %s251
      %s269 = sphi 0, %s269
      %s271 = sphi 0, %s269
      %s272 = sphi 0, %s271
      %s286 = sphi 0, %s272
      %s290 = sphi 0, %s290
      %s292 = sphi 0, %s290
      %s293 = sphi 0, %s292
      %s307 = sphi 0, %s293
      %s311 = sphi 0, %s311
      %s313 = sphi 0, %s311
      %s314 = sphi 0, %s313
      %s328 = sphi 0, %s314
      %s332 = sphi 0, %s332
      %s334 = sphi 0, %s332
      %s335 = sphi 0, %s334
      %s349 = sphi 0, %s335
      %s353 = sphi 0, %s353
      %s355 = sphi 0, %s353
      %s356 = sphi 0, %s355
      %s370 = sphi 0, %s356
      %s376 = sphi 0, %s378
      %s379 = sphi 0, %s376
      %s380 = sphi 0, %s379
      %s396 = sphi 0, %s380
    $region4: #{net_forward.1} parent=1 // loop_header_branch
      %28 = sbr.rel (%p26) target = $region8
    $region5: #{net_forward.1} parent=1 // loop_body
      %s30 = ssub.s32 %s25, 1
      %s31 = ssub.s32 %s25, 2
      %s32 = sadd.s32 %s25, 1
      %s33 = ssub.s32 %s25, %s32
      %p34 = scmp.eq.s32.totalorder %s33, 0
      %s36 = sadd.s32 %s35, 1
      %s37 = scalar_select %p34, %s35, %s36
      %p40 = pneg %p34
      %p41 = scmp.eq.s32.totalorder %s25, 1
      %p42 = por %p40, %p41
      %p43 = scmp.ne.s32.totalorder %s35, %s38
      %p44 = scmp.eq.s32.totalorder %s25, 0
      %p45 = por %p43, %p44
      %p46 = scmp.ne.s32.totalorder %s35, %s38
      %p47 = scmp.eq.s32.totalorder %s30, 1
      %p48 = por %p46, %p47
      %p49 = scmp.ne.s32.totalorder %s38, %s39
      %p50 = scmp.eq.s32.totalorder %s30, 0
      %p51 = por %p49, %p50
      %p52 = scmp.ne.s32.totalorder %s38, %s39
      %p53 = scmp.eq.s32.totalorder %s31, 1
      %p54 = por %p52, %p53
      %p56 = scmp.ne.s32.totalorder %s39, %s55
      %p57 = scmp.eq.s32.totalorder %s31, 0
      %p58 = por %p56, %p57
      %s60 = sadd.s32 %s59, 1
      %p63 = scmp.eq.s32.totalorder %s25, 1
      %p64 = scmp.ne.s32.totalorder %s59, %s61
      %p65 = scmp.eq.s32.totalorder %s25, 0
      %p66 = por %p64, %p65
      %p67 = scmp.ne.s32.totalorder %s59, %s61
      %p68 = scmp.eq.s32.totalorder %s30, 1
      %p69 = por %p67, %p68
      %p70 = scmp.ne.s32.totalorder %s61, %s62
      %p71 = scmp.eq.s32.totalorder %s30, 0
      %p72 = por %p70, %p71
      %p73 = scmp.ne.s32.totalorder %s61, %s62
      %p74 = scmp.eq.s32.totalorder %s31, 1
      %p75 = por %p73, %p74
      %p77 = scmp.ne.s32.totalorder %s62, %s76
      %p78 = scmp.eq.s32.totalorder %s31, 0
      %p79 = por %p77, %p78
      %s81 = sadd.s32 %s80, 1
      %p84 = scmp.eq.s32.totalorder %s25, 1
      %p85 = scmp.ne.s32.totalorder %s80, %s82
      %p86 = scmp.eq.s32.totalorder %s25, 0
      %p87 = por %p85, %p86
      %p88 = scmp.ne.s32.totalorder %s80, %s82
      %p89 = scmp.eq.s32.totalorder %s30, 1
      %p90 = por %p88, %p89
      %p91 = scmp.ne.s32.totalorder %s82, %s83
      %p92 = scmp.eq.s32.totalorder %s30, 0
      %p93 = por %p91, %p92
      %p94 = scmp.ne.s32.totalorder %s82, %s83
      %p95 = scmp.eq.s32.totalorder %s31, 1
      %p96 = por %p94, %p95
      %p98 = scmp.ne.s32.totalorder %s83, %s97
      %p99 = scmp.eq.s32.totalorder %s31, 0
      %p100 = por %p98, %p99
      %s102 = sadd.s32 %s101, 1
      %p105 = scmp.eq.s32.totalorder %s25, 1
      %p106 = scmp.ne.s32.totalorder %s101, %s103
      %p107 = scmp.eq.s32.totalorder %s25, 0
      %p108 = por %p106, %p107
      %p109 = scmp.ne.s32.totalorder %s101, %s103
      %p110 = scmp.eq.s32.totalorder %s30, 1
      %p111 = por %p109, %p110
      %p112 = scmp.ne.s32.totalorder %s103, %s104
      %p113 = scmp.eq.s32.totalorder %s30, 0
      %p114 = por %p112, %p113
      %p115 = scmp.ne.s32.totalorder %s103, %s104
      %p116 = scmp.eq.s32.totalorder %s31, 1
      %p117 = por %p115, %p116
      %p119 = scmp.ne.s32.totalorder %s104, %s118
      %p120 = scmp.eq.s32.totalorder %s31, 0
      %p121 = por %p119, %p120
      %s123 = sadd.s32 %s122, 1
      %p126 = scmp.eq.s32.totalorder %s25, 1
      %p127 = scmp.ne.s32.totalorder %s122, %s124
      %p128 = scmp.eq.s32.totalorder %s25, 0
      %p129 = por %p127, %p128
      %p130 = scmp.ne.s32.totalorder %s122, %s124
      %p131 = scmp.eq.s32.totalorder %s30, 1
      %p132 = por %p130, %p131
      %p133 = scmp.ne.s32.totalorder %s124, %s125
      %p134 = scmp.eq.s32.totalorder %s30, 0
      %p135 = por %p133, %p134
      %p136 = scmp.ne.s32.totalorder %s124, %s125
      %p137 = scmp.eq.s32.totalorder %s31, 1
      %p138 = por %p136, %p137
      %p140 = scmp.ne.s32.totalorder %s125, %s139
      %p141 = scmp.eq.s32.totalorder %s31, 0
      %p142 = por %p140, %p141
      %s144 = sadd.s32 %s143, 1
      %p147 = scmp.eq.s32.totalorder %s25, 1
      %p148 = scmp.ne.s32.totalorder %s143, %s145
      %p149 = scmp.eq.s32.totalorder %s25, 0
      %p150 = por %p148, %p149
      %p151 = scmp.ne.s32.totalorder %s143, %s145
      %p152 = scmp.eq.s32.totalorder %s30, 1
      %p153 = por %p151, %p152
      %p154 = scmp.ne.s32.totalorder %s145, %s146
      %p155 = scmp.eq.s32.totalorder %s30, 0
      %p156 = por %p154, %p155
      %p157 = scmp.ne.s32.totalorder %s145, %s146
      %p158 = scmp.eq.s32.totalorder %s31, 1
      %p159 = por %p157, %p158
      %p161 = scmp.ne.s32.totalorder %s146, %s160
      %p162 = scmp.eq.s32.totalorder %s31, 0
      %p163 = por %p161, %p162
      %s165 = sadd.s32 %s164, 1
      %p168 = scmp.eq.s32.totalorder %s25, 1
      %p169 = scmp.ne.s32.totalorder %s164, %s166
      %p170 = scmp.eq.s32.totalorder %s25, 0
      %p171 = por %p169, %p170
      %p172 = scmp.ne.s32.totalorder %s164, %s166
      %p173 = scmp.eq.s32.totalorder %s30, 1
      %p174 = por %p172, %p173
      %p175 = scmp.ne.s32.totalorder %s166, %s167
      %p176 = scmp.eq.s32.totalorder %s30, 0
      %p177 = por %p175, %p176
      %p178 = scmp.ne.s32.totalorder %s166, %s167
      %p179 = scmp.eq.s32.totalorder %s31, 1
      %p180 = por %p178, %p179
      %p182 = scmp.ne.s32.totalorder %s167, %s181
      %p183 = scmp.eq.s32.totalorder %s31, 0
      %p184 = por %p182, %p183
      %s186 = sadd.s32 %s185, 1
      %p189 = scmp.eq.s32.totalorder %s25, 1
      %p190 = scmp.ne.s32.totalorder %s185, %s187
      %p191 = scmp.eq.s32.totalorder %s25, 0
      %p192 = por %p190, %p191
      %p193 = scmp.ne.s32.totalorder %s185, %s187
      %p194 = scmp.eq.s32.totalorder %s30, 1
      %p195 = por %p193, %p194
      %p196 = scmp.ne.s32.totalorder %s187, %s188
      %p197 = scmp.eq.s32.totalorder %s30, 0
      %p198 = por %p196, %p197
      %p199 = scmp.ne.s32.totalorder %s187, %s188
      %p200 = scmp.eq.s32.totalorder %s31, 1
      %p201 = por %p199, %p200
      %p203 = scmp.ne.s32.totalorder %s188, %s202
      %p204 = scmp.eq.s32.totalorder %s31, 0
      %p205 = por %p203, %p204
      %s207 = sadd.s32 %s206, 1
      %p210 = scmp.eq.s32.totalorder %s25, 1
      %p211 = scmp.ne.s32.totalorder %s206, %s208
      %p212 = scmp.eq.s32.totalorder %s25, 0
      %p213 = por %p211, %p212
      %p214 = scmp.ne.s32.totalorder %s206, %s208
      %p215 = scmp.eq.s32.totalorder %s30, 1
      %p216 = por %p214, %p215
      %p217 = scmp.ne.s32.totalorder %s208, %s209
      %p218 = scmp.eq.s32.totalorder %s30, 0
      %p219 = por %p217, %p218
      %p220 = scmp.ne.s32.totalorder %s208, %s209
      %p221 = scmp.eq.s32.totalorder %s31, 1
      %p222 = por %p220, %p221
      %p224 = scmp.ne.s32.totalorder %s209, %s223
      %p225 = scmp.eq.s32.totalorder %s31, 0
      %p226 = por %p224, %p225
      %s228 = sadd.s32 %s227, 1
      %p231 = scmp.eq.s32.totalorder %s25, 1
      %p232 = scmp.ne.s32.totalorder %s227, %s229
      %p233 = scmp.eq.s32.totalorder %s25, 0
      %p234 = por %p232, %p233
      %p235 = scmp.ne.s32.totalorder %s227, %s229
      %p236 = scmp.eq.s32.totalorder %s30, 1
      %p237 = por %p235, %p236
      %p238 = scmp.ne.s32.totalorder %s229, %s230
      %p239 = scmp.eq.s32.totalorder %s30, 0
      %p240 = por %p238, %p239
      %p241 = scmp.ne.s32.totalorder %s229, %s230
      %p242 = scmp.eq.s32.totalorder %s31, 1
      %p243 = por %p241, %p242
      %p245 = scmp.ne.s32.totalorder %s230, %s244
      %p246 = scmp.eq.s32.totalorder %s31, 0
      %p247 = por %p245, %p246
      %s249 = sadd.s32 %s248, 1
      %p252 = scmp.eq.s32.totalorder %s25, 1
      %p253 = scmp.ne.s32.totalorder %s248, %s250
      %p254 = scmp.eq.s32.totalorder %s25, 0
      %p255 = por %p253, %p254
      %p256 = scmp.ne.s32.totalorder %s248, %s250
      %p257 = scmp.eq.s32.totalorder %s30, 1
      %p258 = por %p256, %p257
      %p259 = scmp.ne.s32.totalorder %s250, %s251
      %p260 = scmp.eq.s32.totalorder %s30, 0
      %p261 = por %p259, %p260
      %p262 = scmp.ne.s32.totalorder %s250, %s251
      %p263 = scmp.eq.s32.totalorder %s31, 1
      %p264 = por %p262, %p263
      %p266 = scmp.ne.s32.totalorder %s251, %s265
      %p267 = scmp.eq.s32.totalorder %s31, 0
      %p268 = por %p266, %p267
      %s270 = sadd.s32 %s269, 1
      %p273 = scmp.eq.s32.totalorder %s25, 1
      %p274 = scmp.ne.s32.totalorder %s269, %s271
      %p275 = scmp.eq.s32.totalorder %s25, 0
      %p276 = por %p274, %p275
      %p277 = scmp.ne.s32.totalorder %s269, %s271
      %p278 = scmp.eq.s32.totalorder %s30, 1
      %p279 = por %p277, %p278
      %p280 = scmp.ne.s32.totalorder %s271, %s272
      %p281 = scmp.eq.s32.totalorder %s30, 0
      %p282 = por %p280, %p281
      %p283 = scmp.ne.s32.totalorder %s271, %s272
      %p284 = scmp.eq.s32.totalorder %s31, 1
      %p285 = por %p283, %p284
      %p287 = scmp.ne.s32.totalorder %s272, %s286
      %p288 = scmp.eq.s32.totalorder %s31, 0
      %p289 = por %p287, %p288
      %s291 = sadd.s32 %s290, 1
      %p294 = scmp.eq.s32.totalorder %s25, 1
      %p295 = scmp.ne.s32.totalorder %s290, %s292
      %p296 = scmp.eq.s32.totalorder %s25, 0
      %p297 = por %p295, %p296
      %p298 = scmp.ne.s32.totalorder %s290, %s292
      %p299 = scmp.eq.s32.totalorder %s30, 1
      %p300 = por %p298, %p299
      %p301 = scmp.ne.s32.totalorder %s292, %s293
      %p302 = scmp.eq.s32.totalorder %s30, 0
      %p303 = por %p301, %p302
      %p304 = scmp.ne.s32.totalorder %s292, %s293
      %p305 = scmp.eq.s32.totalorder %s31, 1
      %p306 = por %p304, %p305
      %p308 = scmp.ne.s32.totalorder %s293, %s307
      %p309 = scmp.eq.s32.totalorder %s31, 0
      %p310 = por %p308, %p309
      %s312 = sadd.s32 %s311, 1
      %p315 = scmp.eq.s32.totalorder %s25, 1
      %p316 = scmp.ne.s32.totalorder %s311, %s313
      %p317 = scmp.eq.s32.totalorder %s25, 0
      %p318 = por %p316, %p317
      %p319 = scmp.ne.s32.totalorder %s311, %s313
      %p320 = scmp.eq.s32.totalorder %s30, 1
      %p321 = por %p319, %p320
      %p322 = scmp.ne.s32.totalorder %s313, %s314
      %p323 = scmp.eq.s32.totalorder %s30, 0
      %p324 = por %p322, %p323
      %p325 = scmp.ne.s32.totalorder %s313, %s314
      %p326 = scmp.eq.s32.totalorder %s31, 1
      %p327 = por %p325, %p326
      %p329 = scmp.ne.s32.totalorder %s314, %s328
      %p330 = scmp.eq.s32.totalorder %s31, 0
      %p331 = por %p329, %p330
      %s333 = sadd.s32 %s332, 1
      %p336 = scmp.eq.s32.totalorder %s25, 1
      %p337 = scmp.ne.s32.totalorder %s332, %s334
      %p338 = scmp.eq.s32.totalorder %s25, 0
      %p339 = por %p337, %p338
      %p340 = scmp.ne.s32.totalorder %s332, %s334
      %p341 = scmp.eq.s32.totalorder %s30, 1
      %p342 = por %p340, %p341
      %p343 = scmp.ne.s32.totalorder %s334, %s335
      %p344 = scmp.eq.s32.totalorder %s30, 0
      %p345 = por %p343, %p344
      %p346 = scmp.ne.s32.totalorder %s334, %s335
      %p347 = scmp.eq.s32.totalorder %s31, 1
      %p348 = por %p346, %p347
      %p350 = scmp.ne.s32.totalorder %s335, %s349
      %p351 = scmp.eq.s32.totalorder %s31, 0
      %p352 = por %p350, %p351
      %s354 = sadd.s32 %s353, 1
      %p357 = scmp.eq.s32.totalorder %s25, 1
      %p358 = scmp.ne.s32.totalorder %s353, %s355
      %p359 = scmp.eq.s32.totalorder %s25, 0
      %p360 = por %p358, %p359
      %p361 = scmp.ne.s32.totalorder %s353, %s355
      %p362 = scmp.eq.s32.totalorder %s30, 1
      %p363 = por %p361, %p362
      %p364 = scmp.ne.s32.totalorder %s355, %s356
      %p365 = scmp.eq.s32.totalorder %s30, 0
      %p366 = por %p364, %p365
      %p367 = scmp.ne.s32.totalorder %s355, %s356
      %p368 = scmp.eq.s32.totalorder %s31, 1
      %p369 = por %p367, %p368
      %p371 = scmp.ne.s32.totalorder %s356, %s370
      %p372 = scmp.eq.s32.totalorder %s31, 0
      %p373 = por %p371, %p372
      %s374 = ssub.s32 %s25, %s32
      %p375 = scmp.eq.s32.totalorder %s374, 0
      %s377 = sadd.s32 %s376, 1
      %s378 = scalar_select %p375, %s376, %s377
      %p381 = pneg %p375
      %p382 = scmp.eq.s32.totalorder %s25, 1
      %p383 = por %p381, %p382
      %p384 = scmp.ne.s32.totalorder %s376, %s379
      %p385 = scmp.eq.s32.totalorder %s25, 0
      %p386 = por %p384, %p385
      %p387 = scmp.ne.s32.totalorder %s376, %s379
      %p388 = scmp.eq.s32.totalorder %s30, 1
      %p389 = por %p387, %p388
      %p390 = scmp.ne.s32.totalorder %s379, %s380
      %p391 = scmp.eq.s32.totalorder %s30, 0
      %p392 = por %p390, %p391
      %p393 = scmp.ne.s32.totalorder %s379, %s380
      %p394 = scmp.eq.s32.totalorder %s31, 1
      %p395 = por %p393, %p394
      %p397 = scmp.ne.s32.totalorder %s380, %s396
      %p398 = scmp.eq.s32.totalorder %s31, 0
      %p399 = por %p397, %p398
      %p400 = scmp.le.s32.totalorder 1, %s25
      %p401 = scmp.lt.s32.totalorder %s25, 3
      %p402 = pnand %p400, %p401
      %p403 = pneg %p402
      // Predicated region
      $region9: #{net_forward.1} parent=5 // pred_check
        _
      $region10: #{net_forward.1} parent=5 // pred_check_branch
        %405 = sbr.rel (%p402) target = $region12
      $region11: #{net_forward.1} parent=5 // pred_region
        %s406 = ssub.s32 %s25, 1
        // Predicated region
        $region13: #{net_forward.1} parent=11 // pred_check
          %p407 = pneg %p72
        $region14: #{net_forward.1} parent=11 // pred_check_branch
          %409 = sbr.rel (%p407) target = $region16
        $region15: #{net_forward.1} parent=11 // pred_region
          _
        $region16: #{net_forward.1} parent=11 // pred_fallthru
          _
        // Predicated region
        $region17: #{net_forward.1} parent=11 // pred_check
          %p410 = pneg %p93
        $region18: #{net_forward.1} parent=11 // pred_check_branch
          %412 = sbr.rel (%p410) target = $region20
        $region19: #{net_forward.1} parent=11 // pred_region
          _
        $region20: #{net_forward.1} parent=11 // pred_fallthru
          _
        // Predicated region
        $region21: #{net_forward.1} parent=11 // pred_check
          %p413 = pneg %p114
        $region22: #{net_forward.1} parent=11 // pred_check_branch
          %415 = sbr.rel (%p413) target = $region24
        $region23: #{net_forward.1} parent=11 // pred_region
          _
        $region24: #{net_forward.1} parent=11 // pred_fallthru
          _
        // Predicated region
        $region25: #{net_forward.1} parent=11 // pred_check
          %p416 = pneg %p135
        $region26: #{net_forward.1} parent=11 // pred_check_branch
          %418 = sbr.rel (%p416) target = $region28
        $region27: #{net_forward.1} parent=11 // pred_region
          _
        $region28: #{net_forward.1} parent=11 // pred_fallthru
          _
        // Predicated region
        $region29: #{net_forward.1} parent=11 // pred_check
          %p419 = pneg %p156
        $region30: #{net_forward.1} parent=11 // pred_check_branch
          %421 = sbr.rel (%p419) target = $region32
        $region31: #{net_forward.1} parent=11 // pred_region
          _
        $region32: #{net_forward.1} parent=11 // pred_fallthru
          _
        // Predicated region
        $region33: #{net_forward.1} parent=11 // pred_check
          %p422 = pneg %p177
        $region34: #{net_forward.1} parent=11 // pred_check_branch
          %424 = sbr.rel (%p422) target = $region36
        $region35: #{net_forward.1} parent=11 // pred_region
          _
        $region36: #{net_forward.1} parent=11 // pred_fallthru
          _
        // Predicated region
        $region37: #{net_forward.1} parent=11 // pred_check
          %p425 = pneg %p198
        $region38: #{net_forward.1} parent=11 // pred_check_branch
          %427 = sbr.rel (%p425) target = $region40
        $region39: #{net_forward.1} parent=11 // pred_region
          _
        $region40: #{net_forward.1} parent=11 // pred_fallthru
          _
        // Predicated region
        $region41: #{net_forward.1} parent=11 // pred_check
          %p428 = pneg %p219
        $region42: #{net_forward.1} parent=11 // pred_check_branch
          %430 = sbr.rel (%p428) target = $region44
        $region43: #{net_forward.1} parent=11 // pred_region
          _
        $region44: #{net_forward.1} parent=11 // pred_fallthru
          _
        // Predicated region
        $region45: #{net_forward.1} parent=11 // pred_check
          %p431 = pneg %p240
        $region46: #{net_forward.1} parent=11 // pred_check_branch
          %433 = sbr.rel (%p431) target = $region48
        $region47: #{net_forward.1} parent=11 // pred_region
          _
        $region48: #{net_forward.1} parent=11 // pred_fallthru
          _
        // Predicated region
        $region49: #{net_forward.1} parent=11 // pred_check
          %p434 = pneg %p261
        $region50: #{net_forward.1} parent=11 // pred_check_branch
          %436 = sbr.rel (%p434) target = $region52
        $region51: #{net_forward.1} parent=11 // pred_region
          _
        $region52: #{net_forward.1} parent=11 // pred_fallthru
          _
        // Predicated region
        $region53: #{net_forward.1} parent=11 // pred_check
          %p437 = pneg %p282
        $region54: #{net_forward.1} parent=11 // pred_check_branch
          %439 = sbr.rel (%p437) target = $region56
        $region55: #{net_forward.1} parent=11 // pred_region
          _
        $region56: #{net_forward.1} parent=11 // pred_fallthru
          _
        // Predicated region
        $region57: #{net_forward.1} parent=11 // pred_check
          %p440 = pneg %p303
        $region58: #{net_forward.1} parent=11 // pred_check_branch
          %442 = sbr.rel (%p440) target = $region60
        $region59: #{net_forward.1} parent=11 // pred_region
          _
        $region60: #{net_forward.1} parent=11 // pred_fallthru
          _
        // Predicated region
        $region61: #{net_forward.1} parent=11 // pred_check
          %p443 = pneg %p324
        $region62: #{net_forward.1} parent=11 // pred_check_branch
          %445 = sbr.rel (%p443) target = $region64
        $region63: #{net_forward.1} parent=11 // pred_region
          _
        $region64: #{net_forward.1} parent=11 // pred_fallthru
          _
        // Predicated region
        $region65: #{net_forward.1} parent=11 // pred_check
          %p446 = pneg %p345
        $region66: #{net_forward.1} parent=11 // pred_check_branch
          %448 = sbr.rel (%p446) target = $region68
        $region67: #{net_forward.1} parent=11 // pred_region
          _
        $region68: #{net_forward.1} parent=11 // pred_fallthru
          _
        // Predicated region
        $region69: #{net_forward.1} parent=11 // pred_check
          %p449 = pneg %p366
        $region70: #{net_forward.1} parent=11 // pred_check_branch
          %451 = sbr.rel (%p449) target = $region72
        $region71: #{net_forward.1} parent=11 // pred_region
          _
        $region72: #{net_forward.1} parent=11 // pred_fallthru
          _
      $region12: #{net_forward.1} parent=5 // pred_fallthru
        _
      %p452 = scmp.lt.s32.totalorder %s25, 2
      // Predicated region
      $region73: #{net_forward.1} parent=5 // pred_check
        %p453 = pneg %p452
      $region74: #{net_forward.1} parent=5 // pred_check_branch
        %455 = sbr.rel (%p453) target = $region76
      $region75: #{net_forward.1} parent=5 // pred_region
        // Predicated region
        $region77: #{net_forward.1} parent=75 // pred_check
          %p456 = pneg %p45
        $region78: #{net_forward.1} parent=75 // pred_check_branch
          %458 = sbr.rel (%p456) target = $region80
        $region79: #{net_forward.1} parent=75 // pred_region
          %p459 = scmp.lt.s32.totalorder %s25, 1
          %s460 = scalar_select %p459, %s25, 1
          %s461 = smul.addr %s460, 2
          %s462 = smul.addr %s461, 8
          %s463 = scalar_lea.vmem %s0, %s462
        $region80: #{net_forward.1} parent=75 // pred_fallthru
          _
      $region76: #{net_forward.1} parent=5 // pred_fallthru
        _
      %p464 = scmp.le.s32.totalorder 1, %s25
      %p465 = scmp.lt.s32.totalorder %s25, 3
      %p466 = pnand %p464, %p465
      %p467 = pneg %p466
      // Predicated region
      $region81: #{net_forward.1} parent=5 // pred_check
        _
      $region82: #{net_forward.1} parent=5 // pred_check_branch
        %469 = sbr.rel (%p466) target = $region84
      $region83: #{net_forward.1} parent=5 // pred_region
        %s470 = ssub.s32 %s25, 1
        %p471 = scmp.lt.s32.totalorder %s30, 1
        %s472 = scalar_select %p471, %s30, 1
        %s473 = smul.addr %s472, 2
        %s474 = smul.addr %s473, 8
        %s475 = scalar_lea.vmem %s0, %s474
        %p476 = pneg %p51
        %p477 = pneg %p48
        %p478 = pneg %p72
        %p479 = pneg %p69
        %p480 = pneg %p93
        %p481 = pneg %p90
        %p482 = pneg %p114
        %p483 = pneg %p111
        %p484 = pneg %p135
        %p485 = pneg %p132
        %p486 = pneg %p156
        %p487 = pneg %p153
        %p488 = pneg %p177
        %p489 = pneg %p174
        %p490 = pneg %p198
        %p491 = pneg %p195
        %p492 = pneg %p219
        %p493 = pneg %p216
        %p494 = pneg %p240
        %p495 = pneg %p237
        %p496 = pneg %p261
        %p497 = pneg %p258
        %p498 = pneg %p282
        %p499 = pneg %p279
        %p500 = pneg %p303
        %p501 = pneg %p300
        %p502 = pneg %p324
        %p503 = pneg %p321
        %p504 = pneg %p345
        %p505 = pneg %p342
        %p506 = pneg %p366
        %p507 = pneg %p363
        %p508 = pneg %p392
        %p509 = pneg %p389
        %s510 = sand.u32 %s379, 1
        %s511 = scalar_lea.sflag [#allocation3], %s510
        %s512 = sand.u32 %s379, 1
        %s513 = scalar_lea.vmem [#allocation2], %s512
        %p514 = scmp.lt.s32.totalorder %s30, 1
        %s515 = scalar_select %p514, %s30, 1
        %s516 = smul.addr %s515, 2
        %s517 = smul.addr %s516, 8
        %s518 = scalar_lea.vmem %s0, %s517
        %v519 = vld [vmem:[%s518] sm:$0xff]
        %v520 = vld [vmem:[%s518 + $0x8] sm:$0xff]
        %v521 = vld [vmem:[%s1] sm:$0xff]
        %v522 = vld [vmem:[%s1 + $0x8] sm:$0x3f]
        %vm523 = vcmask 130048
        %v525 = vsel %vm523, %v521, 0
        %v528 = vsel %vm523, %v522, 0
        %530 = vmatprep.subr.mxu0 0.0
        %531 = vmatpush1.msra.mxu0 0.0
        %532 = vmatprep.subr.mxu0 0.0
        %533 = vmatpush1.msra.mxu0 0.0
        %534 = vmatprep.subr.mxu0 0.0
        %535 = vmatpush1.msra.mxu0 0.0
        %536 = vmatprep.subr.mxu0 0.0
        %537 = vmatpush1.msra.mxu0 0.0
        %538 = vmatprep.subr.mxu0 0.0
        %539 = vmatpush1.msra.mxu0 0.0
        %540 = vmatprep.subr.mxu0 0.0
        %541 = vmatpush1.msra.mxu0 0.0
        %542 = vmatprep.subr.mxu0 0.0
        %543 = vmatpush1.msra.mxu0 0.0
        %544 = vmatprep.subr.mxu0 0.0
        %545 = vmatpush1.msra.mxu0 0.0
        %546 = vmatprep.subr.mxu0 0.0
        %547 = vmatpush1.msra.mxu0 0.0
        %548 = vmatprep.subr.mxu0 0.0
        %549 = vmatpush1.msra.mxu0 0.0
        %550 = vmatprep.subr.mxu0 0.0
        %551 = vmatpush1.msra.mxu0 0.0
        %552 = vmatprep.subr.mxu0 0.0
        %553 = vmatpush1.msra.mxu0 0.0
        %554 = vmatprep.subr.mxu0 0.0
        %555 = vmatpush1.msra.mxu0 0.0
        %556 = vmatprep.subr.mxu0 0.0
        %557 = vmatpush1.msra.mxu0 0.0
        %558 = vmatprep.subr.mxu0 0.0
        %559 = vmatpush1.msra.mxu0 %v520
        %560 = vmatprep.subr.mxu0 0.0
        %561 = vmatpush1.msra.mxu0 %v519
        %562 = vmatprep.subr.mxu0 0.0
        %563 = vmatpush2.msra.mxu0 0.0
        %564 = vmatprep.subr.mxu0 0.0
        %565 = vmatpush2.msra.mxu0 0.0
        %566 = vmatprep.subr.mxu0 0.0
        %567 = vmatpush2.msra.mxu0 0.0
        %568 = vmatprep.subr.mxu0 0.0
        %569 = vmatpush2.msra.mxu0 0.0
        %570 = vmatprep.subr.mxu0 0.0
        %571 = vmatpush2.msra.mxu0 0.0
        %572 = vmatprep.subr.mxu0 0.0
        %573 = vmatpush2.msra.mxu0 0.0
        %574 = vmatprep.subr.mxu0 0.0
        %575 = vmatpush2.msra.mxu0 0.0
        %576 = vmatprep.subr.mxu0 0.0
        %577 = vmatpush2.msra.mxu0 0.0
        %578 = vmatprep.subr.mxu0 0.0
        %579 = vmatpush2.msra.mxu0 0.0
        %580 = vmatprep.subr.mxu0 0.0
        %581 = vmatpush2.msra.mxu0 0.0
        %582 = vmatprep.subr.mxu0 0.0
        %583 = vmatpush2.msra.mxu0 0.0
        %584 = vmatprep.subr.mxu0 0.0
        %585 = vmatpush2.msra.mxu0 0.0
        %586 = vmatprep.subr.mxu0 0.0
        %587 = vmatpush2.msra.mxu0 0.0
        %588 = vmatprep.subr.mxu0 0.0
        %589 = vmatpush2.msra.mxu0 0.0
        %590 = vmatprep.subr.mxu0 0.0
        %591 = vmatpush2.msra.mxu0 0.0
        %592 = vmatprep.subr.mxu0 0.0
        %593 = vmatpush2.msra.mxu0 0.0
        %594 = vmatprep.mubr.f32.mxu0 0.0
        %595 = vmatmul.mubr.f32.gmra.mxu0 %v525
        %v596 = vpop.f32.mrf.mxu0
        %v597 = vadd.f32 0.0, %v596
        %v598 = vpop.f32.mrf.mxu0
        %599 = vmatprep.mubr.f32.mxu0 0.0
        %600 = vmatmul.mubr.f32.gmra.mxu0 %v528
        %v601 = vpop.f32.mrf.mxu0
        %v602 = vadd.f32 0.0, %v601
        %v603 = vpop.f32.mrf.mxu0
        %604 = vdwg.mxu0
        %v605 = vld [vmem:[%s2] sm:$0xff]
        %v606 = vld [vmem:[%s2 + $0x8] sm:$0xff]
        %v607 = vld [vmem:[%s2 + $0x10] sm:$0xff]
        %v608 = vld [vmem:[%s2 + $0x18] sm:$0xff]
        %v609 = vld [vmem:[%s2 + $0x20] sm:$0xff]
        %v610 = vld [vmem:[%s2 + $0x28] sm:$0xff]
        %s611 = scalar_lea.vmem %s1, 16
        %v612 = vld [vmem:[%s611] sm:$0xff]
        %v613 = vld [vmem:[%s611 + $0x8] sm:$0x3f]
        %v615 = vsel %vm523, %v612, 0
        %v618 = vsel %vm523, %v613, 0
        %620 = vmatprep.subr.mxu0 0.0
        %621 = vmatpush1.msra.mxu0 0.0
        %622 = vmatprep.subr.mxu0 0.0
        %623 = vmatpush1.msra.mxu0 0.0
        %624 = vmatprep.subr.mxu0 0.0
        %625 = vmatpush1.msra.mxu0 0.0
        %626 = vmatprep.subr.mxu0 0.0
        %627 = vmatpush1.msra.mxu0 0.0
        %628 = vmatprep.subr.mxu0 0.0
        %629 = vmatpush1.msra.mxu0 0.0
        %630 = vmatprep.subr.mxu0 0.0
        %631 = vmatpush1.msra.mxu0 0.0
        %632 = vmatprep.subr.mxu0 0.0
        %633 = vmatpush1.msra.mxu0 0.0
        %634 = vmatprep.subr.mxu0 0.0
        %635 = vmatpush1.msra.mxu0 0.0
        %636 = vmatprep.subr.mxu0 0.0
        %637 = vmatpush1.msra.mxu0 0.0
        %638 = vmatprep.subr.mxu0 0.0
        %639 = vmatpush1.msra.mxu0 0.0
        %640 = vmatprep.subr.mxu0 0.0
        %641 = vmatpush1.msra.mxu0 0.0
        %642 = vmatprep.subr.mxu0 0.0
        %643 = vmatpush1.msra.mxu0 0.0
        %644 = vmatprep.subr.mxu0 0.0
        %645 = vmatpush1.msra.mxu0 0.0
        %646 = vmatprep.subr.mxu0 0.0
        %647 = vmatpush1.msra.mxu0 0.0
        %648 = vmatprep.subr.mxu0 0.0
        %649 = vmatpush1.msra.mxu0 %v520
        %650 = vmatprep.subr.mxu0 0.0
        %651 = vmatpush1.msra.mxu0 %v519
        %652 = vmatprep.subr.mxu0 0.0
        %653 = vmatpush2.msra.mxu0 0.0
        %654 = vmatprep.subr.mxu0 0.0
        %655 = vmatpush2.msra.mxu0 0.0
        %656 = vmatprep.subr.mxu0 0.0
        %657 = vmatpush2.msra.mxu0 0.0
        %658 = vmatprep.subr.mxu0 0.0
        %659 = vmatpush2.msra.mxu0 0.0
        %660 = vmatprep.subr.mxu0 0.0
        %661 = vmatpush2.msra.mxu0 0.0
        %662 = vmatprep.subr.mxu0 0.0
        %663 = vmatpush2.msra.mxu0 0.0
        %664 = vmatprep.subr.mxu0 0.0
        %665 = vmatpush2.msra.mxu0 0.0
        %666 = vmatprep.subr.mxu0 0.0
        %667 = vmatpush2.msra.mxu0 0.0
        %668 = vmatprep.subr.mxu0 0.0
        %669 = vmatpush2.msra.mxu0 0.0
        %670 = vmatprep.subr.mxu0 0.0
        %671 = vmatpush2.msra.mxu0 0.0
        %672 = vmatprep.subr.mxu0 0.0
        %673 = vmatpush2.msra.mxu0 0.0
        %674 = vmatprep.subr.mxu0 0.0
        %675 = vmatpush2.msra.mxu0 0.0
        %676 = vmatprep.subr.mxu0 0.0
        %677 = vmatpush2.msra.mxu0 0.0
        %678 = vmatprep.subr.mxu0 0.0
        %679 = vmatpush2.msra.mxu0 0.0
        %680 = vmatprep.subr.mxu0 0.0
        %681 = vmatpush2.msra.mxu0 0.0
        %682 = vmatprep.subr.mxu0 0.0
        %683 = vmatpush2.msra.mxu0 0.0
        %684 = vmatprep.mubr.f32.mxu0 0.0
        %685 = vmatmul.mubr.f32.gmra.mxu0 %v615
        %v686 = vpop.f32.mrf.mxu0
        %v687 = vadd.f32 0.0, %v686
        %v688 = vpop.f32.mrf.mxu0
        %689 = vmatprep.mubr.f32.mxu0 0.0
        %690 = vmatmul.mubr.f32.gmra.mxu0 %v618
        %v691 = vpop.f32.mrf.mxu0
        %v692 = vadd.f32 0.0, %v691
        %v693 = vpop.f32.mrf.mxu0
        %694 = vdwg.mxu0
        %s695 = scalar_lea.vmem %s2, 48
        %v696 = vld [vmem:[%s695] sm:$0xff]
        %v697 = vld [vmem:[%s695 + $0x8] sm:$0xff]
        %v698 = vld [vmem:[%s695 + $0x10] sm:$0xff]
        %v699 = vld [vmem:[%s695 + $0x18] sm:$0xff]
        %v700 = vld [vmem:[%s695 + $0x20] sm:$0xff]
        %v701 = vld [vmem:[%s695 + $0x28] sm:$0xff]
        %vm702 = vcmask 392192
        %v704 = vsel %vm702, %v687, 0
        %v707 = vsel %vm702, %v692, 0
        %709 = vmatprep.subr.mxu0 0.0
        %710 = vmatpush1.msra.mxu0 0.0
        %711 = vmatprep.subr.mxu0 0.0
        %712 = vmatpush1.msra.mxu0 0.0
        %713 = vmatprep.subr.mxu0 0.0
        %714 = vmatpush1.msra.mxu0 0.0
        %715 = vmatprep.subr.mxu0 0.0
        %716 = vmatpush1.msra.mxu0 0.0
        %717 = vmatprep.subr.mxu0 0.0
        %718 = vmatpush1.msra.mxu0 0.0
        %719 = vmatprep.subr.mxu0 0.0
        %720 = vmatpush1.msra.mxu0 0.0
        %721 = vmatprep.subr.mxu0 0.0
        %722 = vmatpush1.msra.mxu0 0.0
        %723 = vmatprep.subr.mxu0 0.0
        %724 = vmatpush1.msra.mxu0 0.0
        %725 = vmatprep.subr.mxu0 0.0
        %726 = vmatpush1.msra.mxu0 0.0
        %727 = vmatprep.subr.mxu0 0.0
        %728 = vmatpush1.msra.mxu0 0.0
        %729 = vmatprep.subr.mxu0 0.0
        %730 = vmatpush1.msra.mxu0 %v701
        %731 = vmatprep.subr.mxu0 0.0
        %732 = vmatpush1.msra.mxu0 %v700
        %733 = vmatprep.subr.mxu0 0.0
        %734 = vmatpush1.msra.mxu0 %v699
        %735 = vmatprep.subr.mxu0 0.0
        %736 = vmatpush1.msra.mxu0 %v698
        %737 = vmatprep.subr.mxu0 0.0
        %738 = vmatpush1.msra.mxu0 %v697
        %739 = vmatprep.subr.mxu0 0.0
        %740 = vmatpush1.msra.mxu0 %v696
        %741 = vmatprep.subr.mxu0 0.0
        %742 = vmatpush2.msra.mxu0 0.0
        %743 = vmatprep.subr.mxu0 0.0
        %744 = vmatpush2.msra.mxu0 0.0
        %745 = vmatprep.subr.mxu0 0.0
        %746 = vmatpush2.msra.mxu0 0.0
        %747 = vmatprep.subr.mxu0 0.0
        %748 = vmatpush2.msra.mxu0 0.0
        %749 = vmatprep.subr.mxu0 0.0
        %750 = vmatpush2.msra.mxu0 0.0
        %751 = vmatprep.subr.mxu0 0.0
        %752 = vmatpush2.msra.mxu0 0.0
        %753 = vmatprep.subr.mxu0 0.0
        %754 = vmatpush2.msra.mxu0 0.0
        %755 = vmatprep.subr.mxu0 0.0
        %756 = vmatpush2.msra.mxu0 0.0
        %757 = vmatprep.subr.mxu0 0.0
        %758 = vmatpush2.msra.mxu0 0.0
        %759 = vmatprep.subr.mxu0 0.0
        %760 = vmatpush2.msra.mxu0 0.0
        %761 = vmatprep.subr.mxu0 0.0
        %762 = vmatpush2.msra.mxu0 0.0
        %763 = vmatprep.subr.mxu0 0.0
        %764 = vmatpush2.msra.mxu0 0.0
        %765 = vmatprep.subr.mxu0 0.0
        %766 = vmatpush2.msra.mxu0 0.0
        %767 = vmatprep.subr.mxu0 0.0
        %768 = vmatpush2.msra.mxu0 0.0
        %769 = vmatprep.subr.mxu0 0.0
        %770 = vmatpush2.msra.mxu0 0.0
        %771 = vmatprep.subr.mxu0 0.0
        %772 = vmatpush2.msra.mxu0 0.0
        %773 = vmatprep.mubr.f32.mxu0 0.0
        %774 = vmatmul.mubr.f32.gmra.mxu0 %v704
        %v775 = vpop.f32.mrf.mxu0
        %v776 = vadd.f32 0.0, %v775
        %v777 = vpop.f32.mrf.mxu0
        %778 = vmatprep.mubr.f32.mxu0 0.0
        %779 = vmatmul.mubr.f32.gmra.mxu0 %v707
        %v780 = vpop.f32.mrf.mxu0
        %v781 = vadd.f32 0.0, %v780
        %v782 = vpop.f32.mrf.mxu0
        %783 = vdwg.mxu0
        %v785 = vsel %vm702, %v597, 0
        %v788 = vsel %vm702, %v602, 0
        %790 = vmatprep.subr.mxu0 0.0
        %791 = vmatpush1.msra.mxu0 0.0
        %792 = vmatprep.subr.mxu0 0.0
        %793 = vmatpush1.msra.mxu0 0.0
        %794 = vmatprep.subr.mxu0 0.0
        %795 = vmatpush1.msra.mxu0 0.0
        %796 = vmatprep.subr.mxu0 0.0
        %797 = vmatpush1.msra.mxu0 0.0
        %798 = vmatprep.subr.mxu0 0.0
        %799 = vmatpush1.msra.mxu0 0.0
        %800 = vmatprep.subr.mxu0 0.0
        %801 = vmatpush1.msra.mxu0 0.0
        %802 = vmatprep.subr.mxu0 0.0
        %803 = vmatpush1.msra.mxu0 0.0
        %804 = vmatprep.subr.mxu0 0.0
        %805 = vmatpush1.msra.mxu0 0.0
        %806 = vmatprep.subr.mxu0 0.0
        %807 = vmatpush1.msra.mxu0 0.0
        %808 = vmatprep.subr.mxu0 0.0
        %809 = vmatpush1.msra.mxu0 0.0
        %810 = vmatprep.subr.mxu0 0.0
        %811 = vmatpush1.msra.mxu0 %v610
        %812 = vmatprep.subr.mxu0 0.0
        %813 = vmatpush1.msra.mxu0 %v609
        %814 = vmatprep.subr.mxu0 0.0
        %815 = vmatpush1.msra.mxu0 %v608
        %816 = vmatprep.subr.mxu0 0.0
        %817 = vmatpush1.msra.mxu0 %v607
        %818 = vmatprep.subr.mxu0 0.0
        %819 = vmatpush1.msra.mxu0 %v606
        %820 = vmatprep.subr.mxu0 0.0
        %821 = vmatpush1.msra.mxu0 %v605
        %822 = vmatprep.subr.mxu0 0.0
        %823 = vmatpush2.msra.mxu0 0.0
        %824 = vmatprep.subr.mxu0 0.0
        %825 = vmatpush2.msra.mxu0 0.0
        %826 = vmatprep.subr.mxu0 0.0
        %827 = vmatpush2.msra.mxu0 0.0
        %828 = vmatprep.subr.mxu0 0.0
        %829 = vmatpush2.msra.mxu0 0.0
        %830 = vmatprep.subr.mxu0 0.0
        %831 = vmatpush2.msra.mxu0 0.0
        %832 = vmatprep.subr.mxu0 0.0
        %833 = vmatpush2.msra.mxu0 0.0
        %834 = vmatprep.subr.mxu0 0.0
        %835 = vmatpush2.msra.mxu0 0.0
        %836 = vmatprep.subr.mxu0 0.0
        %837 = vmatpush2.msra.mxu0 0.0
        %838 = vmatprep.subr.mxu0 0.0
        %839 = vmatpush2.msra.mxu0 0.0
        %840 = vmatprep.subr.mxu0 0.0
        %841 = vmatpush2.msra.mxu0 0.0
        %842 = vmatprep.subr.mxu0 0.0
        %843 = vmatpush2.msra.mxu0 0.0
        %844 = vmatprep.subr.mxu0 0.0
        %845 = vmatpush2.msra.mxu0 0.0
        %846 = vmatprep.subr.mxu0 0.0
        %847 = vmatpush2.msra.mxu0 0.0
        %848 = vmatprep.subr.mxu0 0.0
        %849 = vmatpush2.msra.mxu0 0.0
        %850 = vmatprep.subr.mxu0 0.0
        %851 = vmatpush2.msra.mxu0 0.0
        %852 = vmatprep.subr.mxu0 0.0
        %853 = vmatpush2.msra.mxu0 0.0
        %854 = vmatprep.mubr.f32.mxu0 0.0
        %855 = vmatmul.mubr.f32.gmra.mxu0 %v785
        %v856 = vpop.f32.mrf.mxu0
        %v857 = vadd.f32 %v776, %v856
        %v858 = vpop.f32.mrf.mxu0
        %859 = vmatprep.mubr.f32.mxu0 0.0
        %860 = vmatmul.mubr.f32.gmra.mxu0 %v788
        %v861 = vpop.f32.mrf.mxu0
        %v862 = vadd.f32 %v781, %v861
        %v863 = vpop.f32.mrf.mxu0
        %864 = vdwg.mxu0
        %s865 = scalar_lea.vmem %s1, 32
        %v866 = vld [vmem:[%s865] sm:$0xff]
        %v867 = vld [vmem:[%s865 + $0x8] sm:$0x3f]
        %v869 = vsel %vm523, %v866, 0
        %v872 = vsel %vm523, %v867, 0
        %874 = vmatprep.subr.mxu0 0.0
        %875 = vmatpush1.msra.mxu0 0.0
        %876 = vmatprep.subr.mxu0 0.0
        %877 = vmatpush1.msra.mxu0 0.0
        %878 = vmatprep.subr.mxu0 0.0
        %879 = vmatpush1.msra.mxu0 0.0
        %880 = vmatprep.subr.mxu0 0.0
        %881 = vmatpush1.msra.mxu0 0.0
        %882 = vmatprep.subr.mxu0 0.0
        %883 = vmatpush1.msra.mxu0 0.0
        %884 = vmatprep.subr.mxu0 0.0
        %885 = vmatpush1.msra.mxu0 0.0
        %886 = vmatprep.subr.mxu0 0.0
        %887 = vmatpush1.msra.mxu0 0.0
        %888 = vmatprep.subr.mxu0 0.0
        %889 = vmatpush1.msra.mxu0 0.0
        %890 = vmatprep.subr.mxu0 0.0
        %891 = vmatpush1.msra.mxu0 0.0
        %892 = vmatprep.subr.mxu0 0.0
        %893 = vmatpush1.msra.mxu0 0.0
        %894 = vmatprep.subr.mxu0 0.0
        %895 = vmatpush1.msra.mxu0 0.0
        %896 = vmatprep.subr.mxu0 0.0
        %897 = vmatpush1.msra.mxu0 0.0
        %898 = vmatprep.subr.mxu0 0.0
        %899 = vmatpush1.msra.mxu0 0.0
        %900 = vmatprep.subr.mxu0 0.0
        %901 = vmatpush1.msra.mxu0 0.0
        %902 = vmatprep.subr.mxu0 0.0
        %903 = vmatpush1.msra.mxu0 %v520
        %904 = vmatprep.subr.mxu0 0.0
        %905 = vmatpush1.msra.mxu0 %v519
        %906 = vmatprep.subr.mxu0 0.0
        %907 = vmatpush2.msra.mxu0 0.0
        %908 = vmatprep.subr.mxu0 0.0
        %909 = vmatpush2.msra.mxu0 0.0
        %910 = vmatprep.subr.mxu0 0.0
        %911 = vmatpush2.msra.mxu0 0.0
        %912 = vmatprep.subr.mxu0 0.0
        %913 = vmatpush2.msra.mxu0 0.0
        %914 = vmatprep.subr.mxu0 0.0
        %915 = vmatpush2.msra.mxu0 0.0
        %916 = vmatprep.subr.mxu0 0.0
        %917 = vmatpush2.msra.mxu0 0.0
        %918 = vmatprep.subr.mxu0 0.0
        %919 = vmatpush2.msra.mxu0 0.0
        %920 = vmatprep.subr.mxu0 0.0
        %921 = vmatpush2.msra.mxu0 0.0
        %922 = vmatprep.subr.mxu0 0.0
        %923 = vmatpush2.msra.mxu0 0.0
        %924 = vmatprep.subr.mxu0 0.0
        %925 = vmatpush2.msra.mxu0 0.0
        %926 = vmatprep.subr.mxu0 0.0
        %927 = vmatpush2.msra.mxu0 0.0
        %928 = vmatprep.subr.mxu0 0.0
        %929 = vmatpush2.msra.mxu0 0.0
        %930 = vmatprep.subr.mxu0 0.0
        %931 = vmatpush2.msra.mxu0 0.0
        %932 = vmatprep.subr.mxu0 0.0
        %933 = vmatpush2.msra.mxu0 0.0
        %934 = vmatprep.subr.mxu0 0.0
        %935 = vmatpush2.msra.mxu0 0.0
        %936 = vmatprep.subr.mxu0 0.0
        %937 = vmatpush2.msra.mxu0 0.0
        %938 = vmatprep.mubr.f32.mxu0 0.0
        %939 = vmatmul.mubr.f32.gmra.mxu0 %v869
        %v940 = vpop.f32.mrf.mxu0
        %v941 = vadd.f32 0.0, %v940
        %v942 = vpop.f32.mrf.mxu0
        %943 = vmatprep.mubr.f32.mxu0 0.0
        %944 = vmatmul.mubr.f32.gmra.mxu0 %v872
        %v945 = vpop.f32.mrf.mxu0
        %v946 = vadd.f32 0.0, %v945
        %v947 = vpop.f32.mrf.mxu0
        %948 = vdwg.mxu0
        %s949 = scalar_lea.vmem %s2, 96
        %v950 = vld [vmem:[%s949] sm:$0xff]
        %v951 = vld [vmem:[%s949 + $0x8] sm:$0xff]
        %v952 = vld [vmem:[%s949 + $0x10] sm:$0xff]
        %v953 = vld [vmem:[%s949 + $0x18] sm:$0xff]
        %v954 = vld [vmem:[%s949 + $0x20] sm:$0xff]
        %v955 = vld [vmem:[%s949 + $0x28] sm:$0xff]
        %v957 = vsel %vm702, %v941, 0
        %v960 = vsel %vm702, %v946, 0
        %962 = vmatprep.subr.mxu0 0.0
        %963 = vmatpush1.msra.mxu0 0.0
        %964 = vmatprep.subr.mxu0 0.0
        %965 = vmatpush1.msra.mxu0 0.0
        %966 = vmatprep.subr.mxu0 0.0
        %967 = vmatpush1.msra.mxu0 0.0
        %968 = vmatprep.subr.mxu0 0.0
        %969 = vmatpush1.msra.mxu0 0.0
        %970 = vmatprep.subr.mxu0 0.0
        %971 = vmatpush1.msra.mxu0 0.0
        %972 = vmatprep.subr.mxu0 0.0
        %973 = vmatpush1.msra.mxu0 0.0
        %974 = vmatprep.subr.mxu0 0.0
        %975 = vmatpush1.msra.mxu0 0.0
        %976 = vmatprep.subr.mxu0 0.0
        %977 = vmatpush1.msra.mxu0 0.0
        %978 = vmatprep.subr.mxu0 0.0
        %979 = vmatpush1.msra.mxu0 0.0
        %980 = vmatprep.subr.mxu0 0.0
        %981 = vmatpush1.msra.mxu0 0.0
        %982 = vmatprep.subr.mxu0 0.0
        %983 = vmatpush1.msra.mxu0 %v955
        %984 = vmatprep.subr.mxu0 0.0
        %985 = vmatpush1.msra.mxu0 %v954
        %986 = vmatprep.subr.mxu0 0.0
        %987 = vmatpush1.msra.mxu0 %v953
        %988 = vmatprep.subr.mxu0 0.0
        %989 = vmatpush1.msra.mxu0 %v952
        %990 = vmatprep.subr.mxu0 0.0
        %991 = vmatpush1.msra.mxu0 %v951
        %992 = vmatprep.subr.mxu0 0.0
        %993 = vmatpush1.msra.mxu0 %v950
        %994 = vmatprep.subr.mxu0 0.0
        %995 = vmatpush2.msra.mxu0 0.0
        %996 = vmatprep.subr.mxu0 0.0
        %997 = vmatpush2.msra.mxu0 0.0
        %998 = vmatprep.subr.mxu0 0.0
        %999 = vmatpush2.msra.mxu0 0.0
        %1000 = vmatprep.subr.mxu0 0.0
        %1001 = vmatpush2.msra.mxu0 0.0
        %1002 = vmatprep.subr.mxu0 0.0
        %1003 = vmatpush2.msra.mxu0 0.0
        %1004 = vmatprep.subr.mxu0 0.0
        %1005 = vmatpush2.msra.mxu0 0.0
        %1006 = vmatprep.subr.mxu0 0.0
        %1007 = vmatpush2.msra.mxu0 0.0
        %1008 = vmatprep.subr.mxu0 0.0
        %1009 = vmatpush2.msra.mxu0 0.0
        %1010 = vmatprep.subr.mxu0 0.0
        %1011 = vmatpush2.msra.mxu0 0.0
        %1012 = vmatprep.subr.mxu0 0.0
        %1013 = vmatpush2.msra.mxu0 0.0
        %1014 = vmatprep.subr.mxu0 0.0
        %1015 = vmatpush2.msra.mxu0 0.0
        %1016 = vmatprep.subr.mxu0 0.0
        %1017 = vmatpush2.msra.mxu0 0.0
        %1018 = vmatprep.subr.mxu0 0.0
        %1019 = vmatpush2.msra.mxu0 0.0
        %1020 = vmatprep.subr.mxu0 0.0
        %1021 = vmatpush2.msra.mxu0 0.0
        %1022 = vmatprep.subr.mxu0 0.0
        %1023 = vmatpush2.msra.mxu0 0.0
        %1024 = vmatprep.subr.mxu0 0.0
        %1025 = vmatpush2.msra.mxu0 0.0
        %1026 = vmatprep.mubr.f32.mxu0 0.0
        %1027 = vmatmul.mubr.f32.gmra.mxu0 %v957
        %v1028 = vpop.f32.mrf.mxu0
        %v1029 = vadd.f32 0.0, %v1028
        %v1030 = vpop.f32.mrf.mxu0
        %1031 = vmatprep.mubr.f32.mxu0 0.0
        %1032 = vmatmul.mubr.f32.gmra.mxu0 %v960
        %v1033 = vpop.f32.mrf.mxu0
        %v1034 = vadd.f32 0.0, %v1033
        %v1035 = vpop.f32.mrf.mxu0
        %1036 = vdwg.mxu0
        %v1037 = vadd.f32 %v857, %v1029
        %v1038 = vadd.f32 %v862, %v1034
        %v1039 = vld [vmem:[%s3] sm:$0x1]
        %v1041 = vlaneseq
        %v1042 = vshrl.u32 %v1041, 7
        %v1043 = vsub.s32 0, %v1042
        %v1044 = vrot.slane %v1039, %v1043
        %v1046 = vadd.f32 %v1037, %v1044
        %v1047 = vadd.f32 %v1038, %v1044
        %v1048 = vmax.f32 %v1046, 0.0
        %v1049 = vmax.f32 %v1047, 0.0
        %v1050 = vld [vmem:[%s4] sm:$0x1]
        %v1052 = vlaneseq
        %v1053 = vshrl.u32 %v1052, 7
        %v1054 = vsub.s32 0, %v1053
        %v1055 = vrot.slane %v1050, %v1054
        %v1057 = vmul.f32 %v1048, %v1055
        %v1058 = vmul.f32 %v1049, %v1055
        %v1059 = vld [vmem:[%s5] sm:$0x1]
        %v1061 = vlaneseq
        %v1062 = vshrl.u32 %v1061, 7
        %v1063 = vsub.s32 0, %v1062
        %v1064 = vrot.slane %v1059, %v1063
        %v1066 = vadd.f32 %v1057, %v1064
        %v1067 = vadd.f32 %v1058, %v1064
        %v1068 = vmax.f32 %v1066, 0.0
        %v1069 = vmax.f32 %v1067, 0.0
        %v1070 = vld [vmem:[%s6] sm:$0x7f]
        %vm1071 = vcmask 113664
        %v1073 = vsel %vm1071, %v1070, 0
        %vm1075 = vcmask 1045504
        %v1077 = vsel %vm1075, %v1069, 0
        %1079 = vmatprep.subr.mxu0 0.0
        %1080 = vmatpush1.msra.mxu0 0.0
        %1081 = vmatprep.subr.mxu0 0.0
        %1082 = vmatpush1.msra.mxu0 0.0
        %1083 = vmatprep.subr.mxu0 0.0
        %1084 = vmatpush1.msra.mxu0 0.0
        %1085 = vmatprep.subr.mxu0 0.0
        %1086 = vmatpush1.msra.mxu0 0.0
        %1087 = vmatprep.subr.mxu0 0.0
        %1088 = vmatpush1.msra.mxu0 0.0
        %1089 = vmatprep.subr.mxu0 0.0
        %1090 = vmatpush1.msra.mxu0 0.0
        %1091 = vmatprep.subr.mxu0 0.0
        %1092 = vmatpush1.msra.mxu0 0.0
        %1093 = vmatprep.subr.mxu0 0.0
        %1094 = vmatpush1.msra.mxu0 0.0
        %1095 = vmatprep.subr.mxu0 0.0
        %1096 = vmatpush1.msra.mxu0 0.0
        %1097 = vmatprep.subr.mxu0 0.0
        %1098 = vmatpush1.msra.mxu0 0.0
        %1099 = vmatprep.subr.mxu0 0.0
        %1100 = vmatpush1.msra.mxu0 0.0
        %1101 = vmatprep.subr.mxu0 0.0
        %1102 = vmatpush1.msra.mxu0 0.0
        %1103 = vmatprep.subr.mxu0 0.0
        %1104 = vmatpush1.msra.mxu0 0.0
        %1105 = vmatprep.subr.mxu0 0.0
        %1106 = vmatpush1.msra.mxu0 0.0
        %1107 = vmatprep.subr.mxu0 0.0
        %1108 = vmatpush1.msra.mxu0 %v1077
        %1109 = vmatprep.subr.mxu0 0.0
        %1110 = vmatpush1.msra.mxu0 %v1068
        %1111 = vmatprep.subr.mxu0 0.0
        %1112 = vmatpush2.msra.mxu0 0.0
        %1113 = vmatprep.subr.mxu0 0.0
        %1114 = vmatpush2.msra.mxu0 0.0
        %1115 = vmatprep.subr.mxu0 0.0
        %1116 = vmatpush2.msra.mxu0 0.0
        %1117 = vmatprep.subr.mxu0 0.0
        %1118 = vmatpush2.msra.mxu0 0.0
        %1119 = vmatprep.subr.mxu0 0.0
        %1120 = vmatpush2.msra.mxu0 0.0
        %1121 = vmatprep.subr.mxu0 0.0
        %1122 = vmatpush2.msra.mxu0 0.0
        %1123 = vmatprep.subr.mxu0 0.0
        %1124 = vmatpush2.msra.mxu0 0.0
        %1125 = vmatprep.subr.mxu0 0.0
        %1126 = vmatpush2.msra.mxu0 0.0
        %1127 = vmatprep.subr.mxu0 0.0
        %1128 = vmatpush2.msra.mxu0 0.0
        %1129 = vmatprep.subr.mxu0 0.0
        %1130 = vmatpush2.msra.mxu0 0.0
        %1131 = vmatprep.subr.mxu0 0.0
        %1132 = vmatpush2.msra.mxu0 0.0
        %1133 = vmatprep.subr.mxu0 0.0
        %1134 = vmatpush2.msra.mxu0 0.0
        %1135 = vmatprep.subr.mxu0 0.0
        %1136 = vmatpush2.msra.mxu0 0.0
        %1137 = vmatprep.subr.mxu0 0.0
        %1138 = vmatpush2.msra.mxu0 0.0
        %1139 = vmatprep.subr.mxu0 0.0
        %1140 = vmatpush2.msra.mxu0 0.0
        %1141 = vmatprep.subr.mxu0 0.0
        %1142 = vmatpush2.msra.mxu0 0.0
        %1143 = vmatprep.mubr.f32.mxu0 0.0
        %1144 = vmatmul.mubr.f32.gmra.mxu0 %v1073
        %v1145 = vpop.f32.mrf.mxu0
        %v1146 = vadd.f32 0.0, %v1145
        %v1147 = vpop.f32.mrf.mxu0
        %1148 = vdwg.mxu0
        %s1149 = scalar_lea.vmem %s6, 8
        %v1150 = vld [vmem:[%s1149] sm:$0x7f]
        %v1152 = vsel %vm1071, %v1150, 0
        %1154 = vmatprep.subr.mxu0 0.0
        %1155 = vmatpush1.msra.mxu0 0.0
        %1156 = vmatprep.subr.mxu0 0.0
        %1157 = vmatpush1.msra.mxu0 0.0
        %1158 = vmatprep.subr.mxu0 0.0
        %1159 = vmatpush1.msra.mxu0 0.0
        %1160 = vmatprep.subr.mxu0 0.0
        %1161 = vmatpush1.msra.mxu0 0.0
        %1162 = vmatprep.subr.mxu0 0.0
        %1163 = vmatpush1.msra.mxu0 0.0
        %1164 = vmatprep.subr.mxu0 0.0
        %1165 = vmatpush1.msra.mxu0 0.0
        %1166 = vmatprep.subr.mxu0 0.0
        %1167 = vmatpush1.msra.mxu0 0.0
        %1168 = vmatprep.subr.mxu0 0.0
        %1169 = vmatpush1.msra.mxu0 0.0
        %1170 = vmatprep.subr.mxu0 0.0
        %1171 = vmatpush1.msra.mxu0 0.0
        %1172 = vmatprep.subr.mxu0 0.0
        %1173 = vmatpush1.msra.mxu0 0.0
        %1174 = vmatprep.subr.mxu0 0.0
        %1175 = vmatpush1.msra.mxu0 0.0
        %1176 = vmatprep.subr.mxu0 0.0
        %1177 = vmatpush1.msra.mxu0 0.0
        %1178 = vmatprep.subr.mxu0 0.0
        %1179 = vmatpush1.msra.mxu0 0.0
        %1180 = vmatprep.subr.mxu0 0.0
        %1181 = vmatpush1.msra.mxu0 0.0
        %1182 = vmatprep.subr.mxu0 0.0
        %1183 = vmatpush1.msra.mxu0 %v1077
        %1184 = vmatprep.subr.mxu0 0.0
        %1185 = vmatpush1.msra.mxu0 %v1068
        %1186 = vmatprep.subr.mxu0 0.0
        %1187 = vmatpush2.msra.mxu0 0.0
        %1188 = vmatprep.subr.mxu0 0.0
        %1189 = vmatpush2.msra.mxu0 0.0
        %1190 = vmatprep.subr.mxu0 0.0
        %1191 = vmatpush2.msra.mxu0 0.0
        %1192 = vmatprep.subr.mxu0 0.0
        %1193 = vmatpush2.msra.mxu0 0.0
        %1194 = vmatprep.subr.mxu0 0.0
        %1195 = vmatpush2.msra.mxu0 0.0
        %1196 = vmatprep.subr.mxu0 0.0
        %1197 = vmatpush2.msra.mxu0 0.0
        %1198 = vmatprep.subr.mxu0 0.0
        %1199 = vmatpush2.msra.mxu0 0.0
        %1200 = vmatprep.subr.mxu0 0.0
        %1201 = vmatpush2.msra.mxu0 0.0
        %1202 = vmatprep.subr.mxu0 0.0
        %1203 = vmatpush2.msra.mxu0 0.0
        %1204 = vmatprep.subr.mxu0 0.0
        %1205 = vmatpush2.msra.mxu0 0.0
        %1206 = vmatprep.subr.mxu0 0.0
        %1207 = vmatpush2.msra.mxu0 0.0
        %1208 = vmatprep.subr.mxu0 0.0
        %1209 = vmatpush2.msra.mxu0 0.0
        %1210 = vmatprep.subr.mxu0 0.0
        %1211 = vmatpush2.msra.mxu0 0.0
        %1212 = vmatprep.subr.mxu0 0.0
        %1213 = vmatpush2.msra.mxu0 0.0
        %1214 = vmatprep.subr.mxu0 0.0
        %1215 = vmatpush2.msra.mxu0 0.0
        %1216 = vmatprep.subr.mxu0 0.0
        %1217 = vmatpush2.msra.mxu0 0.0
        %1218 = vmatprep.mubr.f32.mxu0 0.0
        %1219 = vmatmul.mubr.f32.gmra.mxu0 %v1152
        %v1220 = vpop.f32.mrf.mxu0
        %v1221 = vadd.f32 0.0, %v1220
        %v1222 = vpop.f32.mrf.mxu0
        %1223 = vdwg.mxu0
        %s1224 = scalar_lea.vmem %s6, 16
        %v1225 = vld [vmem:[%s1224] sm:$0x7f]
        %v1227 = vsel %vm1071, %v1225, 0
        %1229 = vmatprep.subr.mxu0 0.0
        %1230 = vmatpush1.msra.mxu0 0.0
        %1231 = vmatprep.subr.mxu0 0.0
        %1232 = vmatpush1.msra.mxu0 0.0
        %1233 = vmatprep.subr.mxu0 0.0
        %1234 = vmatpush1.msra.mxu0 0.0
        %1235 = vmatprep.subr.mxu0 0.0
        %1236 = vmatpush1.msra.mxu0 0.0
        %1237 = vmatprep.subr.mxu0 0.0
        %1238 = vmatpush1.msra.mxu0 0.0
        %1239 = vmatprep.subr.mxu0 0.0
        %1240 = vmatpush1.msra.mxu0 0.0
        %1241 = vmatprep.subr.mxu0 0.0
        %1242 = vmatpush1.msra.mxu0 0.0
        %1243 = vmatprep.subr.mxu0 0.0
        %1244 = vmatpush1.msra.mxu0 0.0
        %1245 = vmatprep.subr.mxu0 0.0
        %1246 = vmatpush1.msra.mxu0 0.0
        %1247 = vmatprep.subr.mxu0 0.0
        %1248 = vmatpush1.msra.mxu0 0.0
        %1249 = vmatprep.subr.mxu0 0.0
        %1250 = vmatpush1.msra.mxu0 0.0
        %1251 = vmatprep.subr.mxu0 0.0
        %1252 = vmatpush1.msra.mxu0 0.0
        %1253 = vmatprep.subr.mxu0 0.0
        %1254 = vmatpush1.msra.mxu0 0.0
        %1255 = vmatprep.subr.mxu0 0.0
        %1256 = vmatpush1.msra.mxu0 0.0
        %1257 = vmatprep.subr.mxu0 0.0
        %1258 = vmatpush1.msra.mxu0 %v1077
        %1259 = vmatprep.subr.mxu0 0.0
        %1260 = vmatpush1.msra.mxu0 %v1068
        %1261 = vmatprep.subr.mxu0 0.0
        %1262 = vmatpush2.msra.mxu0 0.0
        %1263 = vmatprep.subr.mxu0 0.0
        %1264 = vmatpush2.msra.mxu0 0.0
        %1265 = vmatprep.subr.mxu0 0.0
        %1266 = vmatpush2.msra.mxu0 0.0
        %1267 = vmatprep.subr.mxu0 0.0
        %1268 = vmatpush2.msra.mxu0 0.0
        %1269 = vmatprep.subr.mxu0 0.0
        %1270 = vmatpush2.msra.mxu0 0.0
        %1271 = vmatprep.subr.mxu0 0.0
        %1272 = vmatpush2.msra.mxu0 0.0
        %1273 = vmatprep.subr.mxu0 0.0
        %1274 = vmatpush2.msra.mxu0 0.0
        %1275 = vmatprep.subr.mxu0 0.0
        %1276 = vmatpush2.msra.mxu0 0.0
        %1277 = vmatprep.subr.mxu0 0.0
        %1278 = vmatpush2.msra.mxu0 0.0
        %1279 = vmatprep.subr.mxu0 0.0
        %1280 = vmatpush2.msra.mxu0 0.0
        %1281 = vmatprep.subr.mxu0 0.0
        %1282 = vmatpush2.msra.mxu0 0.0
        %1283 = vmatprep.subr.mxu0 0.0
        %1284 = vmatpush2.msra.mxu0 0.0
        %1285 = vmatprep.subr.mxu0 0.0
        %1286 = vmatpush2.msra.mxu0 0.0
        %1287 = vmatprep.subr.mxu0 0.0
        %1288 = vmatpush2.msra.mxu0 0.0
        %1289 = vmatprep.subr.mxu0 0.0
        %1290 = vmatpush2.msra.mxu0 0.0
        %1291 = vmatprep.subr.mxu0 0.0
        %1292 = vmatpush2.msra.mxu0 0.0
        %1293 = vmatprep.mubr.f32.mxu0 0.0
        %1294 = vmatmul.mubr.f32.gmra.mxu0 %v1227
        %v1295 = vpop.f32.mrf.mxu0
        %v1296 = vadd.f32 0.0, %v1295
        %v1297 = vpop.f32.mrf.mxu0
        %1298 = vdwg.mxu0
        %v1299 = vld [vmem:[%s7] sm:$0xff]
        %v1300 = vld [vmem:[%s7 + $0x8] sm:$0xff]
        %v1301 = vld [vmem:[%s7 + $0x10] sm:$0xff]
        %v1302 = vld [vmem:[%s7 + $0x18] sm:$0xff]
        %v1303 = vld [vmem:[%s7 + $0x20] sm:$0xff]
        %v1304 = vld [vmem:[%s7 + $0x28] sm:$0xff]
        %v1305 = vld [vmem:[%s7 + $0x30] sm:$0xff]
        %v1306 = vld [vmem:[%s7 + $0x38] sm:$0xff]
        %v1307 = vld [vmem:[%s7 + $0x40] sm:$0xff]
        %v1308 = vld [vmem:[%s7 + $0x48] sm:$0xff]
        %v1309 = vld [vmem:[%s7 + $0x50] sm:$0xff]
        %v1310 = vld [vmem:[%s7 + $0x58] sm:$0xff]
        %v1311 = vld [vmem:[%s7 + $0x60] sm:$0xff]
        %v1312 = vld [vmem:[%s7 + $0x68] sm:$0xff]
        %s1313 = scalar_lea.vmem %s7, 112
        %v1314 = vld [vmem:[%s1313] sm:$0xff]
        %v1315 = vld [vmem:[%s1313 + $0x8] sm:$0xff]
        %v1316 = vld [vmem:[%s1313 + $0x10] sm:$0xff]
        %v1317 = vld [vmem:[%s1313 + $0x18] sm:$0xff]
        %v1318 = vld [vmem:[%s1313 + $0x20] sm:$0xff]
        %v1319 = vld [vmem:[%s1313 + $0x28] sm:$0xff]
        %v1320 = vld [vmem:[%s1313 + $0x30] sm:$0xff]
        %v1321 = vld [vmem:[%s1313 + $0x38] sm:$0xff]
        %v1322 = vld [vmem:[%s1313 + $0x40] sm:$0xff]
        %v1323 = vld [vmem:[%s1313 + $0x48] sm:$0xff]
        %v1324 = vld [vmem:[%s1313 + $0x50] sm:$0xff]
        %v1325 = vld [vmem:[%s1313 + $0x58] sm:$0xff]
        %v1326 = vld [vmem:[%s1313 + $0x60] sm:$0xff]
        %v1327 = vld [vmem:[%s1313 + $0x68] sm:$0xff]
        %vm1328 = vcmask 916480
        %v1330 = vsel %vm1328, %v1221, 0
        %1332 = vmatprep.subr.mxu0 0.0
        %1333 = vmatpush1.msra.mxu0 0.0
        %1334 = vmatprep.subr.mxu0 0.0
        %1335 = vmatpush1.msra.mxu0 0.0
        %1336 = vmatprep.subr.mxu0 0.0
        %1337 = vmatpush1.msra.mxu0 %v1327
        %1338 = vmatprep.subr.mxu0 0.0
        %1339 = vmatpush1.msra.mxu0 %v1326
        %1340 = vmatprep.subr.mxu0 0.0
        %1341 = vmatpush1.msra.mxu0 %v1325
        %1342 = vmatprep.subr.mxu0 0.0
        %1343 = vmatpush1.msra.mxu0 %v1324
        %1344 = vmatprep.subr.mxu0 0.0
        %1345 = vmatpush1.msra.mxu0 %v1323
        %1346 = vmatprep.subr.mxu0 0.0
        %1347 = vmatpush1.msra.mxu0 %v1322
        %1348 = vmatprep.subr.mxu0 0.0
        %1349 = vmatpush1.msra.mxu0 %v1321
        %1350 = vmatprep.subr.mxu0 0.0
        %1351 = vmatpush1.msra.mxu0 %v1320
        %1352 = vmatprep.subr.mxu0 0.0
        %1353 = vmatpush1.msra.mxu0 %v1319
        %1354 = vmatprep.subr.mxu0 0.0
        %1355 = vmatpush1.msra.mxu0 %v1318
        %1356 = vmatprep.subr.mxu0 0.0
        %1357 = vmatpush1.msra.mxu0 %v1317
        %1358 = vmatprep.subr.mxu0 0.0
        %1359 = vmatpush1.msra.mxu0 %v1316
        %1360 = vmatprep.subr.mxu0 0.0
        %1361 = vmatpush1.msra.mxu0 %v1315
        %1362 = vmatprep.subr.mxu0 0.0
        %1363 = vmatpush1.msra.mxu0 %v1314
        %1364 = vmatprep.subr.mxu0 0.0
        %1365 = vmatpush2.msra.mxu0 0.0
        %1366 = vmatprep.subr.mxu0 0.0
        %1367 = vmatpush2.msra.mxu0 0.0
        %1368 = vmatprep.subr.mxu0 0.0
        %1369 = vmatpush2.msra.mxu0 0.0
        %1370 = vmatprep.subr.mxu0 0.0
        %1371 = vmatpush2.msra.mxu0 0.0
        %1372 = vmatprep.subr.mxu0 0.0
        %1373 = vmatpush2.msra.mxu0 0.0
        %1374 = vmatprep.subr.mxu0 0.0
        %1375 = vmatpush2.msra.mxu0 0.0
        %1376 = vmatprep.subr.mxu0 0.0
        %1377 = vmatpush2.msra.mxu0 0.0
        %1378 = vmatprep.subr.mxu0 0.0
        %1379 = vmatpush2.msra.mxu0 0.0
        %1380 = vmatprep.subr.mxu0 0.0
        %1381 = vmatpush2.msra.mxu0 0.0
        %1382 = vmatprep.subr.mxu0 0.0
        %1383 = vmatpush2.msra.mxu0 0.0
        %1384 = vmatprep.subr.mxu0 0.0
        %1385 = vmatpush2.msra.mxu0 0.0
        %1386 = vmatprep.subr.mxu0 0.0
        %1387 = vmatpush2.msra.mxu0 0.0
        %1388 = vmatprep.subr.mxu0 0.0
        %1389 = vmatpush2.msra.mxu0 0.0
        %1390 = vmatprep.subr.mxu0 0.0
        %1391 = vmatpush2.msra.mxu0 0.0
        %1392 = vmatprep.subr.mxu0 0.0
        %1393 = vmatpush2.msra.mxu0 0.0
        %1394 = vmatprep.subr.mxu0 0.0
        %1395 = vmatpush2.msra.mxu0 0.0
        %1396 = vmatprep.mubr.f32.mxu0 0.0
        %1397 = vmatmul.mubr.f32.gmra.mxu0 %v1330
        %v1398 = vpop.f32.mrf.mxu0
        %v1399 = vadd.f32 0.0, %v1398
        %v1400 = vpop.f32.mrf.mxu0
        %1401 = vdwg.mxu0
        %v1403 = vsel %vm1328, %v1146, 0
        %1405 = vmatprep.subr.mxu0 0.0
        %1406 = vmatpush1.msra.mxu0 0.0
        %1407 = vmatprep.subr.mxu0 0.0
        %1408 = vmatpush1.msra.mxu0 0.0
        %1409 = vmatprep.subr.mxu0 0.0
        %1410 = vmatpush1.msra.mxu0 %v1312
        %1411 = vmatprep.subr.mxu0 0.0
        %1412 = vmatpush1.msra.mxu0 %v1311
        %1413 = vmatprep.subr.mxu0 0.0
        %1414 = vmatpush1.msra.mxu0 %v1310
        %1415 = vmatprep.subr.mxu0 0.0
        %1416 = vmatpush1.msra.mxu0 %v1309
        %1417 = vmatprep.subr.mxu0 0.0
        %1418 = vmatpush1.msra.mxu0 %v1308
        %1419 = vmatprep.subr.mxu0 0.0
        %1420 = vmatpush1.msra.mxu0 %v1307
        %1421 = vmatprep.subr.mxu0 0.0
        %1422 = vmatpush1.msra.mxu0 %v1306
        %1423 = vmatprep.subr.mxu0 0.0
        %1424 = vmatpush1.msra.mxu0 %v1305
        %1425 = vmatprep.subr.mxu0 0.0
        %1426 = vmatpush1.msra.mxu0 %v1304
        %1427 = vmatprep.subr.mxu0 0.0
        %1428 = vmatpush1.msra.mxu0 %v1303
        %1429 = vmatprep.subr.mxu0 0.0
        %1430 = vmatpush1.msra.mxu0 %v1302
        %1431 = vmatprep.subr.mxu0 0.0
        %1432 = vmatpush1.msra.mxu0 %v1301
        %1433 = vmatprep.subr.mxu0 0.0
        %1434 = vmatpush1.msra.mxu0 %v1300
        %1435 = vmatprep.subr.mxu0 0.0
        %1436 = vmatpush1.msra.mxu0 %v1299
        %1437 = vmatprep.subr.mxu0 0.0
        %1438 = vmatpush2.msra.mxu0 0.0
        %1439 = vmatprep.subr.mxu0 0.0
        %1440 = vmatpush2.msra.mxu0 0.0
        %1441 = vmatprep.subr.mxu0 0.0
        %1442 = vmatpush2.msra.mxu0 0.0
        %1443 = vmatprep.subr.mxu0 0.0
        %1444 = vmatpush2.msra.mxu0 0.0
        %1445 = vmatprep.subr.mxu0 0.0
        %1446 = vmatpush2.msra.mxu0 0.0
        %1447 = vmatprep.subr.mxu0 0.0
        %1448 = vmatpush2.msra.mxu0 0.0
        %1449 = vmatprep.subr.mxu0 0.0
        %1450 = vmatpush2.msra.mxu0 0.0
        %1451 = vmatprep.subr.mxu0 0.0
        %1452 = vmatpush2.msra.mxu0 0.0
        %1453 = vmatprep.subr.mxu0 0.0
        %1454 = vmatpush2.msra.mxu0 0.0
        %1455 = vmatprep.subr.mxu0 0.0
        %1456 = vmatpush2.msra.mxu0 0.0
        %1457 = vmatprep.subr.mxu0 0.0
        %1458 = vmatpush2.msra.mxu0 0.0
        %1459 = vmatprep.subr.mxu0 0.0
        %1460 = vmatpush2.msra.mxu0 0.0
        %1461 = vmatprep.subr.mxu0 0.0
        %1462 = vmatpush2.msra.mxu0 0.0
        %1463 = vmatprep.subr.mxu0 0.0
        %1464 = vmatpush2.msra.mxu0 0.0
        %1465 = vmatprep.subr.mxu0 0.0
        %1466 = vmatpush2.msra.mxu0 0.0
        %1467 = vmatprep.subr.mxu0 0.0
        %1468 = vmatpush2.msra.mxu0 0.0
        %1469 = vmatprep.mubr.f32.mxu0 0.0
        %1470 = vmatmul.mubr.f32.gmra.mxu0 %v1403
        %v1471 = vpop.f32.mrf.mxu0
        %v1472 = vadd.f32 %v1399, %v1471
        %v1473 = vpop.f32.mrf.mxu0
        %1474 = vdwg.mxu0
        %s1475 = scalar_lea.vmem %s7, 224
        %v1476 = vld [vmem:[%s1475] sm:$0xff]
        %v1477 = vld [vmem:[%s1475 + $0x8] sm:$0xff]
        %v1478 = vld [vmem:[%s1475 + $0x10] sm:$0xff]
        %v1479 = vld [vmem:[%s1475 + $0x18] sm:$0xff]
        %v1480 = vld [vmem:[%s1475 + $0x20] sm:$0xff]
        %v1481 = vld [vmem:[%s1475 + $0x28] sm:$0xff]
        %v1482 = vld [vmem:[%s1475 + $0x30] sm:$0xff]
        %v1483 = vld [vmem:[%s1475 + $0x38] sm:$0xff]
        %v1484 = vld [vmem:[%s1475 + $0x40] sm:$0xff]
        %v1485 = vld [vmem:[%s1475 + $0x48] sm:$0xff]
        %v1486 = vld [vmem:[%s1475 + $0x50] sm:$0xff]
        %v1487 = vld [vmem:[%s1475 + $0x58] sm:$0xff]
        %v1488 = vld [vmem:[%s1475 + $0x60] sm:$0xff]
        %v1489 = vld [vmem:[%s1475 + $0x68] sm:$0xff]
        %v1491 = vsel %vm1328, %v1296, 0
        %1493 = vmatprep.subr.mxu0 0.0
        %1494 = vmatpush1.msra.mxu0 0.0
        %1495 = vmatprep.subr.mxu0 0.0
        %1496 = vmatpush1.msra.mxu0 0.0
        %1497 = vmatprep.subr.mxu0 0.0
        %1498 = vmatpush1.msra.mxu0 %v1489
        %1499 = vmatprep.subr.mxu0 0.0
        %1500 = vmatpush1.msra.mxu0 %v1488
        %1501 = vmatprep.subr.mxu0 0.0
        %1502 = vmatpush1.msra.mxu0 %v1487
        %1503 = vmatprep.subr.mxu0 0.0
        %1504 = vmatpush1.msra.mxu0 %v1486
        %1505 = vmatprep.subr.mxu0 0.0
        %1506 = vmatpush1.msra.mxu0 %v1485
        %1507 = vmatprep.subr.mxu0 0.0
        %1508 = vmatpush1.msra.mxu0 %v1484
        %1509 = vmatprep.subr.mxu0 0.0
        %1510 = vmatpush1.msra.mxu0 %v1483
        %1511 = vmatprep.subr.mxu0 0.0
        %1512 = vmatpush1.msra.mxu0 %v1482
        %1513 = vmatprep.subr.mxu0 0.0
        %1514 = vmatpush1.msra.mxu0 %v1481
        %1515 = vmatprep.subr.mxu0 0.0
        %1516 = vmatpush1.msra.mxu0 %v1480
        %1517 = vmatprep.subr.mxu0 0.0
        %1518 = vmatpush1.msra.mxu0 %v1479
        %1519 = vmatprep.subr.mxu0 0.0
        %1520 = vmatpush1.msra.mxu0 %v1478
        %1521 = vmatprep.subr.mxu0 0.0
        %1522 = vmatpush1.msra.mxu0 %v1477
        %1523 = vmatprep.subr.mxu0 0.0
        %1524 = vmatpush1.msra.mxu0 %v1476
        %1525 = vmatprep.subr.mxu0 0.0
        %1526 = vmatpush2.msra.mxu0 0.0
        %1527 = vmatprep.subr.mxu0 0.0
        %1528 = vmatpush2.msra.mxu0 0.0
        %1529 = vmatprep.subr.mxu0 0.0
        %1530 = vmatpush2.msra.mxu0 0.0
        %1531 = vmatprep.subr.mxu0 0.0
        %1532 = vmatpush2.msra.mxu0 0.0
        %1533 = vmatprep.subr.mxu0 0.0
        %1534 = vmatpush2.msra.mxu0 0.0
        %1535 = vmatprep.subr.mxu0 0.0
        %1536 = vmatpush2.msra.mxu0 0.0
        %1537 = vmatprep.subr.mxu0 0.0
        %1538 = vmatpush2.msra.mxu0 0.0
        %1539 = vmatprep.subr.mxu0 0.0
        %1540 = vmatpush2.msra.mxu0 0.0
        %1541 = vmatprep.subr.mxu0 0.0
        %1542 = vmatpush2.msra.mxu0 0.0
        %1543 = vmatprep.subr.mxu0 0.0
        %1544 = vmatpush2.msra.mxu0 0.0
        %1545 = vmatprep.subr.mxu0 0.0
        %1546 = vmatpush2.msra.mxu0 0.0
        %1547 = vmatprep.subr.mxu0 0.0
        %1548 = vmatpush2.msra.mxu0 0.0
        %1549 = vmatprep.subr.mxu0 0.0
        %1550 = vmatpush2.msra.mxu0 0.0
        %1551 = vmatprep.subr.mxu0 0.0
        %1552 = vmatpush2.msra.mxu0 0.0
        %1553 = vmatprep.subr.mxu0 0.0
        %1554 = vmatpush2.msra.mxu0 0.0
        %1555 = vmatprep.subr.mxu0 0.0
        %1556 = vmatpush2.msra.mxu0 0.0
        %1557 = vmatprep.mubr.f32.mxu0 0.0
        %1558 = vmatmul.mubr.f32.gmra.mxu0 %v1491
        %v1559 = vpop.f32.mrf.mxu0
        %v1560 = vadd.f32 0.0, %v1559
        %v1561 = vpop.f32.mrf.mxu0
        %1562 = vdwg.mxu0
        %v1563 = vadd.f32 %v1472, %v1560
        %v1564 = vld [vmem:[%s8] sm:$0xff]
        %v1565 = vld [vmem:[%s8 + $0x8] sm:$0xff]
        %v1566 = vld [vmem:[%s8 + $0x10] sm:$0xff]
        %v1567 = vld [vmem:[%s8 + $0x18] sm:$0xff]
        %v1568 = vld [vmem:[%s8 + $0x20] sm:$0xff]
        %v1569 = vld [vmem:[%s8 + $0x28] sm:$0xff]
        %v1570 = vld [vmem:[%s8 + $0x30] sm:$0xff]
        %v1571 = vld [vmem:[%s8 + $0x38] sm:$0xff]
        %v1572 = vld [vmem:[%s8 + $0x40] sm:$0xff]
        %v1573 = vld [vmem:[%s8 + $0x48] sm:$0xff]
        %v1574 = vld [vmem:[%s8 + $0x50] sm:$0xff]
        %v1575 = vld [vmem:[%s8 + $0x58] sm:$0xff]
        %v1576 = vld [vmem:[%s8 + $0x60] sm:$0xff]
        %v1577 = vld [vmem:[%s8 + $0x68] sm:$0xff]
        %1578 = vmatprep.subr.mxu0 0.0
        %1579 = vmatpush1.msra.mxu0 0.0
        %1580 = vmatprep.subr.mxu0 0.0
        %1581 = vmatpush1.msra.mxu0 0.0
        %1582 = vmatprep.subr.mxu0 0.0
        %1583 = vmatpush1.msra.mxu0 %v1577
        %1584 = vmatprep.subr.mxu0 0.0
        %1585 = vmatpush1.msra.mxu0 %v1576
        %1586 = vmatprep.subr.mxu0 0.0
        %1587 = vmatpush1.msra.mxu0 %v1575
        %1588 = vmatprep.subr.mxu0 0.0
        %1589 = vmatpush1.msra.mxu0 %v1574
        %1590 = vmatprep.subr.mxu0 0.0
        %1591 = vmatpush1.msra.mxu0 %v1573
        %1592 = vmatprep.subr.mxu0 0.0
        %1593 = vmatpush1.msra.mxu0 %v1572
        %1594 = vmatprep.subr.mxu0 0.0
        %1595 = vmatpush1.msra.mxu0 %v1571
        %1596 = vmatprep.subr.mxu0 0.0
        %1597 = vmatpush1.msra.mxu0 %v1570
        %1598 = vmatprep.subr.mxu0 0.0
        %1599 = vmatpush1.msra.mxu0 %v1569
        %1600 = vmatprep.subr.mxu0 0.0
        %1601 = vmatpush1.msra.mxu0 %v1568
        %1602 = vmatprep.subr.mxu0 0.0
        %1603 = vmatpush1.msra.mxu0 %v1567
        %1604 = vmatprep.subr.mxu0 0.0
        %1605 = vmatpush1.msra.mxu0 %v1566
        %1606 = vmatprep.subr.mxu0 0.0
        %1607 = vmatpush1.msra.mxu0 %v1565
        %1608 = vmatprep.subr.mxu0 0.0
        %1609 = vmatpush1.msra.mxu0 %v1564
        %1610 = vmatprep.subr.mxu0 0.0
        %1611 = vmatpush2.msra.mxu0 0.0
        %1612 = vmatprep.subr.mxu0 0.0
        %1613 = vmatpush2.msra.mxu0 0.0
        %1614 = vmatprep.subr.mxu0 0.0
        %1615 = vmatpush2.msra.mxu0 0.0
        %1616 = vmatprep.subr.mxu0 0.0
        %1617 = vmatpush2.msra.mxu0 0.0
        %1618 = vmatprep.subr.mxu0 0.0
        %1619 = vmatpush2.msra.mxu0 0.0
        %1620 = vmatprep.subr.mxu0 0.0
        %1621 = vmatpush2.msra.mxu0 0.0
        %1622 = vmatprep.subr.mxu0 0.0
        %1623 = vmatpush2.msra.mxu0 0.0
        %1624 = vmatprep.subr.mxu0 0.0
        %1625 = vmatpush2.msra.mxu0 0.0
        %1626 = vmatprep.subr.mxu0 0.0
        %1627 = vmatpush2.msra.mxu0 0.0
        %1628 = vmatprep.subr.mxu0 0.0
        %1629 = vmatpush2.msra.mxu0 0.0
        %1630 = vmatprep.subr.mxu0 0.0
        %1631 = vmatpush2.msra.mxu0 0.0
        %1632 = vmatprep.subr.mxu0 0.0
        %1633 = vmatpush2.msra.mxu0 0.0
        %1634 = vmatprep.subr.mxu0 0.0
        %1635 = vmatpush2.msra.mxu0 0.0
        %1636 = vmatprep.subr.mxu0 0.0
        %1637 = vmatpush2.msra.mxu0 0.0
        %1638 = vmatprep.subr.mxu0 0.0
        %1639 = vmatpush2.msra.mxu0 0.0
        %1640 = vmatprep.subr.mxu0 0.0
        %1641 = vmatpush2.msra.mxu0 0.0
        %1642 = vmatprep.mubr.f32.mxu0 0.0
        %1643 = vmatmul.mubr.f32.gmra.mxu0 %v1330
        %v1644 = vpop.f32.mrf.mxu0
        %v1645 = vadd.f32 0.0, %v1644
        %v1646 = vpop.f32.mrf.mxu0
        %1647 = vdwg.mxu0
        %v1648 = vld [vmem:[%s9] sm:$0x1]
        %v1650 = vlaneseq
        %v1651 = vshrl.u32 %v1650, 7
        %v1652 = vsub.s32 0, %v1651
        %v1653 = vrot.slane %v1648, %v1652
        %v1655 = vadd.f32 %v1563, %v1653
        %v1656 = vmax.f32 %v1655, 0.0
        %v1657 = vld [vmem:[%s10] sm:$0x7f]
        %vm1658 = vcmask 56320
        %v1660 = vsel %vm1658, %v1657, 0
        %vm1662 = vcmask 1046528
        %v1664 = vsel %vm1662, %v1656, 0
        %1666 = vmatprep.subr.mxu0 0.0
        %1667 = vmatpush1.msra.mxu0 0.0
        %1668 = vmatprep.subr.mxu0 0.0
        %1669 = vmatpush1.msra.mxu0 0.0
        %1670 = vmatprep.subr.mxu0 0.0
        %1671 = vmatpush1.msra.mxu0 0.0
        %1672 = vmatprep.subr.mxu0 0.0
        %1673 = vmatpush1.msra.mxu0 0.0
        %1674 = vmatprep.subr.mxu0 0.0
        %1675 = vmatpush1.msra.mxu0 0.0
        %1676 = vmatprep.subr.mxu0 0.0
        %1677 = vmatpush1.msra.mxu0 0.0
        %1678 = vmatprep.subr.mxu0 0.0
        %1679 = vmatpush1.msra.mxu0 0.0
        %1680 = vmatprep.subr.mxu0 0.0
        %1681 = vmatpush1.msra.mxu0 0.0
        %1682 = vmatprep.subr.mxu0 0.0
        %1683 = vmatpush1.msra.mxu0 0.0
        %1684 = vmatprep.subr.mxu0 0.0
        %1685 = vmatpush1.msra.mxu0 0.0
        %1686 = vmatprep.subr.mxu0 0.0
        %1687 = vmatpush1.msra.mxu0 0.0
        %1688 = vmatprep.subr.mxu0 0.0
        %1689 = vmatpush1.msra.mxu0 0.0
        %1690 = vmatprep.subr.mxu0 0.0
        %1691 = vmatpush1.msra.mxu0 0.0
        %1692 = vmatprep.subr.mxu0 0.0
        %1693 = vmatpush1.msra.mxu0 0.0
        %1694 = vmatprep.subr.mxu0 0.0
        %1695 = vmatpush1.msra.mxu0 0.0
        %1696 = vmatprep.subr.mxu0 0.0
        %1697 = vmatpush1.msra.mxu0 %v1664
        %1698 = vmatprep.subr.mxu0 0.0
        %1699 = vmatpush2.msra.mxu0 0.0
        %1700 = vmatprep.subr.mxu0 0.0
        %1701 = vmatpush2.msra.mxu0 0.0
        %1702 = vmatprep.subr.mxu0 0.0
        %1703 = vmatpush2.msra.mxu0 0.0
        %1704 = vmatprep.subr.mxu0 0.0
        %1705 = vmatpush2.msra.mxu0 0.0
        %1706 = vmatprep.subr.mxu0 0.0
        %1707 = vmatpush2.msra.mxu0 0.0
        %1708 = vmatprep.subr.mxu0 0.0
        %1709 = vmatpush2.msra.mxu0 0.0
        %1710 = vmatprep.subr.mxu0 0.0
        %1711 = vmatpush2.msra.mxu0 0.0
        %1712 = vmatprep.subr.mxu0 0.0
        %1713 = vmatpush2.msra.mxu0 0.0
        %1714 = vmatprep.subr.mxu0 0.0
        %1715 = vmatpush2.msra.mxu0 0.0
        %1716 = vmatprep.subr.mxu0 0.0
        %1717 = vmatpush2.msra.mxu0 0.0
        %1718 = vmatprep.subr.mxu0 0.0
        %1719 = vmatpush2.msra.mxu0 0.0
        %1720 = vmatprep.subr.mxu0 0.0
        %1721 = vmatpush2.msra.mxu0 0.0
        %1722 = vmatprep.subr.mxu0 0.0
        %1723 = vmatpush2.msra.mxu0 0.0
        %1724 = vmatprep.subr.mxu0 0.0
        %1725 = vmatpush2.msra.mxu0 0.0
        %1726 = vmatprep.subr.mxu0 0.0
        %1727 = vmatpush2.msra.mxu0 0.0
        %1728 = vmatprep.subr.mxu0 0.0
        %1729 = vmatpush2.msra.mxu0 0.0
        %1730 = vmatprep.mubr.f32.mxu0 0.0
        %1731 = vmatmul.mubr.f32.gmra.mxu0 %v1660
        %v1732 = vpop.f32.mrf.mxu0
        %v1733 = vadd.f32 0.0, %v1732
        %v1734 = vpop.f32.mrf.mxu0
        %1735 = vdwg.mxu0
        %s1736 = scalar_lea.vmem %s10, 16
        %v1737 = vld [vmem:[%s1736] sm:$0x7f]
        %v1739 = vsel %vm1658, %v1737, 0
        %1741 = vmatprep.subr.mxu0 0.0
        %1742 = vmatpush1.msra.mxu0 0.0
        %1743 = vmatprep.subr.mxu0 0.0
        %1744 = vmatpush1.msra.mxu0 0.0
        %1745 = vmatprep.subr.mxu0 0.0
        %1746 = vmatpush1.msra.mxu0 0.0
        %1747 = vmatprep.subr.mxu0 0.0
        %1748 = vmatpush1.msra.mxu0 0.0
        %1749 = vmatprep.subr.mxu0 0.0
        %1750 = vmatpush1.msra.mxu0 0.0
        %1751 = vmatprep.subr.mxu0 0.0
        %1752 = vmatpush1.msra.mxu0 0.0
        %1753 = vmatprep.subr.mxu0 0.0
        %1754 = vmatpush1.msra.mxu0 0.0
        %1755 = vmatprep.subr.mxu0 0.0
        %1756 = vmatpush1.msra.mxu0 0.0
        %1757 = vmatprep.subr.mxu0 0.0
        %1758 = vmatpush1.msra.mxu0 0.0
        %1759 = vmatprep.subr.mxu0 0.0
        %1760 = vmatpush1.msra.mxu0 0.0
        %1761 = vmatprep.subr.mxu0 0.0
        %1762 = vmatpush1.msra.mxu0 0.0
        %1763 = vmatprep.subr.mxu0 0.0
        %1764 = vmatpush1.msra.mxu0 0.0
        %1765 = vmatprep.subr.mxu0 0.0
        %1766 = vmatpush1.msra.mxu0 0.0
        %1767 = vmatprep.subr.mxu0 0.0
        %1768 = vmatpush1.msra.mxu0 0.0
        %1769 = vmatprep.subr.mxu0 0.0
        %1770 = vmatpush1.msra.mxu0 0.0
        %1771 = vmatprep.subr.mxu0 0.0
        %1772 = vmatpush1.msra.mxu0 %v1664
        %1773 = vmatprep.subr.mxu0 0.0
        %1774 = vmatpush2.msra.mxu0 0.0
        %1775 = vmatprep.subr.mxu0 0.0
        %1776 = vmatpush2.msra.mxu0 0.0
        %1777 = vmatprep.subr.mxu0 0.0
        %1778 = vmatpush2.msra.mxu0 0.0
        %1779 = vmatprep.subr.mxu0 0.0
        %1780 = vmatpush2.msra.mxu0 0.0
        %1781 = vmatprep.subr.mxu0 0.0
        %1782 = vmatpush2.msra.mxu0 0.0
        %1783 = vmatprep.subr.mxu0 0.0
        %1784 = vmatpush2.msra.mxu0 0.0
        %1785 = vmatprep.subr.mxu0 0.0
        %1786 = vmatpush2.msra.mxu0 0.0
        %1787 = vmatprep.subr.mxu0 0.0
        %1788 = vmatpush2.msra.mxu0 0.0
        %1789 = vmatprep.subr.mxu0 0.0
        %1790 = vmatpush2.msra.mxu0 0.0
        %1791 = vmatprep.subr.mxu0 0.0
        %1792 = vmatpush2.msra.mxu0 0.0
        %1793 = vmatprep.subr.mxu0 0.0
        %1794 = vmatpush2.msra.mxu0 0.0
        %1795 = vmatprep.subr.mxu0 0.0
        %1796 = vmatpush2.msra.mxu0 0.0
        %1797 = vmatprep.subr.mxu0 0.0
        %1798 = vmatpush2.msra.mxu0 0.0
        %1799 = vmatprep.subr.mxu0 0.0
        %1800 = vmatpush2.msra.mxu0 0.0
        %1801 = vmatprep.subr.mxu0 0.0
        %1802 = vmatpush2.msra.mxu0 0.0
        %1803 = vmatprep.subr.mxu0 0.0
        %1804 = vmatpush2.msra.mxu0 0.0
        %1805 = vmatprep.mubr.f32.mxu0 0.0
        %1806 = vmatmul.mubr.f32.gmra.mxu0 %v1739
        %v1807 = vpop.f32.mrf.mxu0
        %v1808 = vadd.f32 0.0, %v1807
        %v1809 = vpop.f32.mrf.mxu0
        %1810 = vdwg.mxu0
        %v1811 = vld [vmem:[%s11] sm:$0xff]
        %v1812 = vld [vmem:[%s11 + $0x8] sm:$0xff]
        %v1813 = vld [vmem:[%s11 + $0x10] sm:$0xff]
        %v1814 = vld [vmem:[%s11 + $0x18] sm:$0xff]
        %v1815 = vld [vmem:[%s11 + $0x20] sm:$0xff]
        %v1816 = vld [vmem:[%s11 + $0x28] sm:$0xff]
        %v1817 = vld [vmem:[%s11 + $0x30] sm:$0xff]
        %v1818 = vld [vmem:[%s11 + $0x38] sm:$0xff]
        %v1819 = vld [vmem:[%s11 + $0x40] sm:$0xff]
        %v1820 = vld [vmem:[%s11 + $0x48] sm:$0xff]
        %v1821 = vld [vmem:[%s11 + $0x50] sm:$0xff]
        %v1822 = vld [vmem:[%s11 + $0x58] sm:$0xff]
        %v1823 = vld [vmem:[%s11 + $0x60] sm:$0xff]
        %v1824 = vld [vmem:[%s11 + $0x68] sm:$0xff]
        %s1825 = scalar_lea.vmem %s11, 112
        %v1826 = vld [vmem:[%s1825] sm:$0xff]
        %v1827 = vld [vmem:[%s1825 + $0x8] sm:$0xff]
        %v1828 = vld [vmem:[%s1825 + $0x10] sm:$0xff]
        %v1829 = vld [vmem:[%s1825 + $0x18] sm:$0xff]
        %v1830 = vld [vmem:[%s1825 + $0x20] sm:$0xff]
        %v1831 = vld [vmem:[%s1825 + $0x28] sm:$0xff]
        %v1832 = vld [vmem:[%s1825 + $0x30] sm:$0xff]
        %v1833 = vld [vmem:[%s1825 + $0x38] sm:$0xff]
        %v1834 = vld [vmem:[%s1825 + $0x40] sm:$0xff]
        %v1835 = vld [vmem:[%s1825 + $0x48] sm:$0xff]
        %v1836 = vld [vmem:[%s1825 + $0x50] sm:$0xff]
        %v1837 = vld [vmem:[%s1825 + $0x58] sm:$0xff]
        %v1838 = vld [vmem:[%s1825 + $0x60] sm:$0xff]
        %v1839 = vld [vmem:[%s1825 + $0x68] sm:$0xff]
        %v1840 = vsel %vm1328, %v1656, 0
        %1842 = vmatprep.subr.mxu0 0.0
        %1843 = vmatpush1.msra.mxu0 0.0
        %1844 = vmatprep.subr.mxu0 0.0
        %1845 = vmatpush1.msra.mxu0 0.0
        %1846 = vmatprep.subr.mxu0 0.0
        %1847 = vmatpush1.msra.mxu0 %v1839
        %1848 = vmatprep.subr.mxu0 0.0
        %1849 = vmatpush1.msra.mxu0 %v1838
        %1850 = vmatprep.subr.mxu0 0.0
        %1851 = vmatpush1.msra.mxu0 %v1837
        %1852 = vmatprep.subr.mxu0 0.0
        %1853 = vmatpush1.msra.mxu0 %v1836
        %1854 = vmatprep.subr.mxu0 0.0
        %1855 = vmatpush1.msra.mxu0 %v1835
        %1856 = vmatprep.subr.mxu0 0.0
        %1857 = vmatpush1.msra.mxu0 %v1834
        %1858 = vmatprep.subr.mxu0 0.0
        %1859 = vmatpush1.msra.mxu0 %v1833
        %1860 = vmatprep.subr.mxu0 0.0
        %1861 = vmatpush1.msra.mxu0 %v1832
        %1862 = vmatprep.subr.mxu0 0.0
        %1863 = vmatpush1.msra.mxu0 %v1831
        %1864 = vmatprep.subr.mxu0 0.0
        %1865 = vmatpush1.msra.mxu0 %v1830
        %1866 = vmatprep.subr.mxu0 0.0
        %1867 = vmatpush1.msra.mxu0 %v1829
        %1868 = vmatprep.subr.mxu0 0.0
        %1869 = vmatpush1.msra.mxu0 %v1828
        %1870 = vmatprep.subr.mxu0 0.0
        %1871 = vmatpush1.msra.mxu0 %v1827
        %1872 = vmatprep.subr.mxu0 0.0
        %1873 = vmatpush1.msra.mxu0 %v1826
        %1874 = vmatprep.subr.mxu0 0.0
        %1875 = vmatpush2.msra.mxu0 0.0
        %1876 = vmatprep.subr.mxu0 0.0
        %1877 = vmatpush2.msra.mxu0 0.0
        %1878 = vmatprep.subr.mxu0 0.0
        %1879 = vmatpush2.msra.mxu0 0.0
        %1880 = vmatprep.subr.mxu0 0.0
        %1881 = vmatpush2.msra.mxu0 0.0
        %1882 = vmatprep.subr.mxu0 0.0
        %1883 = vmatpush2.msra.mxu0 0.0
        %1884 = vmatprep.subr.mxu0 0.0
        %1885 = vmatpush2.msra.mxu0 0.0
        %1886 = vmatprep.subr.mxu0 0.0
        %1887 = vmatpush2.msra.mxu0 0.0
        %1888 = vmatprep.subr.mxu0 0.0
        %1889 = vmatpush2.msra.mxu0 0.0
        %1890 = vmatprep.subr.mxu0 0.0
        %1891 = vmatpush2.msra.mxu0 0.0
        %1892 = vmatprep.subr.mxu0 0.0
        %1893 = vmatpush2.msra.mxu0 0.0
        %1894 = vmatprep.subr.mxu0 0.0
        %1895 = vmatpush2.msra.mxu0 0.0
        %1896 = vmatprep.subr.mxu0 0.0
        %1897 = vmatpush2.msra.mxu0 0.0
        %1898 = vmatprep.subr.mxu0 0.0
        %1899 = vmatpush2.msra.mxu0 0.0
        %1900 = vmatprep.subr.mxu0 0.0
        %1901 = vmatpush2.msra.mxu0 0.0
        %1902 = vmatprep.subr.mxu0 0.0
        %1903 = vmatpush2.msra.mxu0 0.0
        %1904 = vmatprep.subr.mxu0 0.0
        %1905 = vmatpush2.msra.mxu0 0.0
        %1906 = vmatprep.mubr.f32.mxu0 0.0
        %1907 = vmatmul.mubr.f32.gmra.mxu0 %v1840
        %v1908 = vpop.f32.mrf.mxu0
        %v1909 = vadd.f32 0.0, %v1908
        %v1910 = vpop.f32.mrf.mxu0
        %1911 = vdwg.mxu0
        %v1913 = vsel %vm1328, %v1733, 0
        %1915 = vmatprep.subr.mxu0 0.0
        %1916 = vmatpush1.msra.mxu0 0.0
        %1917 = vmatprep.subr.mxu0 0.0
        %1918 = vmatpush1.msra.mxu0 0.0
        %1919 = vmatprep.subr.mxu0 0.0
        %1920 = vmatpush1.msra.mxu0 %v1824
        %1921 = vmatprep.subr.mxu0 0.0
        %1922 = vmatpush1.msra.mxu0 %v1823
        %1923 = vmatprep.subr.mxu0 0.0
        %1924 = vmatpush1.msra.mxu0 %v1822
        %1925 = vmatprep.subr.mxu0 0.0
        %1926 = vmatpush1.msra.mxu0 %v1821
        %1927 = vmatprep.subr.mxu0 0.0
        %1928 = vmatpush1.msra.mxu0 %v1820
        %1929 = vmatprep.subr.mxu0 0.0
        %1930 = vmatpush1.msra.mxu0 %v1819
        %1931 = vmatprep.subr.mxu0 0.0
        %1932 = vmatpush1.msra.mxu0 %v1818
        %1933 = vmatprep.subr.mxu0 0.0
        %1934 = vmatpush1.msra.mxu0 %v1817
        %1935 = vmatprep.subr.mxu0 0.0
        %1936 = vmatpush1.msra.mxu0 %v1816
        %1937 = vmatprep.subr.mxu0 0.0
        %1938 = vmatpush1.msra.mxu0 %v1815
        %1939 = vmatprep.subr.mxu0 0.0
        %1940 = vmatpush1.msra.mxu0 %v1814
        %1941 = vmatprep.subr.mxu0 0.0
        %1942 = vmatpush1.msra.mxu0 %v1813
        %1943 = vmatprep.subr.mxu0 0.0
        %1944 = vmatpush1.msra.mxu0 %v1812
        %1945 = vmatprep.subr.mxu0 0.0
        %1946 = vmatpush1.msra.mxu0 %v1811
        %1947 = vmatprep.subr.mxu0 0.0
        %1948 = vmatpush2.msra.mxu0 0.0
        %1949 = vmatprep.subr.mxu0 0.0
        %1950 = vmatpush2.msra.mxu0 0.0
        %1951 = vmatprep.subr.mxu0 0.0
        %1952 = vmatpush2.msra.mxu0 0.0
        %1953 = vmatprep.subr.mxu0 0.0
        %1954 = vmatpush2.msra.mxu0 0.0
        %1955 = vmatprep.subr.mxu0 0.0
        %1956 = vmatpush2.msra.mxu0 0.0
        %1957 = vmatprep.subr.mxu0 0.0
        %1958 = vmatpush2.msra.mxu0 0.0
        %1959 = vmatprep.subr.mxu0 0.0
        %1960 = vmatpush2.msra.mxu0 0.0
        %1961 = vmatprep.subr.mxu0 0.0
        %1962 = vmatpush2.msra.mxu0 0.0
        %1963 = vmatprep.subr.mxu0 0.0
        %1964 = vmatpush2.msra.mxu0 0.0
        %1965 = vmatprep.subr.mxu0 0.0
        %1966 = vmatpush2.msra.mxu0 0.0
        %1967 = vmatprep.subr.mxu0 0.0
        %1968 = vmatpush2.msra.mxu0 0.0
        %1969 = vmatprep.subr.mxu0 0.0
        %1970 = vmatpush2.msra.mxu0 0.0
        %1971 = vmatprep.subr.mxu0 0.0
        %1972 = vmatpush2.msra.mxu0 0.0
        %1973 = vmatprep.subr.mxu0 0.0
        %1974 = vmatpush2.msra.mxu0 0.0
        %1975 = vmatprep.subr.mxu0 0.0
        %1976 = vmatpush2.msra.mxu0 0.0
        %1977 = vmatprep.subr.mxu0 0.0
        %1978 = vmatpush2.msra.mxu0 0.0
        %1979 = vmatprep.mubr.f32.mxu0 0.0
        %1980 = vmatmul.mubr.f32.gmra.mxu0 %v1913
        %v1981 = vpop.f32.mrf.mxu0
        %v1982 = vadd.f32 %v1909, %v1981
        %v1983 = vpop.f32.mrf.mxu0
        %1984 = vdwg.mxu0
        %s1985 = scalar_lea.vmem %s11, 224
        %v1986 = vld [vmem:[%s1985] sm:$0xff]
        %v1987 = vld [vmem:[%s1985 + $0x8] sm:$0xff]
        %v1988 = vld [vmem:[%s1985 + $0x10] sm:$0xff]
        %v1989 = vld [vmem:[%s1985 + $0x18] sm:$0xff]
        %v1990 = vld [vmem:[%s1985 + $0x20] sm:$0xff]
        %v1991 = vld [vmem:[%s1985 + $0x28] sm:$0xff]
        %v1992 = vld [vmem:[%s1985 + $0x30] sm:$0xff]
        %v1993 = vld [vmem:[%s1985 + $0x38] sm:$0xff]
        %v1994 = vld [vmem:[%s1985 + $0x40] sm:$0xff]
        %v1995 = vld [vmem:[%s1985 + $0x48] sm:$0xff]
        %v1996 = vld [vmem:[%s1985 + $0x50] sm:$0xff]
        %v1997 = vld [vmem:[%s1985 + $0x58] sm:$0xff]
        %v1998 = vld [vmem:[%s1985 + $0x60] sm:$0xff]
        %v1999 = vld [vmem:[%s1985 + $0x68] sm:$0xff]
        %v2001 = vsel %vm1328, %v1808, 0
        %2003 = vmatprep.subr.mxu0 0.0
        %2004 = vmatpush1.msra.mxu0 0.0
        %2005 = vmatprep.subr.mxu0 0.0
        %2006 = vmatpush1.msra.mxu0 0.0
        %2007 = vmatprep.subr.mxu0 0.0
        %2008 = vmatpush1.msra.mxu0 %v1999
        %2009 = vmatprep.subr.mxu0 0.0
        %2010 = vmatpush1.msra.mxu0 %v1998
        %2011 = vmatprep.subr.mxu0 0.0
        %2012 = vmatpush1.msra.mxu0 %v1997
        %2013 = vmatprep.subr.mxu0 0.0
        %2014 = vmatpush1.msra.mxu0 %v1996
        %2015 = vmatprep.subr.mxu0 0.0
        %2016 = vmatpush1.msra.mxu0 %v1995
        %2017 = vmatprep.subr.mxu0 0.0
        %2018 = vmatpush1.msra.mxu0 %v1994
        %2019 = vmatprep.subr.mxu0 0.0
        %2020 = vmatpush1.msra.mxu0 %v1993
        %2021 = vmatprep.subr.mxu0 0.0
        %2022 = vmatpush1.msra.mxu0 %v1992
        %2023 = vmatprep.subr.mxu0 0.0
        %2024 = vmatpush1.msra.mxu0 %v1991
        %2025 = vmatprep.subr.mxu0 0.0
        %2026 = vmatpush1.msra.mxu0 %v1990
        %2027 = vmatprep.subr.mxu0 0.0
        %2028 = vmatpush1.msra.mxu0 %v1989
        %2029 = vmatprep.subr.mxu0 0.0
        %2030 = vmatpush1.msra.mxu0 %v1988
        %2031 = vmatprep.subr.mxu0 0.0
        %2032 = vmatpush1.msra.mxu0 %v1987
        %2033 = vmatprep.subr.mxu0 0.0
        %2034 = vmatpush1.msra.mxu0 %v1986
        %2035 = vmatprep.subr.mxu0 0.0
        %2036 = vmatpush2.msra.mxu0 0.0
        %2037 = vmatprep.subr.mxu0 0.0
        %2038 = vmatpush2.msra.mxu0 0.0
        %2039 = vmatprep.subr.mxu0 0.0
        %2040 = vmatpush2.msra.mxu0 0.0
        %2041 = vmatprep.subr.mxu0 0.0
        %2042 = vmatpush2.msra.mxu0 0.0
        %2043 = vmatprep.subr.mxu0 0.0
        %2044 = vmatpush2.msra.mxu0 0.0
        %2045 = vmatprep.subr.mxu0 0.0
        %2046 = vmatpush2.msra.mxu0 0.0
        %2047 = vmatprep.subr.mxu0 0.0
        %2048 = vmatpush2.msra.mxu0 0.0
        %2049 = vmatprep.subr.mxu0 0.0
        %2050 = vmatpush2.msra.mxu0 0.0
        %2051 = vmatprep.subr.mxu0 0.0
        %2052 = vmatpush2.msra.mxu0 0.0
        %2053 = vmatprep.subr.mxu0 0.0
        %2054 = vmatpush2.msra.mxu0 0.0
        %2055 = vmatprep.subr.mxu0 0.0
        %2056 = vmatpush2.msra.mxu0 0.0
        %2057 = vmatprep.subr.mxu0 0.0
        %2058 = vmatpush2.msra.mxu0 0.0
        %2059 = vmatprep.subr.mxu0 0.0
        %2060 = vmatpush2.msra.mxu0 0.0
        %2061 = vmatprep.subr.mxu0 0.0
        %2062 = vmatpush2.msra.mxu0 0.0
        %2063 = vmatprep.subr.mxu0 0.0
        %2064 = vmatpush2.msra.mxu0 0.0
        %2065 = vmatprep.subr.mxu0 0.0
        %2066 = vmatpush2.msra.mxu0 0.0
        %2067 = vmatprep.mubr.f32.mxu0 0.0
        %2068 = vmatmul.mubr.f32.gmra.mxu0 %v2001
        %v2069 = vpop.f32.mrf.mxu0
        %v2070 = vadd.f32 0.0, %v2069
        %v2071 = vpop.f32.mrf.mxu0
        %2072 = vdwg.mxu0
        %v2073 = vadd.f32 %v1982, %v2070
        %v2074 = vadd.f32 %v2073, %v1645
        %v2075 = vld [vmem:[%s12] sm:$0xff]
        %v2076 = vld [vmem:[%s12 + $0x8] sm:$0xff]
        %v2077 = vld [vmem:[%s12 + $0x10] sm:$0xff]
        %v2078 = vld [vmem:[%s12 + $0x18] sm:$0xff]
        %v2079 = vld [vmem:[%s12 + $0x20] sm:$0xff]
        %v2080 = vld [vmem:[%s12 + $0x28] sm:$0xff]
        %v2081 = vld [vmem:[%s12 + $0x30] sm:$0xff]
        %v2082 = vld [vmem:[%s12 + $0x38] sm:$0xff]
        %v2083 = vld [vmem:[%s12 + $0x40] sm:$0xff]
        %v2084 = vld [vmem:[%s12 + $0x48] sm:$0xff]
        %v2085 = vld [vmem:[%s12 + $0x50] sm:$0xff]
        %v2086 = vld [vmem:[%s12 + $0x58] sm:$0xff]
        %v2087 = vld [vmem:[%s12 + $0x60] sm:$0xff]
        %v2088 = vld [vmem:[%s12 + $0x68] sm:$0xff]
        %v2090 = vsel %vm1328, %v2074, 0
        %2092 = vmatprep.subr.mxu0 0.0
        %2093 = vmatpush1.msra.mxu0 0.0
        %2094 = vmatprep.subr.mxu0 0.0
        %2095 = vmatpush1.msra.mxu0 0.0
        %2096 = vmatprep.subr.mxu0 0.0
        %2097 = vmatpush1.msra.mxu0 %v2088
        %2098 = vmatprep.subr.mxu0 0.0
        %2099 = vmatpush1.msra.mxu0 %v2087
        %2100 = vmatprep.subr.mxu0 0.0
        %2101 = vmatpush1.msra.mxu0 %v2086
        %2102 = vmatprep.subr.mxu0 0.0
        %2103 = vmatpush1.msra.mxu0 %v2085
        %2104 = vmatprep.subr.mxu0 0.0
        %2105 = vmatpush1.msra.mxu0 %v2084
        %2106 = vmatprep.subr.mxu0 0.0
        %2107 = vmatpush1.msra.mxu0 %v2083
        %2108 = vmatprep.subr.mxu0 0.0
        %2109 = vmatpush1.msra.mxu0 %v2082
        %2110 = vmatprep.subr.mxu0 0.0
        %2111 = vmatpush1.msra.mxu0 %v2081
        %2112 = vmatprep.subr.mxu0 0.0
        %2113 = vmatpush1.msra.mxu0 %v2080
        %2114 = vmatprep.subr.mxu0 0.0
        %2115 = vmatpush1.msra.mxu0 %v2079
        %2116 = vmatprep.subr.mxu0 0.0
        %2117 = vmatpush1.msra.mxu0 %v2078
        %2118 = vmatprep.subr.mxu0 0.0
        %2119 = vmatpush1.msra.mxu0 %v2077
        %2120 = vmatprep.subr.mxu0 0.0
        %2121 = vmatpush1.msra.mxu0 %v2076
        %2122 = vmatprep.subr.mxu0 0.0
        %2123 = vmatpush1.msra.mxu0 %v2075
        %2124 = vmatprep.subr.mxu0 0.0
        %2125 = vmatpush2.msra.mxu0 0.0
        %2126 = vmatprep.subr.mxu0 0.0
        %2127 = vmatpush2.msra.mxu0 0.0
        %2128 = vmatprep.subr.mxu0 0.0
        %2129 = vmatpush2.msra.mxu0 0.0
        %2130 = vmatprep.subr.mxu0 0.0
        %2131 = vmatpush2.msra.mxu0 0.0
        %2132 = vmatprep.subr.mxu0 0.0
        %2133 = vmatpush2.msra.mxu0 0.0
        %2134 = vmatprep.subr.mxu0 0.0
        %2135 = vmatpush2.msra.mxu0 0.0
        %2136 = vmatprep.subr.mxu0 0.0
        %2137 = vmatpush2.msra.mxu0 0.0
        %2138 = vmatprep.subr.mxu0 0.0
        %2139 = vmatpush2.msra.mxu0 0.0
        %2140 = vmatprep.subr.mxu0 0.0
        %2141 = vmatpush2.msra.mxu0 0.0
        %2142 = vmatprep.subr.mxu0 0.0
        %2143 = vmatpush2.msra.mxu0 0.0
        %2144 = vmatprep.subr.mxu0 0.0
        %2145 = vmatpush2.msra.mxu0 0.0
        %2146 = vmatprep.subr.mxu0 0.0
        %2147 = vmatpush2.msra.mxu0 0.0
        %2148 = vmatprep.subr.mxu0 0.0
        %2149 = vmatpush2.msra.mxu0 0.0
        %2150 = vmatprep.subr.mxu0 0.0
        %2151 = vmatpush2.msra.mxu0 0.0
        %2152 = vmatprep.subr.mxu0 0.0
        %2153 = vmatpush2.msra.mxu0 0.0
        %2154 = vmatprep.subr.mxu0 0.0
        %2155 = vmatpush2.msra.mxu0 0.0
        %2156 = vmatprep.mubr.f32.mxu0 0.0
        %2157 = vmatmul.mubr.f32.gmra.mxu0 %v2090
        %v2158 = vpop.f32.mrf.mxu0
        %v2159 = vadd.f32 0.0, %v2158
        %v2160 = vpop.f32.mrf.mxu0
        %2161 = vdwg.mxu0
        %s2162 = scalar_lea.vmem %s12, 112
        %v2163 = vld [vmem:[%s2162] sm:$0xff]
        %v2164 = vld [vmem:[%s2162 + $0x8] sm:$0xff]
        %v2165 = vld [vmem:[%s2162 + $0x10] sm:$0xff]
        %v2166 = vld [vmem:[%s2162 + $0x18] sm:$0xff]
        %v2167 = vld [vmem:[%s2162 + $0x20] sm:$0xff]
        %v2168 = vld [vmem:[%s2162 + $0x28] sm:$0xff]
        %v2169 = vld [vmem:[%s2162 + $0x30] sm:$0xff]
        %v2170 = vld [vmem:[%s2162 + $0x38] sm:$0xff]
        %v2171 = vld [vmem:[%s2162 + $0x40] sm:$0xff]
        %v2172 = vld [vmem:[%s2162 + $0x48] sm:$0xff]
        %v2173 = vld [vmem:[%s2162 + $0x50] sm:$0xff]
        %v2174 = vld [vmem:[%s2162 + $0x58] sm:$0xff]
        %v2175 = vld [vmem:[%s2162 + $0x60] sm:$0xff]
        %v2176 = vld [vmem:[%s2162 + $0x68] sm:$0xff]
        %2177 = vmatprep.subr.mxu0 0.0
        %2178 = vmatpush1.msra.mxu0 0.0
        %2179 = vmatprep.subr.mxu0 0.0
        %2180 = vmatpush1.msra.mxu0 0.0
        %2181 = vmatprep.subr.mxu0 0.0
        %2182 = vmatpush1.msra.mxu0 %v2176
        %2183 = vmatprep.subr.mxu0 0.0
        %2184 = vmatpush1.msra.mxu0 %v2175
        %2185 = vmatprep.subr.mxu0 0.0
        %2186 = vmatpush1.msra.mxu0 %v2174
        %2187 = vmatprep.subr.mxu0 0.0
        %2188 = vmatpush1.msra.mxu0 %v2173
        %2189 = vmatprep.subr.mxu0 0.0
        %2190 = vmatpush1.msra.mxu0 %v2172
        %2191 = vmatprep.subr.mxu0 0.0
        %2192 = vmatpush1.msra.mxu0 %v2171
        %2193 = vmatprep.subr.mxu0 0.0
        %2194 = vmatpush1.msra.mxu0 %v2170
        %2195 = vmatprep.subr.mxu0 0.0
        %2196 = vmatpush1.msra.mxu0 %v2169
        %2197 = vmatprep.subr.mxu0 0.0
        %2198 = vmatpush1.msra.mxu0 %v2168
        %2199 = vmatprep.subr.mxu0 0.0
        %2200 = vmatpush1.msra.mxu0 %v2167
        %2201 = vmatprep.subr.mxu0 0.0
        %2202 = vmatpush1.msra.mxu0 %v2166
        %2203 = vmatprep.subr.mxu0 0.0
        %2204 = vmatpush1.msra.mxu0 %v2165
        %2205 = vmatprep.subr.mxu0 0.0
        %2206 = vmatpush1.msra.mxu0 %v2164
        %2207 = vmatprep.subr.mxu0 0.0
        %2208 = vmatpush1.msra.mxu0 %v2163
        %2209 = vmatprep.subr.mxu0 0.0
        %2210 = vmatpush2.msra.mxu0 0.0
        %2211 = vmatprep.subr.mxu0 0.0
        %2212 = vmatpush2.msra.mxu0 0.0
        %2213 = vmatprep.subr.mxu0 0.0
        %2214 = vmatpush2.msra.mxu0 0.0
        %2215 = vmatprep.subr.mxu0 0.0
        %2216 = vmatpush2.msra.mxu0 0.0
        %2217 = vmatprep.subr.mxu0 0.0
        %2218 = vmatpush2.msra.mxu0 0.0
        %2219 = vmatprep.subr.mxu0 0.0
        %2220 = vmatpush2.msra.mxu0 0.0
        %2221 = vmatprep.subr.mxu0 0.0
        %2222 = vmatpush2.msra.mxu0 0.0
        %2223 = vmatprep.subr.mxu0 0.0
        %2224 = vmatpush2.msra.mxu0 0.0
        %2225 = vmatprep.subr.mxu0 0.0
        %2226 = vmatpush2.msra.mxu0 0.0
        %2227 = vmatprep.subr.mxu0 0.0
        %2228 = vmatpush2.msra.mxu0 0.0
        %2229 = vmatprep.subr.mxu0 0.0
        %2230 = vmatpush2.msra.mxu0 0.0
        %2231 = vmatprep.subr.mxu0 0.0
        %2232 = vmatpush2.msra.mxu0 0.0
        %2233 = vmatprep.subr.mxu0 0.0
        %2234 = vmatpush2.msra.mxu0 0.0
        %2235 = vmatprep.subr.mxu0 0.0
        %2236 = vmatpush2.msra.mxu0 0.0
        %2237 = vmatprep.subr.mxu0 0.0
        %2238 = vmatpush2.msra.mxu0 0.0
        %2239 = vmatprep.subr.mxu0 0.0
        %2240 = vmatpush2.msra.mxu0 0.0
        %2241 = vmatprep.mubr.f32.mxu0 0.0
        %2242 = vmatmul.mubr.f32.gmra.mxu0 %v2090
        %v2243 = vpop.f32.mrf.mxu0
        %v2244 = vadd.f32 0.0, %v2243
        %v2245 = vpop.f32.mrf.mxu0
        %2246 = vdwg.mxu0
        %s2247 = scalar_lea.vmem %s12, 224
        %v2248 = vld [vmem:[%s2247] sm:$0xff]
        %v2249 = vld [vmem:[%s2247 + $0x8] sm:$0xff]
        %v2250 = vld [vmem:[%s2247 + $0x10] sm:$0xff]
        %v2251 = vld [vmem:[%s2247 + $0x18] sm:$0xff]
        %v2252 = vld [vmem:[%s2247 + $0x20] sm:$0xff]
        %v2253 = vld [vmem:[%s2247 + $0x28] sm:$0xff]
        %v2254 = vld [vmem:[%s2247 + $0x30] sm:$0xff]
        %v2255 = vld [vmem:[%s2247 + $0x38] sm:$0xff]
        %v2256 = vld [vmem:[%s2247 + $0x40] sm:$0xff]
        %v2257 = vld [vmem:[%s2247 + $0x48] sm:$0xff]
        %v2258 = vld [vmem:[%s2247 + $0x50] sm:$0xff]
        %v2259 = vld [vmem:[%s2247 + $0x58] sm:$0xff]
        %v2260 = vld [vmem:[%s2247 + $0x60] sm:$0xff]
        %v2261 = vld [vmem:[%s2247 + $0x68] sm:$0xff]
        %2262 = vmatprep.subr.mxu0 0.0
        %2263 = vmatpush1.msra.mxu0 0.0
        %2264 = vmatprep.subr.mxu0 0.0
        %2265 = vmatpush1.msra.mxu0 0.0
        %2266 = vmatprep.subr.mxu0 0.0
        %2267 = vmatpush1.msra.mxu0 %v2261
        %2268 = vmatprep.subr.mxu0 0.0
        %2269 = vmatpush1.msra.mxu0 %v2260
        %2270 = vmatprep.subr.mxu0 0.0
        %2271 = vmatpush1.msra.mxu0 %v2259
        %2272 = vmatprep.subr.mxu0 0.0
        %2273 = vmatpush1.msra.mxu0 %v2258
        %2274 = vmatprep.subr.mxu0 0.0
        %2275 = vmatpush1.msra.mxu0 %v2257
        %2276 = vmatprep.subr.mxu0 0.0
        %2277 = vmatpush1.msra.mxu0 %v2256
        %2278 = vmatprep.subr.mxu0 0.0
        %2279 = vmatpush1.msra.mxu0 %v2255
        %2280 = vmatprep.subr.mxu0 0.0
        %2281 = vmatpush1.msra.mxu0 %v2254
        %2282 = vmatprep.subr.mxu0 0.0
        %2283 = vmatpush1.msra.mxu0 %v2253
        %2284 = vmatprep.subr.mxu0 0.0
        %2285 = vmatpush1.msra.mxu0 %v2252
        %2286 = vmatprep.subr.mxu0 0.0
        %2287 = vmatpush1.msra.mxu0 %v2251
        %2288 = vmatprep.subr.mxu0 0.0
        %2289 = vmatpush1.msra.mxu0 %v2250
        %2290 = vmatprep.subr.mxu0 0.0
        %2291 = vmatpush1.msra.mxu0 %v2249
        %2292 = vmatprep.subr.mxu0 0.0
        %2293 = vmatpush1.msra.mxu0 %v2248
        %2294 = vmatprep.subr.mxu0 0.0
        %2295 = vmatpush2.msra.mxu0 0.0
        %2296 = vmatprep.subr.mxu0 0.0
        %2297 = vmatpush2.msra.mxu0 0.0
        %2298 = vmatprep.subr.mxu0 0.0
        %2299 = vmatpush2.msra.mxu0 0.0
        %2300 = vmatprep.subr.mxu0 0.0
        %2301 = vmatpush2.msra.mxu0 0.0
        %2302 = vmatprep.subr.mxu0 0.0
        %2303 = vmatpush2.msra.mxu0 0.0
        %2304 = vmatprep.subr.mxu0 0.0
        %2305 = vmatpush2.msra.mxu0 0.0
        %2306 = vmatprep.subr.mxu0 0.0
        %2307 = vmatpush2.msra.mxu0 0.0
        %2308 = vmatprep.subr.mxu0 0.0
        %2309 = vmatpush2.msra.mxu0 0.0
        %2310 = vmatprep.subr.mxu0 0.0
        %2311 = vmatpush2.msra.mxu0 0.0
        %2312 = vmatprep.subr.mxu0 0.0
        %2313 = vmatpush2.msra.mxu0 0.0
        %2314 = vmatprep.subr.mxu0 0.0
        %2315 = vmatpush2.msra.mxu0 0.0
        %2316 = vmatprep.subr.mxu0 0.0
        %2317 = vmatpush2.msra.mxu0 0.0
        %2318 = vmatprep.subr.mxu0 0.0
        %2319 = vmatpush2.msra.mxu0 0.0
        %2320 = vmatprep.subr.mxu0 0.0
        %2321 = vmatpush2.msra.mxu0 0.0
        %2322 = vmatprep.subr.mxu0 0.0
        %2323 = vmatpush2.msra.mxu0 0.0
        %2324 = vmatprep.subr.mxu0 0.0
        %2325 = vmatpush2.msra.mxu0 0.0
        %2326 = vmatprep.mubr.f32.mxu0 0.0
        %2327 = vmatmul.mubr.f32.gmra.mxu0 %v2090
        %v2328 = vpop.f32.mrf.mxu0
        %v2329 = vadd.f32 0.0, %v2328
        %v2330 = vpop.f32.mrf.mxu0
        %2331 = vdwg.mxu0
        %s2332 = scalar_lea.vmem %s12, 336
        %v2333 = vld [vmem:[%s2332] sm:$0xff]
        %v2334 = vld [vmem:[%s2332 + $0x8] sm:$0xff]
        %v2335 = vld [vmem:[%s2332 + $0x10] sm:$0xff]
        %v2336 = vld [vmem:[%s2332 + $0x18] sm:$0xff]
        %v2337 = vld [vmem:[%s2332 + $0x20] sm:$0xff]
        %v2338 = vld [vmem:[%s2332 + $0x28] sm:$0xff]
        %v2339 = vld [vmem:[%s2332 + $0x30] sm:$0xff]
        %v2340 = vld [vmem:[%s2332 + $0x38] sm:$0xff]
        %v2341 = vld [vmem:[%s2332 + $0x40] sm:$0xff]
        %v2342 = vld [vmem:[%s2332 + $0x48] sm:$0xff]
        %v2343 = vld [vmem:[%s2332 + $0x50] sm:$0xff]
        %v2344 = vld [vmem:[%s2332 + $0x58] sm:$0xff]
        %v2345 = vld [vmem:[%s2332 + $0x60] sm:$0xff]
        %v2346 = vld [vmem:[%s2332 + $0x68] sm:$0xff]
        %2347 = vmatprep.subr.mxu0 0.0
        %2348 = vmatpush1.msra.mxu0 0.0
        %2349 = vmatprep.subr.mxu0 0.0
        %2350 = vmatpush1.msra.mxu0 0.0
        %2351 = vmatprep.subr.mxu0 0.0
        %2352 = vmatpush1.msra.mxu0 %v2346
        %2353 = vmatprep.subr.mxu0 0.0
        %2354 = vmatpush1.msra.mxu0 %v2345
        %2355 = vmatprep.subr.mxu0 0.0
        %2356 = vmatpush1.msra.mxu0 %v2344
        %2357 = vmatprep.subr.mxu0 0.0
        %2358 = vmatpush1.msra.mxu0 %v2343
        %2359 = vmatprep.subr.mxu0 0.0
        %2360 = vmatpush1.msra.mxu0 %v2342
        %2361 = vmatprep.subr.mxu0 0.0
        %2362 = vmatpush1.msra.mxu0 %v2341
        %2363 = vmatprep.subr.mxu0 0.0
        %2364 = vmatpush1.msra.mxu0 %v2340
        %2365 = vmatprep.subr.mxu0 0.0
        %2366 = vmatpush1.msra.mxu0 %v2339
        %2367 = vmatprep.subr.mxu0 0.0
        %2368 = vmatpush1.msra.mxu0 %v2338
        %2369 = vmatprep.subr.mxu0 0.0
        %2370 = vmatpush1.msra.mxu0 %v2337
        %2371 = vmatprep.subr.mxu0 0.0
        %2372 = vmatpush1.msra.mxu0 %v2336
        %2373 = vmatprep.subr.mxu0 0.0
        %2374 = vmatpush1.msra.mxu0 %v2335
        %2375 = vmatprep.subr.mxu0 0.0
        %2376 = vmatpush1.msra.mxu0 %v2334
        %2377 = vmatprep.subr.mxu0 0.0
        %2378 = vmatpush1.msra.mxu0 %v2333
        %2379 = vmatprep.subr.mxu0 0.0
        %2380 = vmatpush2.msra.mxu0 0.0
        %2381 = vmatprep.subr.mxu0 0.0
        %2382 = vmatpush2.msra.mxu0 0.0
        %2383 = vmatprep.subr.mxu0 0.0
        %2384 = vmatpush2.msra.mxu0 0.0
        %2385 = vmatprep.subr.mxu0 0.0
        %2386 = vmatpush2.msra.mxu0 0.0
        %2387 = vmatprep.subr.mxu0 0.0
        %2388 = vmatpush2.msra.mxu0 0.0
        %2389 = vmatprep.subr.mxu0 0.0
        %2390 = vmatpush2.msra.mxu0 0.0
        %2391 = vmatprep.subr.mxu0 0.0
        %2392 = vmatpush2.msra.mxu0 0.0
        %2393 = vmatprep.subr.mxu0 0.0
        %2394 = vmatpush2.msra.mxu0 0.0
        %2395 = vmatprep.subr.mxu0 0.0
        %2396 = vmatpush2.msra.mxu0 0.0
        %2397 = vmatprep.subr.mxu0 0.0
        %2398 = vmatpush2.msra.mxu0 0.0
        %2399 = vmatprep.subr.mxu0 0.0
        %2400 = vmatpush2.msra.mxu0 0.0
        %2401 = vmatprep.subr.mxu0 0.0
        %2402 = vmatpush2.msra.mxu0 0.0
        %2403 = vmatprep.subr.mxu0 0.0
        %2404 = vmatpush2.msra.mxu0 0.0
        %2405 = vmatprep.subr.mxu0 0.0
        %2406 = vmatpush2.msra.mxu0 0.0
        %2407 = vmatprep.subr.mxu0 0.0
        %2408 = vmatpush2.msra.mxu0 0.0
        %2409 = vmatprep.subr.mxu0 0.0
        %2410 = vmatpush2.msra.mxu0 0.0
        %2411 = vmatprep.mubr.f32.mxu0 0.0
        %2412 = vmatmul.mubr.f32.gmra.mxu0 %v2090
        %v2413 = vpop.f32.mrf.mxu0
        %v2414 = vadd.f32 0.0, %v2413
        %v2415 = vpop.f32.mrf.mxu0
        %2416 = vdwg.mxu0
        %s2417 = scalar_lea.vmem %s12, 448
        %v2418 = vld [vmem:[%s2417] sm:$0xff]
        %v2419 = vld [vmem:[%s2417 + $0x8] sm:$0xff]
        %v2420 = vld [vmem:[%s2417 + $0x10] sm:$0xff]
        %v2421 = vld [vmem:[%s2417 + $0x18] sm:$0xff]
        %v2422 = vld [vmem:[%s2417 + $0x20] sm:$0xff]
        %v2423 = vld [vmem:[%s2417 + $0x28] sm:$0xff]
        %v2424 = vld [vmem:[%s2417 + $0x30] sm:$0xff]
        %v2425 = vld [vmem:[%s2417 + $0x38] sm:$0xff]
        %v2426 = vld [vmem:[%s2417 + $0x40] sm:$0xff]
        %v2427 = vld [vmem:[%s2417 + $0x48] sm:$0xff]
        %v2428 = vld [vmem:[%s2417 + $0x50] sm:$0xff]
        %v2429 = vld [vmem:[%s2417 + $0x58] sm:$0xff]
        %v2430 = vld [vmem:[%s2417 + $0x60] sm:$0xff]
        %v2431 = vld [vmem:[%s2417 + $0x68] sm:$0xff]
        %2432 = vmatprep.subr.mxu0 0.0
        %2433 = vmatpush1.msra.mxu0 0.0
        %2434 = vmatprep.subr.mxu0 0.0
        %2435 = vmatpush1.msra.mxu0 0.0
        %2436 = vmatprep.subr.mxu0 0.0
        %2437 = vmatpush1.msra.mxu0 %v2431
        %2438 = vmatprep.subr.mxu0 0.0
        %2439 = vmatpush1.msra.mxu0 %v2430
        %2440 = vmatprep.subr.mxu0 0.0
        %2441 = vmatpush1.msra.mxu0 %v2429
        %2442 = vmatprep.subr.mxu0 0.0
        %2443 = vmatpush1.msra.mxu0 %v2428
        %2444 = vmatprep.subr.mxu0 0.0
        %2445 = vmatpush1.msra.mxu0 %v2427
        %2446 = vmatprep.subr.mxu0 0.0
        %2447 = vmatpush1.msra.mxu0 %v2426
        %2448 = vmatprep.subr.mxu0 0.0
        %2449 = vmatpush1.msra.mxu0 %v2425
        %2450 = vmatprep.subr.mxu0 0.0
        %2451 = vmatpush1.msra.mxu0 %v2424
        %2452 = vmatprep.subr.mxu0 0.0
        %2453 = vmatpush1.msra.mxu0 %v2423
        %2454 = vmatprep.subr.mxu0 0.0
        %2455 = vmatpush1.msra.mxu0 %v2422
        %2456 = vmatprep.subr.mxu0 0.0
        %2457 = vmatpush1.msra.mxu0 %v2421
        %2458 = vmatprep.subr.mxu0 0.0
        %2459 = vmatpush1.msra.mxu0 %v2420
        %2460 = vmatprep.subr.mxu0 0.0
        %2461 = vmatpush1.msra.mxu0 %v2419
        %2462 = vmatprep.subr.mxu0 0.0
        %2463 = vmatpush1.msra.mxu0 %v2418
        %2464 = vmatprep.subr.mxu0 0.0
        %2465 = vmatpush2.msra.mxu0 0.0
        %2466 = vmatprep.subr.mxu0 0.0
        %2467 = vmatpush2.msra.mxu0 0.0
        %2468 = vmatprep.subr.mxu0 0.0
        %2469 = vmatpush2.msra.mxu0 0.0
        %2470 = vmatprep.subr.mxu0 0.0
        %2471 = vmatpush2.msra.mxu0 0.0
        %2472 = vmatprep.subr.mxu0 0.0
        %2473 = vmatpush2.msra.mxu0 0.0
        %2474 = vmatprep.subr.mxu0 0.0
        %2475 = vmatpush2.msra.mxu0 0.0
        %2476 = vmatprep.subr.mxu0 0.0
        %2477 = vmatpush2.msra.mxu0 0.0
        %2478 = vmatprep.subr.mxu0 0.0
        %2479 = vmatpush2.msra.mxu0 0.0
        %2480 = vmatprep.subr.mxu0 0.0
        %2481 = vmatpush2.msra.mxu0 0.0
        %2482 = vmatprep.subr.mxu0 0.0
        %2483 = vmatpush2.msra.mxu0 0.0
        %2484 = vmatprep.subr.mxu0 0.0
        %2485 = vmatpush2.msra.mxu0 0.0
        %2486 = vmatprep.subr.mxu0 0.0
        %2487 = vmatpush2.msra.mxu0 0.0
        %2488 = vmatprep.subr.mxu0 0.0
        %2489 = vmatpush2.msra.mxu0 0.0
        %2490 = vmatprep.subr.mxu0 0.0
        %2491 = vmatpush2.msra.mxu0 0.0
        %2492 = vmatprep.subr.mxu0 0.0
        %2493 = vmatpush2.msra.mxu0 0.0
        %2494 = vmatprep.subr.mxu0 0.0
        %2495 = vmatpush2.msra.mxu0 0.0
        %2496 = vmatprep.mubr.f32.mxu0 0.0
        %2497 = vmatmul.mubr.f32.gmra.mxu0 %v2090
        %v2498 = vpop.f32.mrf.mxu0
        %v2499 = vadd.f32 0.0, %v2498
        %v2500 = vpop.f32.mrf.mxu0
        %2501 = vdwg.mxu0
        %s2502 = scalar_lea.vmem %s12, 560
        %v2503 = vld [vmem:[%s2502] sm:$0xff]
        %v2504 = vld [vmem:[%s2502 + $0x8] sm:$0xff]
        %v2505 = vld [vmem:[%s2502 + $0x10] sm:$0xff]
        %v2506 = vld [vmem:[%s2502 + $0x18] sm:$0xff]
        %v2507 = vld [vmem:[%s2502 + $0x20] sm:$0xff]
        %v2508 = vld [vmem:[%s2502 + $0x28] sm:$0xff]
        %v2509 = vld [vmem:[%s2502 + $0x30] sm:$0xff]
        %v2510 = vld [vmem:[%s2502 + $0x38] sm:$0xff]
        %v2511 = vld [vmem:[%s2502 + $0x40] sm:$0xff]
        %v2512 = vld [vmem:[%s2502 + $0x48] sm:$0xff]
        %v2513 = vld [vmem:[%s2502 + $0x50] sm:$0xff]
        %v2514 = vld [vmem:[%s2502 + $0x58] sm:$0xff]
        %v2515 = vld [vmem:[%s2502 + $0x60] sm:$0xff]
        %v2516 = vld [vmem:[%s2502 + $0x68] sm:$0xff]
        %2517 = vmatprep.subr.mxu0 0.0
        %2518 = vmatpush1.msra.mxu0 0.0
        %2519 = vmatprep.subr.mxu0 0.0
        %2520 = vmatpush1.msra.mxu0 0.0
        %2521 = vmatprep.subr.mxu0 0.0
        %2522 = vmatpush1.msra.mxu0 %v2516
        %2523 = vmatprep.subr.mxu0 0.0
        %2524 = vmatpush1.msra.mxu0 %v2515
        %2525 = vmatprep.subr.mxu0 0.0
        %2526 = vmatpush1.msra.mxu0 %v2514
        %2527 = vmatprep.subr.mxu0 0.0
        %2528 = vmatpush1.msra.mxu0 %v2513
        %2529 = vmatprep.subr.mxu0 0.0
        %2530 = vmatpush1.msra.mxu0 %v2512
        %2531 = vmatprep.subr.mxu0 0.0
        %2532 = vmatpush1.msra.mxu0 %v2511
        %2533 = vmatprep.subr.mxu0 0.0
        %2534 = vmatpush1.msra.mxu0 %v2510
        %2535 = vmatprep.subr.mxu0 0.0
        %2536 = vmatpush1.msra.mxu0 %v2509
        %2537 = vmatprep.subr.mxu0 0.0
        %2538 = vmatpush1.msra.mxu0 %v2508
        %2539 = vmatprep.subr.mxu0 0.0
        %2540 = vmatpush1.msra.mxu0 %v2507
        %2541 = vmatprep.subr.mxu0 0.0
        %2542 = vmatpush1.msra.mxu0 %v2506
        %2543 = vmatprep.subr.mxu0 0.0
        %2544 = vmatpush1.msra.mxu0 %v2505
        %2545 = vmatprep.subr.mxu0 0.0
        %2546 = vmatpush1.msra.mxu0 %v2504
        %2547 = vmatprep.subr.mxu0 0.0
        %2548 = vmatpush1.msra.mxu0 %v2503
        %2549 = vmatprep.subr.mxu0 0.0
        %2550 = vmatpush2.msra.mxu0 0.0
        %2551 = vmatprep.subr.mxu0 0.0
        %2552 = vmatpush2.msra.mxu0 0.0
        %2553 = vmatprep.subr.mxu0 0.0
        %2554 = vmatpush2.msra.mxu0 0.0
        %2555 = vmatprep.subr.mxu0 0.0
        %2556 = vmatpush2.msra.mxu0 0.0
        %2557 = vmatprep.subr.mxu0 0.0
        %2558 = vmatpush2.msra.mxu0 0.0
        %2559 = vmatprep.subr.mxu0 0.0
        %2560 = vmatpush2.msra.mxu0 0.0
        %2561 = vmatprep.subr.mxu0 0.0
        %2562 = vmatpush2.msra.mxu0 0.0
        %2563 = vmatprep.subr.mxu0 0.0
        %2564 = vmatpush2.msra.mxu0 0.0
        %2565 = vmatprep.subr.mxu0 0.0
        %2566 = vmatpush2.msra.mxu0 0.0
        %2567 = vmatprep.subr.mxu0 0.0
        %2568 = vmatpush2.msra.mxu0 0.0
        %2569 = vmatprep.subr.mxu0 0.0
        %2570 = vmatpush2.msra.mxu0 0.0
        %2571 = vmatprep.subr.mxu0 0.0
        %2572 = vmatpush2.msra.mxu0 0.0
        %2573 = vmatprep.subr.mxu0 0.0
        %2574 = vmatpush2.msra.mxu0 0.0
        %2575 = vmatprep.subr.mxu0 0.0
        %2576 = vmatpush2.msra.mxu0 0.0
        %2577 = vmatprep.subr.mxu0 0.0
        %2578 = vmatpush2.msra.mxu0 0.0
        %2579 = vmatprep.subr.mxu0 0.0
        %2580 = vmatpush2.msra.mxu0 0.0
        %2581 = vmatprep.mubr.f32.mxu0 0.0
        %2582 = vmatmul.mubr.f32.gmra.mxu0 %v2090
        %v2583 = vpop.f32.mrf.mxu0
        %v2584 = vadd.f32 0.0, %v2583
        %v2585 = vpop.f32.mrf.mxu0
        %2586 = vdwg.mxu0
        %s2587 = scalar_lea.vmem %s12, 672
        %v2588 = vld [vmem:[%s2587] sm:$0xff]
        %v2589 = vld [vmem:[%s2587 + $0x8] sm:$0xff]
        %v2590 = vld [vmem:[%s2587 + $0x10] sm:$0xff]
        %v2591 = vld [vmem:[%s2587 + $0x18] sm:$0xff]
        %v2592 = vld [vmem:[%s2587 + $0x20] sm:$0xff]
        %v2593 = vld [vmem:[%s2587 + $0x28] sm:$0xff]
        %v2594 = vld [vmem:[%s2587 + $0x30] sm:$0xff]
        %v2595 = vld [vmem:[%s2587 + $0x38] sm:$0xff]
        %v2596 = vld [vmem:[%s2587 + $0x40] sm:$0xff]
        %v2597 = vld [vmem:[%s2587 + $0x48] sm:$0xff]
        %v2598 = vld [vmem:[%s2587 + $0x50] sm:$0xff]
        %v2599 = vld [vmem:[%s2587 + $0x58] sm:$0xff]
        %v2600 = vld [vmem:[%s2587 + $0x60] sm:$0xff]
        %v2601 = vld [vmem:[%s2587 + $0x68] sm:$0xff]
        %2602 = vmatprep.subr.mxu0 0.0
        %2603 = vmatpush1.msra.mxu0 0.0
        %2604 = vmatprep.subr.mxu0 0.0
        %2605 = vmatpush1.msra.mxu0 0.0
        %2606 = vmatprep.subr.mxu0 0.0
        %2607 = vmatpush1.msra.mxu0 %v2601
        %2608 = vmatprep.subr.mxu0 0.0
        %2609 = vmatpush1.msra.mxu0 %v2600
        %2610 = vmatprep.subr.mxu0 0.0
        %2611 = vmatpush1.msra.mxu0 %v2599
        %2612 = vmatprep.subr.mxu0 0.0
        %2613 = vmatpush1.msra.mxu0 %v2598
        %2614 = vmatprep.subr.mxu0 0.0
        %2615 = vmatpush1.msra.mxu0 %v2597
        %2616 = vmatprep.subr.mxu0 0.0
        %2617 = vmatpush1.msra.mxu0 %v2596
        %2618 = vmatprep.subr.mxu0 0.0
        %2619 = vmatpush1.msra.mxu0 %v2595
        %2620 = vmatprep.subr.mxu0 0.0
        %2621 = vmatpush1.msra.mxu0 %v2594
        %2622 = vmatprep.subr.mxu0 0.0
        %2623 = vmatpush1.msra.mxu0 %v2593
        %2624 = vmatprep.subr.mxu0 0.0
        %2625 = vmatpush1.msra.mxu0 %v2592
        %2626 = vmatprep.subr.mxu0 0.0
        %2627 = vmatpush1.msra.mxu0 %v2591
        %2628 = vmatprep.subr.mxu0 0.0
        %2629 = vmatpush1.msra.mxu0 %v2590
        %2630 = vmatprep.subr.mxu0 0.0
        %2631 = vmatpush1.msra.mxu0 %v2589
        %2632 = vmatprep.subr.mxu0 0.0
        %2633 = vmatpush1.msra.mxu0 %v2588
        %2634 = vmatprep.subr.mxu0 0.0
        %2635 = vmatpush2.msra.mxu0 0.0
        %2636 = vmatprep.subr.mxu0 0.0
        %2637 = vmatpush2.msra.mxu0 0.0
        %2638 = vmatprep.subr.mxu0 0.0
        %2639 = vmatpush2.msra.mxu0 0.0
        %2640 = vmatprep.subr.mxu0 0.0
        %2641 = vmatpush2.msra.mxu0 0.0
        %2642 = vmatprep.subr.mxu0 0.0
        %2643 = vmatpush2.msra.mxu0 0.0
        %2644 = vmatprep.subr.mxu0 0.0
        %2645 = vmatpush2.msra.mxu0 0.0
        %2646 = vmatprep.subr.mxu0 0.0
        %2647 = vmatpush2.msra.mxu0 0.0
        %2648 = vmatprep.subr.mxu0 0.0
        %2649 = vmatpush2.msra.mxu0 0.0
        %2650 = vmatprep.subr.mxu0 0.0
        %2651 = vmatpush2.msra.mxu0 0.0
        %2652 = vmatprep.subr.mxu0 0.0
        %2653 = vmatpush2.msra.mxu0 0.0
        %2654 = vmatprep.subr.mxu0 0.0
        %2655 = vmatpush2.msra.mxu0 0.0
        %2656 = vmatprep.subr.mxu0 0.0
        %2657 = vmatpush2.msra.mxu0 0.0
        %2658 = vmatprep.subr.mxu0 0.0
        %2659 = vmatpush2.msra.mxu0 0.0
        %2660 = vmatprep.subr.mxu0 0.0
        %2661 = vmatpush2.msra.mxu0 0.0
        %2662 = vmatprep.subr.mxu0 0.0
        %2663 = vmatpush2.msra.mxu0 0.0
        %2664 = vmatprep.subr.mxu0 0.0
        %2665 = vmatpush2.msra.mxu0 0.0
        %2666 = vmatprep.mubr.f32.mxu0 0.0
        %2667 = vmatmul.mubr.f32.gmra.mxu0 %v2090
        %v2668 = vpop.f32.mrf.mxu0
        %v2669 = vadd.f32 0.0, %v2668
        %v2670 = vpop.f32.mrf.mxu0
        %2671 = vdwg.mxu0
        %v2672 = vmax.f32 %v2159, %v2244
        %v2673 = vmax.f32 %v2329, %v2414
        %v2674 = vmax.f32 %v2672, %v2673
        %v2675 = vmax.f32 %v2414, %v2499
        %v2676 = vmax.f32 %v2584, %v2669
        %v2677 = vmax.f32 %v2675, %v2676
        %v2678 = vmax.f32 %v2674, %v2677
        %v2679 = vlaneseq
        %v2680 = vshrl.u32 %v2679, 7
        %vm2681 = vcmp.lt.s32.totalorder %v2680, 4
        %vm2682 = vcmp.ge.s32.totalorder %v2680, 3
        %vm2683 = vcmask 129024
        %v2684 = vsel %vm2683, %v2678, -inf
        %v2685 = vrot.slane %v2684, 4
        %v2686 = vmax.f32 %v2684, %v2685
        %v2687 = vrot.slane %v2686, 2
        %v2688 = vmax.f32 %v2686, %v2687
        %v2689 = vrot.slane %v2688, 1
        %v2690 = vmax.f32 %v2688, %v2689
        %v2691 = vsel %vm2681, %v2674, -inf
        %v2692 = vsel %vm2683, %v2691, -inf
        %v2693 = vrot.slane %v2692, 4
        %v2694 = vmax.f32 %v2692, %v2693
        %v2695 = vrot.slane %v2694, 2
        %v2696 = vmax.f32 %v2694, %v2695
        %v2697 = vrot.slane %v2696, 1
        %v2698 = vmax.f32 %v2696, %v2697
        %v2699 = vsel %vm2681, %v2677, -inf
        %v2700 = vsel %vm2683, %v2699, -inf
        %v2701 = vrot.slane %v2700, 4
        %v2702 = vmax.f32 %v2700, %v2701
        %v2703 = vrot.slane %v2702, 2
        %v2704 = vmax.f32 %v2702, %v2703
        %v2705 = vrot.slane %v2704, 1
        %v2706 = vmax.f32 %v2704, %v2705
        %v2707 = vsel %vm2682, %v2674, -inf
        %v2708 = vsel %vm2683, %v2707, -inf
        %v2709 = vrot.slane %v2708, 4
        %v2710 = vmax.f32 %v2708, %v2709
        %v2711 = vrot.slane %v2710, 2
        %v2712 = vmax.f32 %v2710, %v2711
        %v2713 = vrot.slane %v2712, 1
        %v2714 = vmax.f32 %v2712, %v2713
        %v2715 = vsel %vm2682, %v2677, -inf
        %v2716 = vsel %vm2683, %v2715, -inf
        %v2717 = vrot.slane %v2716, 4
        %v2718 = vmax.f32 %v2716, %v2717
        %v2719 = vrot.slane %v2718, 2
        %v2720 = vmax.f32 %v2718, %v2719
        %v2721 = vrot.slane %v2720, 1
        %v2722 = vmax.f32 %v2720, %v2721
        %v2723 = vld [vmem:[%s13] sm:$0xff]
        %v2724 = vld [vmem:[%s13 + $0x8] sm:$0xff]
        %s2725 = scalar_lea.vmem %s13, 16
        %v2726 = vld [vmem:[%s2725] sm:$0xff]
        %v2727 = vld [vmem:[%s2725 + $0x8] sm:$0xff]
        %v2729 = vsel %vm523, %v2698, 0
        %2731 = vmatprep.subr.mxu0 0.0
        %2732 = vmatpush1.msra.mxu0 0.0
        %2733 = vmatprep.subr.mxu0 0.0
        %2734 = vmatpush1.msra.mxu0 0.0
        %2735 = vmatprep.subr.mxu0 0.0
        %2736 = vmatpush1.msra.mxu0 0.0
        %2737 = vmatprep.subr.mxu0 0.0
        %2738 = vmatpush1.msra.mxu0 0.0
        %2739 = vmatprep.subr.mxu0 0.0
        %2740 = vmatpush1.msra.mxu0 0.0
        %2741 = vmatprep.subr.mxu0 0.0
        %2742 = vmatpush1.msra.mxu0 0.0
        %2743 = vmatprep.subr.mxu0 0.0
        %2744 = vmatpush1.msra.mxu0 0.0
        %2745 = vmatprep.subr.mxu0 0.0
        %2746 = vmatpush1.msra.mxu0 0.0
        %2747 = vmatprep.subr.mxu0 0.0
        %2748 = vmatpush1.msra.mxu0 0.0
        %2749 = vmatprep.subr.mxu0 0.0
        %2750 = vmatpush1.msra.mxu0 0.0
        %2751 = vmatprep.subr.mxu0 0.0
        %2752 = vmatpush1.msra.mxu0 0.0
        %2753 = vmatprep.subr.mxu0 0.0
        %2754 = vmatpush1.msra.mxu0 0.0
        %2755 = vmatprep.subr.mxu0 0.0
        %2756 = vmatpush1.msra.mxu0 0.0
        %2757 = vmatprep.subr.mxu0 0.0
        %2758 = vmatpush1.msra.mxu0 0.0
        %2759 = vmatprep.subr.mxu0 0.0
        %2760 = vmatpush1.msra.mxu0 %v2727
        %2761 = vmatprep.subr.mxu0 0.0
        %2762 = vmatpush1.msra.mxu0 %v2726
        %2763 = vmatprep.subr.mxu0 0.0
        %2764 = vmatpush2.msra.mxu0 0.0
        %2765 = vmatprep.subr.mxu0 0.0
        %2766 = vmatpush2.msra.mxu0 0.0
        %2767 = vmatprep.subr.mxu0 0.0
        %2768 = vmatpush2.msra.mxu0 0.0
        %2769 = vmatprep.subr.mxu0 0.0
        %2770 = vmatpush2.msra.mxu0 0.0
        %2771 = vmatprep.subr.mxu0 0.0
        %2772 = vmatpush2.msra.mxu0 0.0
        %2773 = vmatprep.subr.mxu0 0.0
        %2774 = vmatpush2.msra.mxu0 0.0
        %2775 = vmatprep.subr.mxu0 0.0
        %2776 = vmatpush2.msra.mxu0 0.0
        %2777 = vmatprep.subr.mxu0 0.0
        %2778 = vmatpush2.msra.mxu0 0.0
        %2779 = vmatprep.subr.mxu0 0.0
        %2780 = vmatpush2.msra.mxu0 0.0
        %2781 = vmatprep.subr.mxu0 0.0
        %2782 = vmatpush2.msra.mxu0 0.0
        %2783 = vmatprep.subr.mxu0 0.0
        %2784 = vmatpush2.msra.mxu0 0.0
        %2785 = vmatprep.subr.mxu0 0.0
        %2786 = vmatpush2.msra.mxu0 0.0
        %2787 = vmatprep.subr.mxu0 0.0
        %2788 = vmatpush2.msra.mxu0 0.0
        %2789 = vmatprep.subr.mxu0 0.0
        %2790 = vmatpush2.msra.mxu0 0.0
        %2791 = vmatprep.subr.mxu0 0.0
        %2792 = vmatpush2.msra.mxu0 0.0
        %2793 = vmatprep.subr.mxu0 0.0
        %2794 = vmatpush2.msra.mxu0 0.0
        %2795 = vmatprep.mubr.f32.mxu0 0.0
        %2796 = vmatmul.mubr.f32.gmra.mxu0 %v2729
        %v2797 = vpop.f32.mrf.mxu0
        %v2798 = vadd.f32 0.0, %v2797
        %v2799 = vpop.f32.mrf.mxu0
        %2800 = vdwg.mxu0
        %v2802 = vsel %vm523, %v2690, 0
        %2804 = vmatprep.subr.mxu0 0.0
        %2805 = vmatpush1.msra.mxu0 0.0
        %2806 = vmatprep.subr.mxu0 0.0
        %2807 = vmatpush1.msra.mxu0 0.0
        %2808 = vmatprep.subr.mxu0 0.0
        %2809 = vmatpush1.msra.mxu0 0.0
        %2810 = vmatprep.subr.mxu0 0.0
        %2811 = vmatpush1.msra.mxu0 0.0
        %2812 = vmatprep.subr.mxu0 0.0
        %2813 = vmatpush1.msra.mxu0 0.0
        %2814 = vmatprep.subr.mxu0 0.0
        %2815 = vmatpush1.msra.mxu0 0.0
        %2816 = vmatprep.subr.mxu0 0.0
        %2817 = vmatpush1.msra.mxu0 0.0
        %2818 = vmatprep.subr.mxu0 0.0
        %2819 = vmatpush1.msra.mxu0 0.0
        %2820 = vmatprep.subr.mxu0 0.0
        %2821 = vmatpush1.msra.mxu0 0.0
        %2822 = vmatprep.subr.mxu0 0.0
        %2823 = vmatpush1.msra.mxu0 0.0
        %2824 = vmatprep.subr.mxu0 0.0
        %2825 = vmatpush1.msra.mxu0 0.0
        %2826 = vmatprep.subr.mxu0 0.0
        %2827 = vmatpush1.msra.mxu0 0.0
        %2828 = vmatprep.subr.mxu0 0.0
        %2829 = vmatpush1.msra.mxu0 0.0
        %2830 = vmatprep.subr.mxu0 0.0
        %2831 = vmatpush1.msra.mxu0 0.0
        %2832 = vmatprep.subr.mxu0 0.0
        %2833 = vmatpush1.msra.mxu0 %v2724
        %2834 = vmatprep.subr.mxu0 0.0
        %2835 = vmatpush1.msra.mxu0 %v2723
        %2836 = vmatprep.subr.mxu0 0.0
        %2837 = vmatpush2.msra.mxu0 0.0
        %2838 = vmatprep.subr.mxu0 0.0
        %2839 = vmatpush2.msra.mxu0 0.0
        %2840 = vmatprep.subr.mxu0 0.0
        %2841 = vmatpush2.msra.mxu0 0.0
        %2842 = vmatprep.subr.mxu0 0.0
        %2843 = vmatpush2.msra.mxu0 0.0
        %2844 = vmatprep.subr.mxu0 0.0
        %2845 = vmatpush2.msra.mxu0 0.0
        %2846 = vmatprep.subr.mxu0 0.0
        %2847 = vmatpush2.msra.mxu0 0.0
        %2848 = vmatprep.subr.mxu0 0.0
        %2849 = vmatpush2.msra.mxu0 0.0
        %2850 = vmatprep.subr.mxu0 0.0
        %2851 = vmatpush2.msra.mxu0 0.0
        %2852 = vmatprep.subr.mxu0 0.0
        %2853 = vmatpush2.msra.mxu0 0.0
        %2854 = vmatprep.subr.mxu0 0.0
        %2855 = vmatpush2.msra.mxu0 0.0
        %2856 = vmatprep.subr.mxu0 0.0
        %2857 = vmatpush2.msra.mxu0 0.0
        %2858 = vmatprep.subr.mxu0 0.0
        %2859 = vmatpush2.msra.mxu0 0.0
        %2860 = vmatprep.subr.mxu0 0.0
        %2861 = vmatpush2.msra.mxu0 0.0
        %2862 = vmatprep.subr.mxu0 0.0
        %2863 = vmatpush2.msra.mxu0 0.0
        %2864 = vmatprep.subr.mxu0 0.0
        %2865 = vmatpush2.msra.mxu0 0.0
        %2866 = vmatprep.subr.mxu0 0.0
        %2867 = vmatpush2.msra.mxu0 0.0
        %2868 = vmatprep.mubr.f32.mxu0 0.0
        %2869 = vmatmul.mubr.f32.gmra.mxu0 %v2802
        %v2870 = vpop.f32.mrf.mxu0
        %v2871 = vadd.f32 %v2798, %v2870
        %v2872 = vpop.f32.mrf.mxu0
        %2873 = vdwg.mxu0
        %s2874 = scalar_lea.vmem %s13, 32
        %v2875 = vld [vmem:[%s2874] sm:$0xff]
        %v2876 = vld [vmem:[%s2874 + $0x8] sm:$0xff]
        %v2878 = vsel %vm523, %v2706, 0
        %2880 = vmatprep.subr.mxu0 0.0
        %2881 = vmatpush1.msra.mxu0 0.0
        %2882 = vmatprep.subr.mxu0 0.0
        %2883 = vmatpush1.msra.mxu0 0.0
        %2884 = vmatprep.subr.mxu0 0.0
        %2885 = vmatpush1.msra.mxu0 0.0
        %2886 = vmatprep.subr.mxu0 0.0
        %2887 = vmatpush1.msra.mxu0 0.0
        %2888 = vmatprep.subr.mxu0 0.0
        %2889 = vmatpush1.msra.mxu0 0.0
        %2890 = vmatprep.subr.mxu0 0.0
        %2891 = vmatpush1.msra.mxu0 0.0
        %2892 = vmatprep.subr.mxu0 0.0
        %2893 = vmatpush1.msra.mxu0 0.0
        %2894 = vmatprep.subr.mxu0 0.0
        %2895 = vmatpush1.msra.mxu0 0.0
        %2896 = vmatprep.subr.mxu0 0.0
        %2897 = vmatpush1.msra.mxu0 0.0
        %2898 = vmatprep.subr.mxu0 0.0
        %2899 = vmatpush1.msra.mxu0 0.0
        %2900 = vmatprep.subr.mxu0 0.0
        %2901 = vmatpush1.msra.mxu0 0.0
        %2902 = vmatprep.subr.mxu0 0.0
        %2903 = vmatpush1.msra.mxu0 0.0
        %2904 = vmatprep.subr.mxu0 0.0
        %2905 = vmatpush1.msra.mxu0 0.0
        %2906 = vmatprep.subr.mxu0 0.0
        %2907 = vmatpush1.msra.mxu0 0.0
        %2908 = vmatprep.subr.mxu0 0.0
        %2909 = vmatpush1.msra.mxu0 %v2876
        %2910 = vmatprep.subr.mxu0 0.0
        %2911 = vmatpush1.msra.mxu0 %v2875
        %2912 = vmatprep.subr.mxu0 0.0
        %2913 = vmatpush2.msra.mxu0 0.0
        %2914 = vmatprep.subr.mxu0 0.0
        %2915 = vmatpush2.msra.mxu0 0.0
        %2916 = vmatprep.subr.mxu0 0.0
        %2917 = vmatpush2.msra.mxu0 0.0
        %2918 = vmatprep.subr.mxu0 0.0
        %2919 = vmatpush2.msra.mxu0 0.0
        %2920 = vmatprep.subr.mxu0 0.0
        %2921 = vmatpush2.msra.mxu0 0.0
        %2922 = vmatprep.subr.mxu0 0.0
        %2923 = vmatpush2.msra.mxu0 0.0
        %2924 = vmatprep.subr.mxu0 0.0
        %2925 = vmatpush2.msra.mxu0 0.0
        %2926 = vmatprep.subr.mxu0 0.0
        %2927 = vmatpush2.msra.mxu0 0.0
        %2928 = vmatprep.subr.mxu0 0.0
        %2929 = vmatpush2.msra.mxu0 0.0
        %2930 = vmatprep.subr.mxu0 0.0
        %2931 = vmatpush2.msra.mxu0 0.0
        %2932 = vmatprep.subr.mxu0 0.0
        %2933 = vmatpush2.msra.mxu0 0.0
        %2934 = vmatprep.subr.mxu0 0.0
        %2935 = vmatpush2.msra.mxu0 0.0
        %2936 = vmatprep.subr.mxu0 0.0
        %2937 = vmatpush2.msra.mxu0 0.0
        %2938 = vmatprep.subr.mxu0 0.0
        %2939 = vmatpush2.msra.mxu0 0.0
        %2940 = vmatprep.subr.mxu0 0.0
        %2941 = vmatpush2.msra.mxu0 0.0
        %2942 = vmatprep.subr.mxu0 0.0
        %2943 = vmatpush2.msra.mxu0 0.0
        %2944 = vmatprep.mubr.f32.mxu0 0.0
        %2945 = vmatmul.mubr.f32.gmra.mxu0 %v2878
        %v2946 = vpop.f32.mrf.mxu0
        %v2947 = vadd.f32 0.0, %v2946
        %v2948 = vpop.f32.mrf.mxu0
        %2949 = vdwg.mxu0
        %v2950 = vadd.f32 %v2871, %v2947
        %s2951 = scalar_lea.vmem %s13, 48
        %v2952 = vld [vmem:[%s2951] sm:$0xff]
        %v2953 = vld [vmem:[%s2951 + $0x8] sm:$0xff]
        %v2955 = vsel %vm523, %v2714, 0
        %2957 = vmatprep.subr.mxu0 0.0
        %2958 = vmatpush1.msra.mxu0 0.0
        %2959 = vmatprep.subr.mxu0 0.0
        %2960 = vmatpush1.msra.mxu0 0.0
        %2961 = vmatprep.subr.mxu0 0.0
        %2962 = vmatpush1.msra.mxu0 0.0
        %2963 = vmatprep.subr.mxu0 0.0
        %2964 = vmatpush1.msra.mxu0 0.0
        %2965 = vmatprep.subr.mxu0 0.0
        %2966 = vmatpush1.msra.mxu0 0.0
        %2967 = vmatprep.subr.mxu0 0.0
        %2968 = vmatpush1.msra.mxu0 0.0
        %2969 = vmatprep.subr.mxu0 0.0
        %2970 = vmatpush1.msra.mxu0 0.0
        %2971 = vmatprep.subr.mxu0 0.0
        %2972 = vmatpush1.msra.mxu0 0.0
        %2973 = vmatprep.subr.mxu0 0.0
        %2974 = vmatpush1.msra.mxu0 0.0
        %2975 = vmatprep.subr.mxu0 0.0
        %2976 = vmatpush1.msra.mxu0 0.0
        %2977 = vmatprep.subr.mxu0 0.0
        %2978 = vmatpush1.msra.mxu0 0.0
        %2979 = vmatprep.subr.mxu0 0.0
        %2980 = vmatpush1.msra.mxu0 0.0
        %2981 = vmatprep.subr.mxu0 0.0
        %2982 = vmatpush1.msra.mxu0 0.0
        %2983 = vmatprep.subr.mxu0 0.0
        %2984 = vmatpush1.msra.mxu0 0.0
        %2985 = vmatprep.subr.mxu0 0.0
        %2986 = vmatpush1.msra.mxu0 %v2953
        %2987 = vmatprep.subr.mxu0 0.0
        %2988 = vmatpush1.msra.mxu0 %v2952
        %2989 = vmatprep.subr.mxu0 0.0
        %2990 = vmatpush2.msra.mxu0 0.0
        %2991 = vmatprep.subr.mxu0 0.0
        %2992 = vmatpush2.msra.mxu0 0.0
        %2993 = vmatprep.subr.mxu0 0.0
        %2994 = vmatpush2.msra.mxu0 0.0
        %2995 = vmatprep.subr.mxu0 0.0
        %2996 = vmatpush2.msra.mxu0 0.0
        %2997 = vmatprep.subr.mxu0 0.0
        %2998 = vmatpush2.msra.mxu0 0.0
        %2999 = vmatprep.subr.mxu0 0.0
        %3000 = vmatpush2.msra.mxu0 0.0
        %3001 = vmatprep.subr.mxu0 0.0
        %3002 = vmatpush2.msra.mxu0 0.0
        %3003 = vmatprep.subr.mxu0 0.0
        %3004 = vmatpush2.msra.mxu0 0.0
        %3005 = vmatprep.subr.mxu0 0.0
        %3006 = vmatpush2.msra.mxu0 0.0
        %3007 = vmatprep.subr.mxu0 0.0
        %3008 = vmatpush2.msra.mxu0 0.0
        %3009 = vmatprep.subr.mxu0 0.0
        %3010 = vmatpush2.msra.mxu0 0.0
        %3011 = vmatprep.subr.mxu0 0.0
        %3012 = vmatpush2.msra.mxu0 0.0
        %3013 = vmatprep.subr.mxu0 0.0
        %3014 = vmatpush2.msra.mxu0 0.0
        %3015 = vmatprep.subr.mxu0 0.0
        %3016 = vmatpush2.msra.mxu0 0.0
        %3017 = vmatprep.subr.mxu0 0.0
        %3018 = vmatpush2.msra.mxu0 0.0
        %3019 = vmatprep.subr.mxu0 0.0
        %3020 = vmatpush2.msra.mxu0 0.0
        %3021 = vmatprep.mubr.f32.mxu0 0.0
        %3022 = vmatmul.mubr.f32.gmra.mxu0 %v2955
        %v3023 = vpop.f32.mrf.mxu0
        %v3024 = vadd.f32 0.0, %v3023
        %v3025 = vpop.f32.mrf.mxu0
        %3026 = vdwg.mxu0
        %v3027 = vadd.f32 %v2950, %v3024
        %s3028 = scalar_lea.vmem %s13, 64
        %v3029 = vld [vmem:[%s3028] sm:$0xff]
        %v3030 = vld [vmem:[%s3028 + $0x8] sm:$0xff]
        %v3032 = vsel %vm523, %v2722, 0
        %3034 = vmatprep.subr.mxu0 0.0
        %3035 = vmatpush1.msra.mxu0 0.0
        %3036 = vmatprep.subr.mxu0 0.0
        %3037 = vmatpush1.msra.mxu0 0.0
        %3038 = vmatprep.subr.mxu0 0.0
        %3039 = vmatpush1.msra.mxu0 0.0
        %3040 = vmatprep.subr.mxu0 0.0
        %3041 = vmatpush1.msra.mxu0 0.0
        %3042 = vmatprep.subr.mxu0 0.0
        %3043 = vmatpush1.msra.mxu0 0.0
        %3044 = vmatprep.subr.mxu0 0.0
        %3045 = vmatpush1.msra.mxu0 0.0
        %3046 = vmatprep.subr.mxu0 0.0
        %3047 = vmatpush1.msra.mxu0 0.0
        %3048 = vmatprep.subr.mxu0 0.0
        %3049 = vmatpush1.msra.mxu0 0.0
        %3050 = vmatprep.subr.mxu0 0.0
        %3051 = vmatpush1.msra.mxu0 0.0
        %3052 = vmatprep.subr.mxu0 0.0
        %3053 = vmatpush1.msra.mxu0 0.0
        %3054 = vmatprep.subr.mxu0 0.0
        %3055 = vmatpush1.msra.mxu0 0.0
        %3056 = vmatprep.subr.mxu0 0.0
        %3057 = vmatpush1.msra.mxu0 0.0
        %3058 = vmatprep.subr.mxu0 0.0
        %3059 = vmatpush1.msra.mxu0 0.0
        %3060 = vmatprep.subr.mxu0 0.0
        %3061 = vmatpush1.msra.mxu0 0.0
        %3062 = vmatprep.subr.mxu0 0.0
        %3063 = vmatpush1.msra.mxu0 %v3030
        %3064 = vmatprep.subr.mxu0 0.0
        %3065 = vmatpush1.msra.mxu0 %v3029
        %3066 = vmatprep.subr.mxu0 0.0
        %3067 = vmatpush2.msra.mxu0 0.0
        %3068 = vmatprep.subr.mxu0 0.0
        %3069 = vmatpush2.msra.mxu0 0.0
        %3070 = vmatprep.subr.mxu0 0.0
        %3071 = vmatpush2.msra.mxu0 0.0
        %3072 = vmatprep.subr.mxu0 0.0
        %3073 = vmatpush2.msra.mxu0 0.0
        %3074 = vmatprep.subr.mxu0 0.0
        %3075 = vmatpush2.msra.mxu0 0.0
        %3076 = vmatprep.subr.mxu0 0.0
        %3077 = vmatpush2.msra.mxu0 0.0
        %3078 = vmatprep.subr.mxu0 0.0
        %3079 = vmatpush2.msra.mxu0 0.0
        %3080 = vmatprep.subr.mxu0 0.0
        %3081 = vmatpush2.msra.mxu0 0.0
        %3082 = vmatprep.subr.mxu0 0.0
        %3083 = vmatpush2.msra.mxu0 0.0
        %3084 = vmatprep.subr.mxu0 0.0
        %3085 = vmatpush2.msra.mxu0 0.0
        %3086 = vmatprep.subr.mxu0 0.0
        %3087 = vmatpush2.msra.mxu0 0.0
        %3088 = vmatprep.subr.mxu0 0.0
        %3089 = vmatpush2.msra.mxu0 0.0
        %3090 = vmatprep.subr.mxu0 0.0
        %3091 = vmatpush2.msra.mxu0 0.0
        %3092 = vmatprep.subr.mxu0 0.0
        %3093 = vmatpush2.msra.mxu0 0.0
        %3094 = vmatprep.subr.mxu0 0.0
        %3095 = vmatpush2.msra.mxu0 0.0
        %3096 = vmatprep.subr.mxu0 0.0
        %3097 = vmatpush2.msra.mxu0 0.0
        %3098 = vmatprep.mubr.f32.mxu0 0.0
        %3099 = vmatmul.mubr.f32.gmra.mxu0 %v3032
        %v3100 = vpop.f32.mrf.mxu0
        %v3101 = vadd.f32 0.0, %v3100
        %v3102 = vpop.f32.mrf.mxu0
        %3103 = vdwg.mxu0
        %v3104 = vadd.f32 %v3027, %v3101
        %v3105 = vld [vmem:[%s14] sm:$0x1]
        %v3106 = vadd.f32 %v3104, %v3105
        %v3107 = vmax.f32 %v3106, 0.0
        %v3108 = vld [vmem:[%s15] sm:$0xff]
        %v3109 = vld [vmem:[%s15 + $0x8] sm:$0xff]
        %v3110 = vld [vmem:[%s15 + $0x10] sm:$0xff]
        %v3111 = vld [vmem:[%s15 + $0x18] sm:$0xff]
        %vm3112 = vcmask 261120
        %v3114 = vsel %vm3112, %v3107, 0
        %3116 = vmatprep.subr.mxu0 0.0
        %3117 = vmatpush1.msra.mxu0 0.0
        %3118 = vmatprep.subr.mxu0 0.0
        %3119 = vmatpush1.msra.mxu0 0.0
        %3120 = vmatprep.subr.mxu0 0.0
        %3121 = vmatpush1.msra.mxu0 0.0
        %3122 = vmatprep.subr.mxu0 0.0
        %3123 = vmatpush1.msra.mxu0 0.0
        %3124 = vmatprep.subr.mxu0 0.0
        %3125 = vmatpush1.msra.mxu0 0.0
        %3126 = vmatprep.subr.mxu0 0.0
        %3127 = vmatpush1.msra.mxu0 0.0
        %3128 = vmatprep.subr.mxu0 0.0
        %3129 = vmatpush1.msra.mxu0 0.0
        %3130 = vmatprep.subr.mxu0 0.0
        %3131 = vmatpush1.msra.mxu0 0.0
        %3132 = vmatprep.subr.mxu0 0.0
        %3133 = vmatpush1.msra.mxu0 0.0
        %3134 = vmatprep.subr.mxu0 0.0
        %3135 = vmatpush1.msra.mxu0 0.0
        %3136 = vmatprep.subr.mxu0 0.0
        %3137 = vmatpush1.msra.mxu0 0.0
        %3138 = vmatprep.subr.mxu0 0.0
        %3139 = vmatpush1.msra.mxu0 0.0
        %3140 = vmatprep.subr.mxu0 0.0
        %3141 = vmatpush1.msra.mxu0 %v3111
        %3142 = vmatprep.subr.mxu0 0.0
        %3143 = vmatpush1.msra.mxu0 %v3110
        %3144 = vmatprep.subr.mxu0 0.0
        %3145 = vmatpush1.msra.mxu0 %v3109
        %3146 = vmatprep.subr.mxu0 0.0
        %3147 = vmatpush1.msra.mxu0 %v3108
        %3148 = vmatprep.subr.mxu0 0.0
        %3149 = vmatpush2.msra.mxu0 0.0
        %3150 = vmatprep.subr.mxu0 0.0
        %3151 = vmatpush2.msra.mxu0 0.0
        %3152 = vmatprep.subr.mxu0 0.0
        %3153 = vmatpush2.msra.mxu0 0.0
        %3154 = vmatprep.subr.mxu0 0.0
        %3155 = vmatpush2.msra.mxu0 0.0
        %3156 = vmatprep.subr.mxu0 0.0
        %3157 = vmatpush2.msra.mxu0 0.0
        %3158 = vmatprep.subr.mxu0 0.0
        %3159 = vmatpush2.msra.mxu0 0.0
        %3160 = vmatprep.subr.mxu0 0.0
        %3161 = vmatpush2.msra.mxu0 0.0
        %3162 = vmatprep.subr.mxu0 0.0
        %3163 = vmatpush2.msra.mxu0 0.0
        %3164 = vmatprep.subr.mxu0 0.0
        %3165 = vmatpush2.msra.mxu0 0.0
        %3166 = vmatprep.subr.mxu0 0.0
        %3167 = vmatpush2.msra.mxu0 0.0
        %3168 = vmatprep.subr.mxu0 0.0
        %3169 = vmatpush2.msra.mxu0 0.0
        %3170 = vmatprep.subr.mxu0 0.0
        %3171 = vmatpush2.msra.mxu0 0.0
        %3172 = vmatprep.subr.mxu0 0.0
        %3173 = vmatpush2.msra.mxu0 0.0
        %3174 = vmatprep.subr.mxu0 0.0
        %3175 = vmatpush2.msra.mxu0 0.0
        %3176 = vmatprep.subr.mxu0 0.0
        %3177 = vmatpush2.msra.mxu0 0.0
        %3178 = vmatprep.subr.mxu0 0.0
        %3179 = vmatpush2.msra.mxu0 0.0
        %3180 = vmatprep.mubr.f32.mxu0 0.0
        %3181 = vmatmul.mubr.f32.gmra.mxu0 %v3114
        %v3182 = vpop.f32.mrf.mxu0
        %v3183 = vadd.f32 0.0, %v3182
        %v3184 = vpop.f32.mrf.mxu0
        %3185 = vdwg.mxu0
        %v3186 = vmul.f32 %v3183, 0.5
        %v3187 = vtanh.pop %v3186
        %v3188 = vadd.f32 %v3187, 1.0
        %v3189 = vmul.f32 %v3188, 0.5
        %vm3190 = vcmask 73728
        %3191 = vst.msk [vmem:[%s513] sm:$0x1] %vm3190, %v3189
        %s3192 = sand.u32 %s379, 1
        %s3193 = scalar_lea.sflag [#allocation3], %s3192
        %s3194 = sand.u32 %s379, 1
        %s3195 = scalar_lea.vmem [#allocation2], %s3194
        // Predicated region
        $region85: #{net_forward.1} parent=83 // pred_check
          %p3196 = pneg %p389
        $region86: #{net_forward.1} parent=83 // pred_check_branch
          %3198 = sbr.rel (%p3196) target = $region88
        $region87: #{net_forward.1} parent=83 // pred_region
          %s3200 = ssub.s32 16, 16
          %3201 = vsyncadd %s3193, %s3200
          %s3202 = smul.addr %s30, 16
          %s3203 = scalar_lea.hbm %s16, %s3202
          %s3205 = sshll.u32 %s3195, 4
          %s3206 = int_to_ptr.vmem [resolvable:$true] %s3205
          %3208 = dma.vmem_to_hbm [thread:$0]  %s3206, 16, %s3203, %s3193
        $region88: #{net_forward.1} parent=83 // pred_fallthru
          _
      $region84: #{net_forward.1} parent=5 // pred_fallthru
        _
      %p3209 = scmp.le.s32.totalorder 2, %s25
      // Predicated region
      $region89: #{net_forward.1} parent=5 // pred_check
        %p3210 = pneg %p3209
      $region90: #{net_forward.1} parent=5 // pred_check_branch
        %3212 = sbr.rel (%p3210) target = $region92
      $region91: #{net_forward.1} parent=5 // pred_region
        %s3213 = ssub.s32 %s25, 2
        // Predicated region
        $region93: #{net_forward.1} parent=91 // pred_check
          %p3214 = pneg %p395
        $region94: #{net_forward.1} parent=91 // pred_check_branch
          %3216 = sbr.rel (%p3214) target = $region96
        $region95: #{net_forward.1} parent=91 // pred_region
          %s3217 = sand.u32 %s380, 1
          %s3218 = scalar_lea.sflag [#allocation3], %s3217
          %s3219 = sand.u32 %s380, 1
          %s3220 = scalar_lea.vmem [#allocation2], %s3219
          %3221 = dma.done %s3218, 16
        $region96: #{net_forward.1} parent=91 // pred_fallthru
          _
      $region92: #{net_forward.1} parent=5 // pred_fallthru
        _
    $region6: #{net_forward.1} parent=1 // loop_footer
      %s29 = sadd.s32 1, %s25
    $region7: #{net_forward.1} parent=1 // loop_footer_branch
      %24 = sbr.rel target = $region3
    $region8: #{net_forward.1} parent=1 // loop_exit
      _
    %3222 = vsyncpa [#allocation3], 1
    %s3223 = scalar_lea.sflag [#allocation3], 1
    %3224 = vsyncpa %s3223, 1

</llo_original>
